<compile_context>
chip_gen: v5e
topology: v5e:2x2
jax: 0.10.0
libtpu: 0.0.40
codegen_flags: <defaults>
</compile_context>

<pallas_src>
import jax
import jax.numpy as jnp
from jax import lax
from jax.experimental import pallas as pl
from jax.experimental.pallas import tpu as pltpu

K = 7            # spatial-attention kernel size
PAD = K // 2     # = 3


# ---------------- Fused CBAM kernel (one grid step per batch tile) ----------------
def _cbam_kernel(x_ref, w1t_ref, w2_ref, m_ref, o_ref):
    # x_ref : (B, C, HW)   activations, lane-dense (HW multiple of 128)
    # w1t_ref: (C, Cr)     fc1 weight, transposed
    # w2_ref : (C, Cr)     fc2 weight
    # m_ref  : (2, HW, HW) 7x7 "same"-padded conv folded into dense matrices (avg, max)
    # o_ref  : (B, C, HW)
    B = x_ref.shape[0]

    w1t = w1t_ref[...].astype(jnp.float32)                 # (C, Cr)
    w2 = w2_ref[...].astype(jnp.float32)                   # (C, Cr)
    m_avg = m_ref[0]                                        # (HW, HW), hoisted loads
    m_max = m_ref[1]                                        # (HW, HW)
    hi = lax.Precision.HIGHEST

    def shared_mlp(v):                                      # v: (C, 1), C on sublanes
        # h[r] = relu(sum_c w1[r, c] * v[c])
        h = jnp.maximum(jnp.sum(v * w1t, axis=0, keepdims=True), 0.0)   # (1, Cr)
        # o[c] = sum_r w2[c, r] * h[r]
        return jnp.sum(w2 * h, axis=1, keepdims=True)                   # (C, 1)

    for b in range(B):                                      # static unroll over the batch tile
        xb = x_ref[b].astype(jnp.float32)                   # (C, HW)

        # ---------- channel attention: shared MLP on the VPU ----------
        avg_c = jnp.mean(xb, axis=1, keepdims=True)          # (C, 1) == AdaptiveAvgPool2d(1)
        max_c = jnp.max(xb, axis=1, keepdims=True)           # (C, 1) == AdaptiveMaxPool2d(1)
        att_c = jax.nn.sigmoid(shared_mlp(avg_c) + shared_mlp(max_c))    # (C, 1)
        scaled = xb * att_c                                   # (C, HW) channel-scaled x

        # ---------- spatial attention: 7x7 conv as MXU matmuls ----------
        avg_s = jnp.mean(scaled, axis=0, keepdims=True)       # (1, HW) mean over channels
        max_s = jnp.max(scaled, axis=0, keepdims=True)        # (1, HW) max over channels
        logits = (jnp.dot(avg_s, m_avg, preferred_element_type=jnp.float32, precision=hi)
                  + jnp.dot(max_s, m_max, preferred_element_type=jnp.float32, precision=hi))
        att_s = jax.nn.sigmoid(logits)                        # (1, HW)

        o_ref[b] = (scaled * att_s).astype(o_ref.dtype)       # lane-dense store


# ---------------- Wrapper-side helpers ----------------
def _build_spatial_conv_matrix(wsp, H, W):
    """Fold the 7x7 'same'-padded conv (weights + shifts + zero padding) into two dense
    (HW, HW) matrices so that  logits = avg_map @ M[0] + max_map @ M[1]."""
    HW = H * W
    w = wsp.reshape(2, K, K).astype(jnp.float32)            # OIHW with O=1 -> (2, K, K)

    q = jnp.arange(HW)                                       # input (source) position
    rq, cq = q // W, q % W
    p = jnp.arange(HW)                                       # output position
    rp, cp = p // W, p % W

    di = rq[:, None] - rp[None, :] + PAD                     # (HW, HW) kernel row index
    dj = cq[:, None] - cp[None, :] + PAD                     # (HW, HW) kernel col index
    valid = (di >= 0) & (di < K) & (dj >= 0) & (dj < K)
    di_c = jnp.clip(di, 0, K - 1)
    dj_c = jnp.clip(dj, 0, K - 1)
    vals = w[:, di_c, dj_c]                                   # (2, HW, HW)
    return jnp.where(valid[None], vals, 0.0)                  # zero padding is implicit


def _pick_b_tile(N, cap=32):
    """Largest divisor of N that is <= cap while keeping >= 2 grid steps when possible
    (so both v7x TensorCores get work); cap keeps per-step VMEM well under the v5e
    16 MiB scoped default."""
    if N <= 1:
        return max(N, 1)
    best = 1
    for d in range(1, min(N, cap) + 1):
        if N % d == 0 and N // d >= 2:
            best = d
    return best


def cbam_forward(x, w1, w2, wsp, *, b_tile=None):
    N, C, H, W = x.shape
    Cr = w1.shape[0]
    HW = H * W

    if b_tile is None:
        b_tile = _pick_b_tile(N)
    assert N % b_tile == 0

    x2 = x.reshape(N, C, HW)                                  # contiguous -> free bitcast
    w1t = jnp.transpose(w1)                                   # (C, Cr)
    conv_m = _build_spatial_conv_matrix(wsp, H, W)            # (2, HW, HW)

    out = pl.pallas_call(
        _cbam_kernel,
        out_shape=jax.ShapeDtypeStruct((N, C, HW), x.dtype),
        grid=(N // b_tile,),
        in_specs=[
            pl.BlockSpec((b_tile, C, HW), lambda n: (n, 0, 0)),
            pl.BlockSpec((C, Cr), lambda n: (0, 0)),
            pl.BlockSpec((C, Cr), lambda n: (0, 0)),
            pl.BlockSpec((2, HW, HW), lambda n: (0, 0, 0)),
        ],
        out_specs=pl.BlockSpec((b_tile, C, HW), lambda n: (n, 0, 0)),
        compiler_params=pltpu.CompilerParams(
            dimension_semantics=("parallel",)),
    )(x2, w1t, w2, conv_m)
    return out.reshape(N, C, H, W)


# ---------------- Pure-JAX reference (mirrors the PyTorch module) ----------------
def ref_cbam(x, w1, w2, wsp):
    hi = lax.Precision.HIGHEST
    avg = jnp.mean(x, axis=(2, 3), keepdims=True)
    mx = jnp.max(x, axis=(2, 3), keepdims=True)

    def mlp(v):
        h = jnp.maximum(jnp.einsum('rc,ncij->nrij', w1, v, precision=hi), 0.0)
        return jnp.einsum('cr,nrij->ncij', w2, h, precision=hi)

    ca = jax.nn.sigmoid(mlp(avg) + mlp(mx))
    out = ca * x
    s = jnp.concatenate([jnp.mean(out, axis=1, keepdims=True),
                         jnp.max(out, axis=1, keepdims=True)], axis=1)
    conv = lax.conv_general_dilated(
        s, wsp, (1, 1), ((PAD, PAD), (PAD, PAD)),
        dimension_numbers=('NCHW', 'OIHW', 'NCHW'), precision=hi)
    return jax.nn.sigmoid(conv) * out


if __name__ == "__main__":
    # Module config: in_channels=32, reduction_ratio=16 (-> hidden 2), kernel_size=7
    N, C, H, W = 2, 32, 16, 16
    Cr = max(C // 16, 1)

    key = jax.random.PRNGKey(0)
    kx, k1, k2, k3 = jax.random.split(key, 4)
    x = jax.random.normal(kx, (N, C, H, W), dtype=jnp.float32)
    w1 = jax.random.normal(k1, (Cr, C), dtype=jnp.float32) * 0.1        # fc1 1x1 conv weight
    w2 = jax.random.normal(k2, (C, Cr), dtype=jnp.float32) * 0.1        # fc2 1x1 conv weight
    wsp = jax.random.normal(k3, (1, 2, K, K), dtype=jnp.float32) * 0.1  # 7x7 conv weight

    out = cbam_forward(x, w1, w2, wsp)
    out = jax.block_until_ready(out)

    ref = ref_cbam(x, w1, w2, wsp)
    assert out.shape == (N, C, H, W)
    assert jnp.allclose(out, ref, rtol=1e-4, atol=1e-4), (
        "mismatch vs reference, max abs err = %g" % float(jnp.max(jnp.abs(out - ref))))
    print("KERNEL_OK")
</pallas_src>

<mosaic_0001>
module attributes {stable_mosaic.version = 11 : i64} {
  func.func @_cbam_kernel(%arg0: i32, %arg1: memref<1x32x256xf32, #tpu.memory_space<vmem>>, %arg2: memref<32x2xf32, #tpu.memory_space<vmem>>, %arg3: memref<32x2xf32, #tpu.memory_space<vmem>>, %arg4: memref<2x256x256xf32, #tpu.memory_space<vmem>>, %arg5: memref<1x32x256xf32, #tpu.memory_space<vmem>>) attributes {dimension_semantics = [#tpu.dimension_semantics<parallel>], iteration_bounds = array<i64: 2>, scalar_prefetch = 0 : i64, scratch_operands = 0 : i64, tpu.core_type = #tpu.core_type<tc>, window_params = [{transform_indices = @transform_0, window_bounds = array<i64: 1, 32, 256>}, {pipeline_mode = #tpu.pipeline_mode<synchronous>, transform_indices = @transform_1, window_bounds = array<i64: 32, 2>}, {pipeline_mode = #tpu.pipeline_mode<synchronous>, transform_indices = @transform_2, window_bounds = array<i64: 32, 2>}, {pipeline_mode = #tpu.pipeline_mode<synchronous>, transform_indices = @transform_3, window_bounds = array<i64: 2, 256, 256>}, {transform_indices = @transform_4, window_bounds = array<i64: 1, 32, 256>}]} {
    %c0 = arith.constant 0 : index
    %c0_0 = arith.constant 0 : index
    %0 = vector.load %arg2[%c0, %c0_0] : memref<32x2xf32, #tpu.memory_space<vmem>>, vector<32x2xf32>
    %c0_1 = arith.constant 0 : index
    %c0_2 = arith.constant 0 : index
    %1 = vector.load %arg3[%c0_1, %c0_2] : memref<32x2xf32, #tpu.memory_space<vmem>>, vector<32x2xf32>
    %c0_3 = arith.constant 0 : index
    %c0_4 = arith.constant 0 : index
    %c0_5 = arith.constant 0 : index
    %2 = vector.load %arg4[%c0_3, %c0_4, %c0_5] : memref<2x256x256xf32, #tpu.memory_space<vmem>>, vector<1x256x256xf32>
    %3 = vector.shape_cast %2 : vector<1x256x256xf32> to vector<256x256xf32>
    %c1 = arith.constant 1 : index
    %c0_6 = arith.constant 0 : index
    %c0_7 = arith.constant 0 : index
    %4 = vector.load %arg4[%c1, %c0_6, %c0_7] : memref<2x256x256xf32, #tpu.memory_space<vmem>>, vector<1x256x256xf32>
    %5 = vector.shape_cast %4 : vector<1x256x256xf32> to vector<256x256xf32>
    %c0_8 = arith.constant 0 : index
    %c0_9 = arith.constant 0 : index
    %c0_10 = arith.constant 0 : index
    %6 = vector.load %arg1[%c0_8, %c0_9, %c0_10] : memref<1x32x256xf32, #tpu.memory_space<vmem>>, vector<1x32x256xf32>
    %7 = vector.shape_cast %6 : vector<1x32x256xf32> to vector<32x256xf32>
    %cst = arith.constant dense<0.000000e+00> : vector<32xf32>
    %8 = vector.multi_reduction <add>, %7, %cst [1] : vector<32x256xf32> to vector<32xf32>
    %9 = vector.shape_cast %8 : vector<32xf32> to vector<32x1xf32>
    %cst_11 = arith.constant 2.560000e+02 : f32
    %10 = vector.broadcast %cst_11 : f32 to vector<32x1xf32>
    %11 = arith.divf %9, %10 : vector<32x1xf32>
    %cst_12 = arith.constant dense<0xFF800000> : vector<32xf32>
    %12 = vector.multi_reduction <maximumf>, %7, %cst_12 [1] : vector<32x256xf32> to vector<32xf32>
    %13 = vector.shape_cast %12 : vector<32xf32> to vector<32x1xf32>
    %14 = vector.broadcast %11 : vector<32x1xf32> to vector<32x2xf32>
    %15 = arith.mulf %14, %0 : vector<32x2xf32>
    %cst_13 = arith.constant dense<0.000000e+00> : vector<2xf32>
    %16 = vector.multi_reduction <add>, %15, %cst_13 [0] : vector<32x2xf32> to vector<2xf32>
    %17 = vector.shape_cast %16 : vector<2xf32> to vector<1x2xf32>
    %cst_14 = arith.constant 0.000000e+00 : f32
    %18 = vector.broadcast %cst_14 : f32 to vector<1x2xf32>
    %19 = arith.maximumf %17, %18 : vector<1x2xf32>
    %20 = vector.broadcast %19 : vector<1x2xf32> to vector<32x2xf32>
    %21 = arith.mulf %1, %20 : vector<32x2xf32>
    %cst_15 = arith.constant dense<0.000000e+00> : vector<32xf32>
    %22 = vector.multi_reduction <add>, %21, %cst_15 [1] : vector<32x2xf32> to vector<32xf32>
    %23 = vector.shape_cast %22 : vector<32xf32> to vector<32x1xf32>
    %24 = vector.broadcast %13 : vector<32x1xf32> to vector<32x2xf32>
    %25 = arith.mulf %24, %0 : vector<32x2xf32>
    %cst_16 = arith.constant dense<0.000000e+00> : vector<2xf32>
    %26 = vector.multi_reduction <add>, %25, %cst_16 [0] : vector<32x2xf32> to vector<2xf32>
    %27 = vector.shape_cast %26 : vector<2xf32> to vector<1x2xf32>
    %cst_17 = arith.constant 0.000000e+00 : f32
    %28 = vector.broadcast %cst_17 : f32 to vector<1x2xf32>
    %29 = arith.maximumf %27, %28 : vector<1x2xf32>
    %30 = vector.broadcast %29 : vector<1x2xf32> to vector<32x2xf32>
    %31 = arith.mulf %1, %30 : vector<32x2xf32>
    %cst_18 = arith.constant dense<0.000000e+00> : vector<32xf32>
    %32 = vector.multi_reduction <add>, %31, %cst_18 [1] : vector<32x2xf32> to vector<32xf32>
    %33 = vector.shape_cast %32 : vector<32xf32> to vector<32x1xf32>
    %34 = arith.addf %23, %33 : vector<32x1xf32>
    %35 = arith.negf %34 : vector<32x1xf32>
    %36 = math.exp %35 : vector<32x1xf32>
    %cst_19 = arith.constant 1.000000e+00 : f32
    %37 = vector.broadcast %cst_19 : f32 to vector<32x1xf32>
    %38 = arith.addf %37, %36 : vector<32x1xf32>
    %39 = arith.divf %37, %38 : vector<32x1xf32>
    %40 = vector.broadcast %39 : vector<32x1xf32> to vector<32x256xf32>
    %41 = arith.mulf %7, %40 : vector<32x256xf32>
    %cst_20 = arith.constant dense<0.000000e+00> : vector<256xf32>
    %42 = vector.multi_reduction <add>, %41, %cst_20 [0] : vector<32x256xf32> to vector<256xf32>
    %43 = vector.shape_cast %42 : vector<256xf32> to vector<1x256xf32>
    %cst_21 = arith.constant 3.200000e+01 : f32
    %44 = vector.broadcast %cst_21 : f32 to vector<1x256xf32>
    %45 = arith.divf %43, %44 : vector<1x256xf32>
    %cst_22 = arith.constant dense<0xFF800000> : vector<256xf32>
    %46 = vector.multi_reduction <maximumf>, %41, %cst_22 [0] : vector<32x256xf32> to vector<256xf32>
    %47 = vector.shape_cast %46 : vector<256xf32> to vector<1x256xf32>
    %cst_23 = arith.constant dense<0.000000e+00> : vector<1x256xf32>
    %48 = tpu.matmul %45, %3, %cst_23 {dimension_numbers = #tpu.dot_dimension_numbers<[1], [0], [0], [1], [0, 0, 1, 1], [], []>, precision = #tpu.contract_precision<fp32>} : vector<1x256xf32>, vector<256x256xf32>, vector<1x256xf32> -> vector<1x256xf32>
    %cst_24 = arith.constant dense<0.000000e+00> : vector<1x256xf32>
    %49 = tpu.matmul %47, %5, %cst_24 {dimension_numbers = #tpu.dot_dimension_numbers<[1], [0], [0], [1], [0, 0, 1, 1], [], []>, precision = #tpu.contract_precision<fp32>} : vector<1x256xf32>, vector<256x256xf32>, vector<1x256xf32> -> vector<1x256xf32>
    %50 = arith.addf %48, %49 : vector<1x256xf32>
    %51 = arith.negf %50 : vector<1x256xf32>
    %52 = math.exp %51 : vector<1x256xf32>
    %cst_25 = arith.constant 1.000000e+00 : f32
    %53 = vector.broadcast %cst_25 : f32 to vector<1x256xf32>
    %54 = arith.addf %53, %52 : vector<1x256xf32>
    %55 = arith.divf %53, %54 : vector<1x256xf32>
    %56 = vector.broadcast %55 : vector<1x256xf32> to vector<32x256xf32>
    %57 = arith.mulf %41, %56 : vector<32x256xf32>
    %c0_26 = arith.constant 0 : index
    %c0_27 = arith.constant 0 : index
    %c0_28 = arith.constant 0 : index
    %58 = vector.load %arg5[%c0_26, %c0_27, %c0_28] : memref<1x32x256xf32, #tpu.memory_space<vmem>>, vector<1x32x256xf32>
    %59 = vector.shape_cast %58 : vector<1x32x256xf32> to vector<32x256xf32>
    %60 = vector.shape_cast %57 : vector<32x256xf32> to vector<1x32x256xf32>
    tpu.vector_store %arg5[%c0_26, %c0_27, %c0_28], %60 {strides = array<i32>} : memref<1x32x256xf32, #tpu.memory_space<vmem>>, vector<1x32x256xf32>,
    return
  }
  func.func @transform_0(%arg0: i32) -> (i32, i32, i32) {
    %c0_i32 = arith.constant 0 : i32
    %c0_i32_0 = arith.constant 0 : i32
    %c0_i32_1 = arith.constant 0 : i32
    return %arg0, %c0_i32, %c0_i32_0 : i32, i32, i32
  }
  func.func @transform_1(%arg0: i32) -> (i32, i32) {
    %c0_i32 = arith.constant 0 : i32
    %c0_i32_0 = arith.constant 0 : i32
    %c0_i32_1 = arith.constant 0 : i32
    return %c0_i32, %c0_i32_0 : i32, i32
  }
  func.func @transform_2(%arg0: i32) -> (i32, i32) {
    %c0_i32 = arith.constant 0 : i32
    %c0_i32_0 = arith.constant 0 : i32
    %c0_i32_1 = arith.constant 0 : i32
    return %c0_i32, %c0_i32_0 : i32, i32
  }
  func.func @transform_3(%arg0: i32) -> (i32, i32, i32) {
    %c0_i32 = arith.constant 0 : i32
    %c0_i32_0 = arith.constant 0 : i32
    %c0_i32_1 = arith.constant 0 : i32
    %c0_i32_2 = arith.constant 0 : i32
    return %c0_i32, %c0_i32_0, %c0_i32_1 : i32, i32, i32
  }
  func.func @transform_4(%arg0: i32) -> (i32, i32, i32) {
    %c0_i32 = arith.constant 0 : i32
    %c0_i32_0 = arith.constant 0 : i32
    %c0_i32_1 = arith.constant 0 : i32
    return %arg0, %c0_i32, %c0_i32_0 : i32, i32, i32
  }
}

</mosaic_0001>

<llo_original>
// kernel: tpu_custom_call.1
$region0: #{tpu_custom_call.1}
  #allocation0 [shape = 'u32[]', space=smem, size = 0x4, offset = 0x4, fixed_abs, tag = 'smem constant byte address 0x4 - core index']
  #allocation1 [shape = 'u32[72,128]{1,0:T(1,128)}', space=vmem, size = 0x9000, scoped, tag = 'internal scratch']
  %s0 = inlined_call_operand.hbm [shape: f32[2,32,256], index: 0, kind: input, shape index: {}]
  %s1 = inlined_call_operand.vmem [shape: f32[32,2], index: 1, kind: input, shape index: {}]
  %s2 = inlined_call_operand.vmem [shape: f32[32,2], index: 2, kind: input, shape index: {}]
  %s3 = inlined_call_operand.hbm [shape: f32[2,256,256], index: 3, kind: input, shape index: {}]
  %s4 = inlined_call_operand.hbm [shape: f32[2,32,256], index: 4, kind: output, shape index: {}]
  %s5 = sld [smem:[#allocation0]]
  $region57: #{tpu_custom_call.1} parent=0
    _
  %s7 = ssub.s32 1, %s5
  %s8 = scalar_select 0, %s7, %s5
  $region1: #{tpu_custom_call.1} parent=0
    #allocation2 [shape = 'u8[65536]{0}', space=vmem, size = 0x10000, scoped, tag = 'input window, operand 0']
    #allocation3 [shape = 's32[2]{0}', space=sflag, size = 0x8, scoped, tag = 'scoped memory for tpu_custom_call.1']
    #allocation4 [shape = 's32[2]{0}', space=sflag, size = 0x8, scoped, tag = 'scoped memory for tpu_custom_call.1']
    #allocation5 [shape = 'u8[524288]{0}', space=vmem, size = 0x80000, scoped, tag = 'input window, operand 3, single buffered']
    #allocation6 [shape = 's32[1]{0}', space=sflag, size = 0x4, scoped, tag = 'scoped memory for tpu_custom_call.1']
    #allocation7 [shape = 'u8[65536]{0}', space=vmem, size = 0x10000, scoped, tag = 'output window, operand 0']
    %9 = vsyncpa [#allocation3], 0
    %s10 = scalar_lea.sflag [#allocation3], 1
    %11 = vsyncpa %s10, 0
    %12 = vsyncpa [#allocation6], 0
    %13 = vsyncpa [#allocation4], 0
    %s14 = scalar_lea.sflag [#allocation4], 1
    %15 = vsyncpa %s14, 0
    loop: start=0, step=1, limit=4
    $region2: #{tpu_custom_call.1} parent=1 // loop_pre_header
      _
    $region3: #{tpu_custom_call.1} parent=1 // loop_header
      %s17 = sphi 0, %s21
      %p18 = scmp.ge.s32.totalorder %s17, 4
      %s27 = sphi 0, %s29
      %s30 = sphi 0, %s27
      %s31 = sphi 0, %s30
      %s47 = sphi 0, %s31
      %s51 = sphi 0, %s51
      %s53 = sphi 0, %s51
      %s54 = sphi 0, %s53
      %s68 = sphi 0, %s54
      %s72 = sphi 0, %s72
      %s74 = sphi 0, %s72
      %s75 = sphi 0, %s74
      %s89 = sphi 0, %s75
      %s93 = sphi 0, %s93
      %s95 = sphi 0, %s93
      %s96 = sphi 0, %s95
      %s110 = sphi 0, %s96
      %s116 = sphi 0, %s118
      %s119 = sphi 0, %s116
      %s120 = sphi 0, %s119
      %s136 = sphi 0, %s120
    $region4: #{tpu_custom_call.1} parent=1 // loop_header_branch
      %20 = sbr.rel (%p18) target = $region8
    $region5: #{tpu_custom_call.1} parent=1 // loop_body
      %s22 = ssub.s32 %s17, 1
      %s23 = ssub.s32 %s17, 2
      %s24 = sadd.s32 %s17, 1
      %s25 = ssub.s32 %s17, %s24
      %p26 = scmp.eq.s32.totalorder %s25, 0
      %s28 = sadd.s32 %s27, 1
      %s29 = scalar_select %p26, %s27, %s28
      %p32 = pneg %p26
      %p33 = scmp.eq.s32.totalorder %s17, 1
      %p34 = por %p32, %p33
      %p35 = scmp.ne.s32.totalorder %s27, %s30
      %p36 = scmp.eq.s32.totalorder %s17, 0
      %p37 = por %p35, %p36
      %p38 = scmp.ne.s32.totalorder %s27, %s30
      %p39 = scmp.eq.s32.totalorder %s22, 1
      %p40 = por %p38, %p39
      %p41 = scmp.ne.s32.totalorder %s30, %s31
      %p42 = scmp.eq.s32.totalorder %s22, 0
      %p43 = por %p41, %p42
      %p44 = scmp.ne.s32.totalorder %s30, %s31
      %p45 = scmp.eq.s32.totalorder %s23, 1
      %p46 = por %p44, %p45
      %p48 = scmp.ne.s32.totalorder %s31, %s47
      %p49 = scmp.eq.s32.totalorder %s23, 0
      %p50 = por %p48, %p49
      %s52 = sadd.s32 %s51, 1
      %p55 = scmp.eq.s32.totalorder %s17, 1
      %p56 = scmp.ne.s32.totalorder %s51, %s53
      %p57 = scmp.eq.s32.totalorder %s17, 0
      %p58 = por %p56, %p57
      %p59 = scmp.ne.s32.totalorder %s51, %s53
      %p60 = scmp.eq.s32.totalorder %s22, 1
      %p61 = por %p59, %p60
      %p62 = scmp.ne.s32.totalorder %s53, %s54
      %p63 = scmp.eq.s32.totalorder %s22, 0
      %p64 = por %p62, %p63
      %p65 = scmp.ne.s32.totalorder %s53, %s54
      %p66 = scmp.eq.s32.totalorder %s23, 1
      %p67 = por %p65, %p66
      %p69 = scmp.ne.s32.totalorder %s54, %s68
      %p70 = scmp.eq.s32.totalorder %s23, 0
      %p71 = por %p69, %p70
      %s73 = sadd.s32 %s72, 1
      %p76 = scmp.eq.s32.totalorder %s17, 1
      %p77 = scmp.ne.s32.totalorder %s72, %s74
      %p78 = scmp.eq.s32.totalorder %s17, 0
      %p79 = por %p77, %p78
      %p80 = scmp.ne.s32.totalorder %s72, %s74
      %p81 = scmp.eq.s32.totalorder %s22, 1
      %p82 = por %p80, %p81
      %p83 = scmp.ne.s32.totalorder %s74, %s75
      %p84 = scmp.eq.s32.totalorder %s22, 0
      %p85 = por %p83, %p84
      %p86 = scmp.ne.s32.totalorder %s74, %s75
      %p87 = scmp.eq.s32.totalorder %s23, 1
      %p88 = por %p86, %p87
      %p90 = scmp.ne.s32.totalorder %s75, %s89
      %p91 = scmp.eq.s32.totalorder %s23, 0
      %p92 = por %p90, %p91
      %s94 = sadd.s32 %s93, 1
      %p97 = scmp.eq.s32.totalorder %s17, 1
      %p98 = scmp.ne.s32.totalorder %s93, %s95
      %p99 = scmp.eq.s32.totalorder %s17, 0
      %p100 = por %p98, %p99
      %p101 = scmp.ne.s32.totalorder %s93, %s95
      %p102 = scmp.eq.s32.totalorder %s22, 1
      %p103 = por %p101, %p102
      %p104 = scmp.ne.s32.totalorder %s95, %s96
      %p105 = scmp.eq.s32.totalorder %s22, 0
      %p106 = por %p104, %p105
      %p107 = scmp.ne.s32.totalorder %s95, %s96
      %p108 = scmp.eq.s32.totalorder %s23, 1
      %p109 = por %p107, %p108
      %p111 = scmp.ne.s32.totalorder %s96, %s110
      %p112 = scmp.eq.s32.totalorder %s23, 0
      %p113 = por %p111, %p112
      %s114 = ssub.s32 %s17, %s24
      %p115 = scmp.eq.s32.totalorder %s114, 0
      %s117 = sadd.s32 %s116, 1
      %s118 = scalar_select %p115, %s116, %s117
      %p121 = pneg %p115
      %p122 = scmp.eq.s32.totalorder %s17, 1
      %p123 = por %p121, %p122
      %p124 = scmp.ne.s32.totalorder %s116, %s119
      %p125 = scmp.eq.s32.totalorder %s17, 0
      %p126 = por %p124, %p125
      %p127 = scmp.ne.s32.totalorder %s116, %s119
      %p128 = scmp.eq.s32.totalorder %s22, 1
      %p129 = por %p127, %p128
      %p130 = scmp.ne.s32.totalorder %s119, %s120
      %p131 = scmp.eq.s32.totalorder %s22, 0
      %p132 = por %p130, %p131
      %p133 = scmp.ne.s32.totalorder %s119, %s120
      %p134 = scmp.eq.s32.totalorder %s23, 1
      %p135 = por %p133, %p134
      %p137 = scmp.ne.s32.totalorder %s120, %s136
      %p138 = scmp.eq.s32.totalorder %s23, 0
      %p139 = por %p137, %p138
      %p140 = scmp.le.s32.totalorder 1, %s17
      %p141 = scmp.lt.s32.totalorder %s17, 3
      %p142 = pnand %p140, %p141
      %p143 = pneg %p142
      // Predicated region
      $region9: #{tpu_custom_call.1} parent=5 // pred_check
        _
      $region10: #{tpu_custom_call.1} parent=5 // pred_check_branch
        %145 = sbr.rel (%p142) target = $region12
      $region11: #{tpu_custom_call.1} parent=5 // pred_region
        %s146 = ssub.s32 %s17, 1
        // Predicated region
        $region13: #{tpu_custom_call.1} parent=11 // pred_check
          %p147 = pneg %p64
        $region14: #{tpu_custom_call.1} parent=11 // pred_check_branch
          %149 = sbr.rel (%p147) target = $region16
        $region15: #{tpu_custom_call.1} parent=11 // pred_region
          _
        $region16: #{tpu_custom_call.1} parent=11 // pred_fallthru
          _
        // Predicated region
        $region17: #{tpu_custom_call.1} parent=11 // pred_check
          %p150 = pneg %p85
        $region18: #{tpu_custom_call.1} parent=11 // pred_check_branch
          %152 = sbr.rel (%p150) target = $region20
        $region19: #{tpu_custom_call.1} parent=11 // pred_region
          _
        $region20: #{tpu_custom_call.1} parent=11 // pred_fallthru
          _
        // Predicated region
        $region21: #{tpu_custom_call.1} parent=11 // pred_check
          %p153 = pneg %p106
        $region22: #{tpu_custom_call.1} parent=11 // pred_check_branch
          %155 = sbr.rel (%p153) target = $region24
        $region23: #{tpu_custom_call.1} parent=11 // pred_region
          %157 = vsyncadd [#allocation6], 0
          %s158 = sshll.u32 %s3, 4
          %s159 = int_to_ptr.hbm [resolvable:$true] %s158
          %s160 = sshll.u32 [#allocation5], 4
          %s161 = int_to_ptr.vmem [resolvable:$true] %s160
          %166 = dma.hbm_to_vmem [thread:$0]  %s159, 16384, %s161, [#allocation6], 256, 256, 16
        $region24: #{tpu_custom_call.1} parent=11 // pred_fallthru
          _
      $region12: #{tpu_custom_call.1} parent=5 // pred_fallthru
        _
      %p167 = scmp.lt.s32.totalorder %s17, 2
      // Predicated region
      $region25: #{tpu_custom_call.1} parent=5 // pred_check
        %p168 = pneg %p167
      $region26: #{tpu_custom_call.1} parent=5 // pred_check_branch
        %170 = sbr.rel (%p168) target = $region28
      $region27: #{tpu_custom_call.1} parent=5 // pred_region
        // Predicated region
        $region29: #{tpu_custom_call.1} parent=27 // pred_check
          %p171 = pneg %p37
        $region30: #{tpu_custom_call.1} parent=27 // pred_check_branch
          %173 = sbr.rel (%p171) target = $region32
        $region31: #{tpu_custom_call.1} parent=27 // pred_region
          %s174 = sand.u32 %s27, 1
          %s175 = scalar_lea.sflag [#allocation3], %s174
          %s176 = sand.u32 %s27, 1
          %s177 = smul.addr %s176, 64
          %s178 = scalar_lea.vmem [#allocation2], %s177
          %180 = vsyncadd %s175, 0
          %s181 = smul.addr %s17, 8
          %s182 = smul.addr %s181, 8
          %s183 = scalar_lea.hbm %s0, %s182
          %s184 = sshll.u32 %s183, 4
          %s185 = int_to_ptr.hbm [resolvable:$true] %s184
          %s186 = sshll.u32 %s178, 4
          %s187 = int_to_ptr.vmem [resolvable:$true] %s186
          %192 = dma.hbm_to_vmem [thread:$0]  %s185, 1024, %s187, %s175, 256, 256, 16
        $region32: #{tpu_custom_call.1} parent=27 // pred_fallthru
          _
      $region28: #{tpu_custom_call.1} parent=5 // pred_fallthru
        _
      %p193 = scmp.le.s32.totalorder 1, %s17
      %p194 = scmp.lt.s32.totalorder %s17, 3
      %p195 = pnand %p193, %p194
      %p196 = pneg %p195
      // Predicated region
      $region33: #{tpu_custom_call.1} parent=5 // pred_check
        _
      $region34: #{tpu_custom_call.1} parent=5 // pred_check_branch
        %198 = sbr.rel (%p195) target = $region36
      $region35: #{tpu_custom_call.1} parent=5 // pred_region
        %s199 = ssub.s32 %s17, 1
        %s200 = sand.u32 %s30, 1
        %s201 = scalar_lea.sflag [#allocation3], %s200
        %s202 = sand.u32 %s30, 1
        %s203 = smul.addr %s202, 64
        %s204 = scalar_lea.vmem [#allocation2], %s203
        // Predicated region
        $region37: #{tpu_custom_call.1} parent=35 // pred_check
          %p205 = pneg %p43
        $region38: #{tpu_custom_call.1} parent=35 // pred_check_branch
          %207 = sbr.rel (%p205) target = $region40
        $region39: #{tpu_custom_call.1} parent=35 // pred_region
          %209 = dma.done %s201, 1024
        $region40: #{tpu_custom_call.1} parent=35 // pred_fallthru
          _
        // Predicated region
        $region41: #{tpu_custom_call.1} parent=35 // pred_check
          %p210 = pneg %p106
        $region42: #{tpu_custom_call.1} parent=35 // pred_check_branch
          %212 = sbr.rel (%p210) target = $region44
        $region43: #{tpu_custom_call.1} parent=35 // pred_region
          %214 = dma.done [#allocation6], 16384
        $region44: #{tpu_custom_call.1} parent=35 // pred_fallthru
          _
        %s215 = sand.u32 %s30, 1
        %s216 = scalar_lea.sflag [#allocation3], %s215
        %s217 = sand.u32 %s30, 1
        %s218 = smul.addr %s217, 64
        %s219 = scalar_lea.vmem [#allocation2], %s218
        %p220 = pneg %p43
        %p221 = pneg %p40
        %p222 = pneg %p64
        %p223 = pneg %p61
        %p224 = pneg %p85
        %p225 = pneg %p82
        %p226 = pneg %p106
        %p227 = pneg %p103
        %p228 = pneg %p132
        %p229 = pneg %p129
        %s230 = sand.u32 %s119, 1
        %s231 = scalar_lea.sflag [#allocation4], %s230
        %s232 = sand.u32 %s119, 1
        %s233 = smul.addr %s232, 64
        %s234 = scalar_lea.vmem [#allocation7], %s233
        %v235 = vld [vmem:[%s1] sm:$0xff]
        %v236 = vld [vmem:[%s1 + $0x8] sm:$0xff]
        %v237 = vld [vmem:[%s1 + $0x10] sm:$0xff]
        %v238 = vld [vmem:[%s1 + $0x18] sm:$0xff]
        %v239 = vld [vmem:[%s2] sm:$0xff]
        %v240 = vld [vmem:[%s2 + $0x8] sm:$0xff]
        %v241 = vld [vmem:[%s2 + $0x10] sm:$0xff]
        %v242 = vld [vmem:[%s2 + $0x18] sm:$0xff]
        %v243 = vld [vmem:[#allocation5] sm:$0xff]
        %v244 = vld [vmem:[#allocation5 + $0x8] sm:$0xff]
        %v245 = vld [vmem:[#allocation5 + $0x10] sm:$0xff]
        %v246 = vld [vmem:[#allocation5 + $0x18] sm:$0xff]
        %v247 = vld [vmem:[#allocation5 + $0x20] sm:$0xff]
        %v248 = vld [vmem:[#allocation5 + $0x28] sm:$0xff]
        %v249 = vld [vmem:[#allocation5 + $0x30] sm:$0xff]
        %v250 = vld [vmem:[#allocation5 + $0x38] sm:$0xff]
        %v251 = vld [vmem:[#allocation5 + $0x40] sm:$0xff]
        %v252 = vld [vmem:[#allocation5 + $0x48] sm:$0xff]
        %v253 = vld [vmem:[#allocation5 + $0x50] sm:$0xff]
        %v254 = vld [vmem:[#allocation5 + $0x58] sm:$0xff]
        %v255 = vld [vmem:[#allocation5 + $0x60] sm:$0xff]
        %v256 = vld [vmem:[#allocation5 + $0x68] sm:$0xff]
        %v257 = vld [vmem:[#allocation5 + $0x70] sm:$0xff]
        %v258 = vld [vmem:[#allocation5 + $0x78] sm:$0xff]
        %v259 = vld [vmem:[#allocation5 + $0x80] sm:$0xff]
        %v260 = vld [vmem:[#allocation5 + $0x88] sm:$0xff]
        %v261 = vld [vmem:[#allocation5 + $0x90] sm:$0xff]
        %v262 = vld [vmem:[#allocation5 + $0x98] sm:$0xff]
        %v263 = vld [vmem:[#allocation5 + $0xa0] sm:$0xff]
        %v264 = vld [vmem:[#allocation5 + $0xa8] sm:$0xff]
        %v265 = vld [vmem:[#allocation5 + $0xb0] sm:$0xff]
        %v266 = vld [vmem:[#allocation5 + $0xb8] sm:$0xff]
        %v267 = vld [vmem:[#allocation5 + $0xc0] sm:$0xff]
        %v268 = vld [vmem:[#allocation5 + $0xc8] sm:$0xff]
        %v269 = vld [vmem:[#allocation5 + $0xd0] sm:$0xff]
        %v270 = vld [vmem:[#allocation5 + $0xd8] sm:$0xff]
        %v271 = vld [vmem:[#allocation5 + $0xe0] sm:$0xff]
        %v272 = vld [vmem:[#allocation5 + $0xe8] sm:$0xff]
        %v273 = vld [vmem:[#allocation5 + $0xf0] sm:$0xff]
        %v274 = vld [vmem:[#allocation5 + $0xf8] sm:$0xff]
        %v275 = vld [vmem:[#allocation5 + $0x100] sm:$0xff]
        %v276 = vld [vmem:[#allocation5 + $0x108] sm:$0xff]
        %v277 = vld [vmem:[#allocation5 + $0x110] sm:$0xff]
        %v278 = vld [vmem:[#allocation5 + $0x118] sm:$0xff]
        %v279 = vld [vmem:[#allocation5 + $0x120] sm:$0xff]
        %v280 = vld [vmem:[#allocation5 + $0x128] sm:$0xff]
        %v281 = vld [vmem:[#allocation5 + $0x130] sm:$0xff]
        %v282 = vld [vmem:[#allocation5 + $0x138] sm:$0xff]
        %v283 = vld [vmem:[#allocation5 + $0x140] sm:$0xff]
        %v284 = vld [vmem:[#allocation5 + $0x148] sm:$0xff]
        %v285 = vld [vmem:[#allocation5 + $0x150] sm:$0xff]
        %v286 = vld [vmem:[#allocation5 + $0x158] sm:$0xff]
        %v287 = vld [vmem:[#allocation5 + $0x160] sm:$0xff]
        %v288 = vld [vmem:[#allocation5 + $0x168] sm:$0xff]
        %v289 = vld [vmem:[#allocation5 + $0x170] sm:$0xff]
        %v290 = vld [vmem:[#allocation5 + $0x178] sm:$0xff]
        %v291 = vld [vmem:[#allocation5 + $0x180] sm:$0xff]
        %v292 = vld [vmem:[#allocation5 + $0x188] sm:$0xff]
        %v293 = vld [vmem:[#allocation5 + $0x190] sm:$0xff]
        %v294 = vld [vmem:[#allocation5 + $0x198] sm:$0xff]
        %v295 = vld [vmem:[#allocation5 + $0x1a0] sm:$0xff]
        %v296 = vld [vmem:[#allocation5 + $0x1a8] sm:$0xff]
        %v297 = vld [vmem:[#allocation5 + $0x1b0] sm:$0xff]
        %v298 = vld [vmem:[#allocation5 + $0x1b8] sm:$0xff]
        %v299 = vld [vmem:[#allocation5 + $0x1c0] sm:$0xff]
        %v300 = vld [vmem:[#allocation5 + $0x1c8] sm:$0xff]
        %v301 = vld [vmem:[#allocation5 + $0x1d0] sm:$0xff]
        %v302 = vld [vmem:[#allocation5 + $0x1d8] sm:$0xff]
        %v303 = vld [vmem:[#allocation5 + $0x1e0] sm:$0xff]
        %v304 = vld [vmem:[#allocation5 + $0x1e8] sm:$0xff]
        %v305 = vld [vmem:[#allocation5 + $0x1f0] sm:$0xff]
        %v306 = vld [vmem:[#allocation5 + $0x1f8] sm:$0xff]
        %s307 = scalar_lea.vmem [#allocation5], 512
        %v308 = vld [vmem:[%s307] sm:$0xff]
        %v309 = vld [vmem:[%s307 + $0x8] sm:$0xff]
        %v310 = vld [vmem:[%s307 + $0x10] sm:$0xff]
        %v311 = vld [vmem:[%s307 + $0x18] sm:$0xff]
        %v312 = vld [vmem:[%s307 + $0x20] sm:$0xff]
        %v313 = vld [vmem:[%s307 + $0x28] sm:$0xff]
        %v314 = vld [vmem:[%s307 + $0x30] sm:$0xff]
        %v315 = vld [vmem:[%s307 + $0x38] sm:$0xff]
        %v316 = vld [vmem:[%s307 + $0x40] sm:$0xff]
        %v317 = vld [vmem:[%s307 + $0x48] sm:$0xff]
        %v318 = vld [vmem:[%s307 + $0x50] sm:$0xff]
        %v319 = vld [vmem:[%s307 + $0x58] sm:$0xff]
        %v320 = vld [vmem:[%s307 + $0x60] sm:$0xff]
        %v321 = vld [vmem:[%s307 + $0x68] sm:$0xff]
        %v322 = vld [vmem:[%s307 + $0x70] sm:$0xff]
        %v323 = vld [vmem:[%s307 + $0x78] sm:$0xff]
        %v324 = vld [vmem:[%s307 + $0x80] sm:$0xff]
        %v325 = vld [vmem:[%s307 + $0x88] sm:$0xff]
        %v326 = vld [vmem:[%s307 + $0x90] sm:$0xff]
        %v327 = vld [vmem:[%s307 + $0x98] sm:$0xff]
        %v328 = vld [vmem:[%s307 + $0xa0] sm:$0xff]
        %v329 = vld [vmem:[%s307 + $0xa8] sm:$0xff]
        %v330 = vld [vmem:[%s307 + $0xb0] sm:$0xff]
        %v331 = vld [vmem:[%s307 + $0xb8] sm:$0xff]
        %v332 = vld [vmem:[%s307 + $0xc0] sm:$0xff]
        %v333 = vld [vmem:[%s307 + $0xc8] sm:$0xff]
        %v334 = vld [vmem:[%s307 + $0xd0] sm:$0xff]
        %v335 = vld [vmem:[%s307 + $0xd8] sm:$0xff]
        %v336 = vld [vmem:[%s307 + $0xe0] sm:$0xff]
        %v337 = vld [vmem:[%s307 + $0xe8] sm:$0xff]
        %v338 = vld [vmem:[%s307 + $0xf0] sm:$0xff]
        %v339 = vld [vmem:[%s307 + $0xf8] sm:$0xff]
        %v340 = vld [vmem:[%s307 + $0x100] sm:$0xff]
        %v341 = vld [vmem:[%s307 + $0x108] sm:$0xff]
        %v342 = vld [vmem:[%s307 + $0x110] sm:$0xff]
        %v343 = vld [vmem:[%s307 + $0x118] sm:$0xff]
        %v344 = vld [vmem:[%s307 + $0x120] sm:$0xff]
        %v345 = vld [vmem:[%s307 + $0x128] sm:$0xff]
        %v346 = vld [vmem:[%s307 + $0x130] sm:$0xff]
        %v347 = vld [vmem:[%s307 + $0x138] sm:$0xff]
        %v348 = vld [vmem:[%s307 + $0x140] sm:$0xff]
        %v349 = vld [vmem:[%s307 + $0x148] sm:$0xff]
        %v350 = vld [vmem:[%s307 + $0x150] sm:$0xff]
        %v351 = vld [vmem:[%s307 + $0x158] sm:$0xff]
        %v352 = vld [vmem:[%s307 + $0x160] sm:$0xff]
        %v353 = vld [vmem:[%s307 + $0x168] sm:$0xff]
        %v354 = vld [vmem:[%s307 + $0x170] sm:$0xff]
        %v355 = vld [vmem:[%s307 + $0x178] sm:$0xff]
        %v356 = vld [vmem:[%s307 + $0x180] sm:$0xff]
        %v357 = vld [vmem:[%s307 + $0x188] sm:$0xff]
        %v358 = vld [vmem:[%s307 + $0x190] sm:$0xff]
        %v359 = vld [vmem:[%s307 + $0x198] sm:$0xff]
        %v360 = vld [vmem:[%s307 + $0x1a0] sm:$0xff]
        %v361 = vld [vmem:[%s307 + $0x1a8] sm:$0xff]
        %v362 = vld [vmem:[%s307 + $0x1b0] sm:$0xff]
        %v363 = vld [vmem:[%s307 + $0x1b8] sm:$0xff]
        %v364 = vld [vmem:[%s307 + $0x1c0] sm:$0xff]
        %v365 = vld [vmem:[%s307 + $0x1c8] sm:$0xff]
        %v366 = vld [vmem:[%s307 + $0x1d0] sm:$0xff]
        %v367 = vld [vmem:[%s307 + $0x1d8] sm:$0xff]
        %v368 = vld [vmem:[%s307 + $0x1e0] sm:$0xff]
        %v369 = vld [vmem:[%s307 + $0x1e8] sm:$0xff]
        %v370 = vld [vmem:[%s307 + $0x1f0] sm:$0xff]
        %v371 = vld [vmem:[%s307 + $0x1f8] sm:$0xff]
        %v372 = vld [vmem:[%s204] sm:$0xff]
        %v373 = vld [vmem:[%s204 + $0x8] sm:$0xff]
        %v374 = vld [vmem:[%s204 + $0x10] sm:$0xff]
        %v375 = vld [vmem:[%s204 + $0x18] sm:$0xff]
        %v376 = vld [vmem:[%s204 + $0x20] sm:$0xff]
        %v377 = vld [vmem:[%s204 + $0x28] sm:$0xff]
        %v378 = vld [vmem:[%s204 + $0x30] sm:$0xff]
        %v379 = vld [vmem:[%s204 + $0x38] sm:$0xff]
        %v380 = vadd.f32 %v372, %v373
        %381 = vadd.xlane.f32.xlu0 %v380
        %v382 = vpop.xlane.xlu0 %381
        %v383 = vadd.f32 %v374, %v375
        %384 = vadd.xlane.f32.xlu0 %v383
        %v385 = vpop.xlane.xlu0 %384
        %v386 = vadd.f32 %v376, %v377
        %387 = vadd.xlane.f32.xlu0 %v386
        %v388 = vpop.xlane.xlu0 %387
        %v389 = vadd.f32 %v378, %v379
        %390 = vadd.xlane.f32.xlu0 %v389
        %v391 = vpop.xlane.xlu0 %390
        %v392 = vrcp.pop 256.0
        %v393 = vmul.f32 256.0, %v392
        %v394 = vsub.f32 1.0, %v393
        %v395 = vmul.f32 %v392, %v394
        %v396 = vadd.f32 %v392, %v395
        %vm397 = vweird.f32 %v392
        %v398 = vsel %vm397, %v392, %v396
        %v399 = vmul.f32 %v382, %v398
        %v400 = vmul.f32 %v385, %v398
        %v401 = vmul.f32 %v388, %v398
        %v402 = vmul.f32 %v391, %v398
        %v403 = vmax.f32 %v372, %v373
        %404 = vmax.xlane.f32.xlu0 %v403
        %v405 = vpop.xlane.xlu0 %404
        %v406 = vmax.f32 %v374, %v375
        %407 = vmax.xlane.f32.xlu0 %v406
        %v408 = vpop.xlane.xlu0 %407
        %v409 = vmax.f32 %v376, %v377
        %410 = vmax.xlane.f32.xlu0 %v409
        %v411 = vpop.xlane.xlu0 %410
        %v412 = vmax.f32 %v378, %v379
        %413 = vmax.xlane.f32.xlu0 %v412
        %v414 = vpop.xlane.xlu0 %413
        %v415 = vmul.f32 %v399, %v235
        %v416 = vmul.f32 %v400, %v236
        %v417 = vmul.f32 %v401, %v237
        %v418 = vmul.f32 %v402, %v238
        %vm419 = vcmask 15360
        %v420 = vsel %vm419, %v415, 0.0
        %v421 = vsel %vm419, %v416, 0.0
        %v422 = vadd.f32 %v420, %v421
        %v423 = vsel %vm419, %v417, 0.0
        %v424 = vadd.f32 %v422, %v423
        %v425 = vsel %vm419, %v418, 0.0
        %v426 = vadd.f32 %v424, %v425
        %v427 = vrot.slane %v426, 4
        %v428 = vadd.f32 %v426, %v427
        %v429 = vrot.slane %v428, 2
        %v430 = vadd.f32 %v428, %v429
        %v431 = vrot.slane %v430, 1
        %v432 = vadd.f32 %v430, %v431
        %v433 = vmax.f32 %v432, 0.0
        %v434 = vmul.f32 %v239, %v433
        %v435 = vmul.f32 %v240, %v433
        %v436 = vmul.f32 %v241, %v433
        %v437 = vmul.f32 %v242, %v433
        %v438 = vsel %vm419, %v434, 0.0
        %439 = vadd.xlane.f32.xlu0 %v438
        %v440 = vpop.xlane.xlu0 %439
        %v441 = vsel %vm419, %v435, 0.0
        %442 = vadd.xlane.f32.xlu0 %v441
        %v443 = vpop.xlane.xlu0 %442
        %v444 = vsel %vm419, %v436, 0.0
        %445 = vadd.xlane.f32.xlu0 %v444
        %v446 = vpop.xlane.xlu0 %445
        %v447 = vsel %vm419, %v437, 0.0
        %448 = vadd.xlane.f32.xlu0 %v447
        %v449 = vpop.xlane.xlu0 %448
        %v450 = vmul.f32 %v405, %v235
        %v451 = vmul.f32 %v408, %v236
        %v452 = vmul.f32 %v411, %v237
        %v453 = vmul.f32 %v414, %v238
        %v454 = vsel %vm419, %v450, 0.0
        %v455 = vsel %vm419, %v451, 0.0
        %v456 = vadd.f32 %v454, %v455
        %v457 = vsel %vm419, %v452, 0.0
        %v458 = vadd.f32 %v456, %v457
        %v459 = vsel %vm419, %v453, 0.0
        %v460 = vadd.f32 %v458, %v459
        %v461 = vrot.slane %v460, 4
        %v462 = vadd.f32 %v460, %v461
        %v463 = vrot.slane %v462, 2
        %v464 = vadd.f32 %v462, %v463
        %v465 = vrot.slane %v464, 1
        %v466 = vadd.f32 %v464, %v465
        %v467 = vmax.f32 %v466, 0.0
        %v468 = vmul.f32 %v239, %v467
        %v469 = vmul.f32 %v240, %v467
        %v470 = vmul.f32 %v241, %v467
        %v471 = vmul.f32 %v242, %v467
        %v472 = vsel %vm419, %v468, 0.0
        %473 = vadd.xlane.f32.xlu0 %v472
        %v474 = vpop.xlane.xlu0 %473
        %v475 = vsel %vm419, %v469, 0.0
        %476 = vadd.xlane.f32.xlu0 %v475
        %v477 = vpop.xlane.xlu0 %476
        %v478 = vsel %vm419, %v470, 0.0
        %479 = vadd.xlane.f32.xlu0 %v478
        %v480 = vpop.xlane.xlu0 %479
        %v481 = vsel %vm419, %v471, 0.0
        %482 = vadd.xlane.f32.xlu0 %v481
        %v483 = vpop.xlane.xlu0 %482
        %v484 = vadd.f32 %v440, %v474
        %v485 = vadd.f32 %v443, %v477
        %v486 = vadd.f32 %v446, %v480
        %v487 = vadd.f32 %v449, %v483
        %v488 = vxor.u32 %v484, 2147483648
        %v489 = vxor.u32 %v485, 2147483648
        %v490 = vxor.u32 %v486, 2147483648
        %v491 = vxor.u32 %v487, 2147483648
        %v492 = vmul.f32 %v488, 1.442695
        %v493 = vpow.pop %v492
        %v494 = vmul.f32 %v489, 1.442695
        %v495 = vpow.pop %v494
        %v496 = vmul.f32 %v490, 1.442695
        %v497 = vpow.pop %v496
        %v498 = vmul.f32 %v491, 1.442695
        %v499 = vpow.pop %v498
        %v500 = vadd.f32 %v493, 1.0
        %v501 = vadd.f32 %v495, 1.0
        %v502 = vadd.f32 %v497, 1.0
        %v503 = vadd.f32 %v499, 1.0
        %v504 = vrcp.pop %v500
        %v505 = vmul.f32 %v500, %v504
        %v506 = vsub.f32 1.0, %v505
        %v507 = vmul.f32 %v504, %v506
        %v508 = vadd.f32 %v504, %v507
        %vm509 = vweird.f32 %v500
        %vm510 = vweird.f32 %v504
        %vm511 = vmor %vm509, %vm510
        %v512 = vsel %vm511, %v504, %v508
        %v513 = vand.u32 2147483647, %v500
        %vm514 = vcmp.eq.f32.partialorder %v513, 8.507059e+37
        %v515 = vand.u32 %v500, 2147483648
        %v516 = vor.u32 1.1754944e-38, %v515
        %v517 = vsel %vm514, %v516, %v512
        %v518 = vmul.f32 1.0, %v517
        %v519 = vrcp.pop %v501
        %v520 = vmul.f32 %v501, %v519
        %v521 = vsub.f32 1.0, %v520
        %v522 = vmul.f32 %v519, %v521
        %v523 = vadd.f32 %v519, %v522
        %vm524 = vweird.f32 %v501
        %vm525 = vweird.f32 %v519
        %vm526 = vmor %vm524, %vm525
        %v527 = vsel %vm526, %v519, %v523
        %v528 = vand.u32 2147483647, %v501
        %vm529 = vcmp.eq.f32.partialorder %v528, 8.507059e+37
        %v530 = vand.u32 %v501, 2147483648
        %v531 = vor.u32 1.1754944e-38, %v530
        %v532 = vsel %vm529, %v531, %v527
        %v533 = vmul.f32 1.0, %v532
        %v534 = vrcp.pop %v502
        %v535 = vmul.f32 %v502, %v534
        %v536 = vsub.f32 1.0, %v535
        %v537 = vmul.f32 %v534, %v536
        %v538 = vadd.f32 %v534, %v537
        %vm539 = vweird.f32 %v502
        %vm540 = vweird.f32 %v534
        %vm541 = vmor %vm539, %vm540
        %v542 = vsel %vm541, %v534, %v538
        %v543 = vand.u32 2147483647, %v502
        %vm544 = vcmp.eq.f32.partialorder %v543, 8.507059e+37
        %v545 = vand.u32 %v502, 2147483648
        %v546 = vor.u32 1.1754944e-38, %v545
        %v547 = vsel %vm544, %v546, %v542
        %v548 = vmul.f32 1.0, %v547
        %v549 = vrcp.pop %v503
        %v550 = vmul.f32 %v503, %v549
        %v551 = vsub.f32 1.0, %v550
        %v552 = vmul.f32 %v549, %v551
        %v553 = vadd.f32 %v549, %v552
        %vm554 = vweird.f32 %v503
        %vm555 = vweird.f32 %v549
        %vm556 = vmor %vm554, %vm555
        %v557 = vsel %vm556, %v549, %v553
        %v558 = vand.u32 2147483647, %v503
        %vm559 = vcmp.eq.f32.partialorder %v558, 8.507059e+37
        %v560 = vand.u32 %v503, 2147483648
        %v561 = vor.u32 1.1754944e-38, %v560
        %v562 = vsel %vm559, %v561, %v557
        %v563 = vmul.f32 1.0, %v562
        %v564 = vmul.f32 %v372, %v518
        %v565 = vmul.f32 %v373, %v518
        %v566 = vmul.f32 %v374, %v533
        %v567 = vmul.f32 %v375, %v533
        %v568 = vmul.f32 %v376, %v548
        %v569 = vmul.f32 %v377, %v548
        %v570 = vmul.f32 %v378, %v563
        %v571 = vmul.f32 %v379, %v563
        %v572 = vadd.f32 %v564, %v566
        %v573 = vadd.f32 %v572, %v568
        %v574 = vadd.f32 %v573, %v570
        %v575 = vrot.slane %v574, 4
        %v576 = vadd.f32 %v574, %v575
        %v577 = vrot.slane %v576, 2
        %v578 = vadd.f32 %v576, %v577
        %v579 = vrot.slane %v578, 1
        %v580 = vadd.f32 %v578, %v579
        %v581 = vadd.f32 %v565, %v567
        %v582 = vadd.f32 %v581, %v569
        %v583 = vadd.f32 %v582, %v571
        %v584 = vrot.slane %v583, 4
        %v585 = vadd.f32 %v583, %v584
        %v586 = vrot.slane %v585, 2
        %v587 = vadd.f32 %v585, %v586
        %v588 = vrot.slane %v587, 1
        %v589 = vadd.f32 %v587, %v588
        %v590 = vrcp.pop 32.0
        %v591 = vmul.f32 32.0, %v590
        %v592 = vsub.f32 1.0, %v591
        %v593 = vmul.f32 %v590, %v592
        %v594 = vadd.f32 %v590, %v593
        %vm595 = vweird.f32 %v590
        %v596 = vsel %vm595, %v590, %v594
        %v597 = vmul.f32 %v580, %v596
        %v598 = vmul.f32 %v589, %v596
        %v599 = vmax.f32 %v564, %v568
        %v600 = vmax.f32 %v566, %v570
        %v601 = vmax.f32 %v599, %v600
        %v602 = vrot.slane %v601, 4
        %v603 = vmax.f32 %v601, %v602
        %v604 = vrot.slane %v603, 2
        %v605 = vmax.f32 %v603, %v604
        %v606 = vrot.slane %v605, 1
        %v607 = vmax.f32 %v605, %v606
        %v608 = vmax.f32 %v565, %v569
        %v609 = vmax.f32 %v567, %v571
        %v610 = vmax.f32 %v608, %v609
        %v611 = vrot.slane %v610, 4
        %v612 = vmax.f32 %v610, %v611
        %v613 = vrot.slane %v612, 2
        %v614 = vmax.f32 %v612, %v613
        %v615 = vrot.slane %v614, 1
        %v616 = vmax.f32 %v614, %v615
        %v617 = vand.u32 %v338, 4294901760
        %618 = vmatpush.msra.mxu0 %v617
        %v619 = vand.u32 %v336, 4294901760
        %620 = vmatpush.msra.mxu0 %v619
        %v621 = vand.u32 %v334, 4294901760
        %622 = vmatpush.msra.mxu0 %v621
        %v623 = vand.u32 %v332, 4294901760
        %624 = vmatpush.msra.mxu0 %v623
        %v625 = vand.u32 %v330, 4294901760
        %626 = vmatpush.msra.mxu0 %v625
        %v627 = vand.u32 %v328, 4294901760
        %628 = vmatpush.msra.mxu0 %v627
        %v629 = vand.u32 %v326, 4294901760
        %630 = vmatpush.msra.mxu0 %v629
        %v631 = vand.u32 %v324, 4294901760
        %632 = vmatpush.msra.mxu0 %v631
        %v633 = vand.u32 %v322, 4294901760
        %634 = vmatpush.msra.mxu0 %v633
        %v635 = vand.u32 %v320, 4294901760
        %636 = vmatpush.msra.mxu0 %v635
        %v637 = vand.u32 %v318, 4294901760
        %638 = vmatpush.msra.mxu0 %v637
        %v639 = vand.u32 %v316, 4294901760
        %640 = vmatpush.msra.mxu0 %v639
        %v641 = vand.u32 %v314, 4294901760
        %642 = vmatpush.msra.mxu0 %v641
        %v643 = vand.u32 %v312, 4294901760
        %644 = vmatpush.msra.mxu0 %v643
        %v645 = vand.u32 %v310, 4294901760
        %646 = vmatpush.msra.mxu0 %v645
        %v647 = vand.u32 %v308, 4294901760
        %648 = vmatpush.msra.mxu0 %v647
        %v649 = vand.u32 %v607, 4294901760
        %v650 = vsub.f32 %v607, %v649
        %v651 = vand.u32 %v650, 4294901760
        %v652 = vsub.f32 %v650, %v651
        %v653 = vand.u32 %v652, 4294901760
        %654 = vmatmul.f32.gmra.mxu0 %v653
        %v655 = vpop.f32.mrf.mxu0
        %v656 = vadd.f32 0.0, %v655
        %657 = vdwg.mxu0
        %v658 = vand.u32 %v338, 4294901760
        %v659 = vsub.f32 %v338, %v658
        %v660 = vand.u32 %v659, 4294901760
        %v661 = vsub.f32 %v659, %v660
        %v662 = vand.u32 %v661, 4294901760
        %663 = vmatpush.msra.mxu0 %v662
        %v664 = vand.u32 %v336, 4294901760
        %v665 = vsub.f32 %v336, %v664
        %v666 = vand.u32 %v665, 4294901760
        %v667 = vsub.f32 %v665, %v666
        %v668 = vand.u32 %v667, 4294901760
        %669 = vmatpush.msra.mxu0 %v668
        %v670 = vand.u32 %v334, 4294901760
        %v671 = vsub.f32 %v334, %v670
        %v672 = vand.u32 %v671, 4294901760
        %v673 = vsub.f32 %v671, %v672
        %v674 = vand.u32 %v673, 4294901760
        %675 = vmatpush.msra.mxu0 %v674
        %v676 = vand.u32 %v332, 4294901760
        %v677 = vsub.f32 %v332, %v676
        %v678 = vand.u32 %v677, 4294901760
        %v679 = vsub.f32 %v677, %v678
        %v680 = vand.u32 %v679, 4294901760
        %681 = vmatpush.msra.mxu0 %v680
        %v682 = vand.u32 %v330, 4294901760
        %v683 = vsub.f32 %v330, %v682
        %v684 = vand.u32 %v683, 4294901760
        %v685 = vsub.f32 %v683, %v684
        %v686 = vand.u32 %v685, 4294901760
        %687 = vmatpush.msra.mxu0 %v686
        %v688 = vand.u32 %v328, 4294901760
        %v689 = vsub.f32 %v328, %v688
        %v690 = vand.u32 %v689, 4294901760
        %v691 = vsub.f32 %v689, %v690
        %v692 = vand.u32 %v691, 4294901760
        %693 = vmatpush.msra.mxu0 %v692
        %v694 = vand.u32 %v326, 4294901760
        %v695 = vsub.f32 %v326, %v694
        %v696 = vand.u32 %v695, 4294901760
        %v697 = vsub.f32 %v695, %v696
        %v698 = vand.u32 %v697, 4294901760
        %699 = vmatpush.msra.mxu0 %v698
        %v700 = vand.u32 %v324, 4294901760
        %v701 = vsub.f32 %v324, %v700
        %v702 = vand.u32 %v701, 4294901760
        %v703 = vsub.f32 %v701, %v702
        %v704 = vand.u32 %v703, 4294901760
        %705 = vmatpush.msra.mxu0 %v704
        %v706 = vand.u32 %v322, 4294901760
        %v707 = vsub.f32 %v322, %v706
        %v708 = vand.u32 %v707, 4294901760
        %v709 = vsub.f32 %v707, %v708
        %v710 = vand.u32 %v709, 4294901760
        %711 = vmatpush.msra.mxu0 %v710
        %v712 = vand.u32 %v320, 4294901760
        %v713 = vsub.f32 %v320, %v712
        %v714 = vand.u32 %v713, 4294901760
        %v715 = vsub.f32 %v713, %v714
        %v716 = vand.u32 %v715, 4294901760
        %717 = vmatpush.msra.mxu0 %v716
        %v718 = vand.u32 %v318, 4294901760
        %v719 = vsub.f32 %v318, %v718
        %v720 = vand.u32 %v719, 4294901760
        %v721 = vsub.f32 %v719, %v720
        %v722 = vand.u32 %v721, 4294901760
        %723 = vmatpush.msra.mxu0 %v722
        %v724 = vand.u32 %v316, 4294901760
        %v725 = vsub.f32 %v316, %v724
        %v726 = vand.u32 %v725, 4294901760
        %v727 = vsub.f32 %v725, %v726
        %v728 = vand.u32 %v727, 4294901760
        %729 = vmatpush.msra.mxu0 %v728
        %v730 = vand.u32 %v314, 4294901760
        %v731 = vsub.f32 %v314, %v730
        %v732 = vand.u32 %v731, 4294901760
        %v733 = vsub.f32 %v731, %v732
        %v734 = vand.u32 %v733, 4294901760
        %735 = vmatpush.msra.mxu0 %v734
        %v736 = vand.u32 %v312, 4294901760
        %v737 = vsub.f32 %v312, %v736
        %v738 = vand.u32 %v737, 4294901760
        %v739 = vsub.f32 %v737, %v738
        %v740 = vand.u32 %v739, 4294901760
        %741 = vmatpush.msra.mxu0 %v740
        %v742 = vand.u32 %v310, 4294901760
        %v743 = vsub.f32 %v310, %v742
        %v744 = vand.u32 %v743, 4294901760
        %v745 = vsub.f32 %v743, %v744
        %v746 = vand.u32 %v745, 4294901760
        %747 = vmatpush.msra.mxu0 %v746
        %v748 = vand.u32 %v308, 4294901760
        %v749 = vsub.f32 %v308, %v748
        %v750 = vand.u32 %v749, 4294901760
        %v751 = vsub.f32 %v749, %v750
        %v752 = vand.u32 %v751, 4294901760
        %753 = vmatpush.msra.mxu0 %v752
        %v754 = vand.u32 %v607, 4294901760
        %755 = vmatmul.f32.gmra.mxu0 %v754
        %v756 = vpop.f32.mrf.mxu0
        %v757 = vadd.f32 %v656, %v756
        %758 = vdwg.mxu0
        %v759 = vand.u32 %v338, 4294901760
        %v760 = vsub.f32 %v338, %v759
        %761 = vmatpush.msra.mxu0 %v760
        %v762 = vand.u32 %v336, 4294901760
        %v763 = vsub.f32 %v336, %v762
        %764 = vmatpush.msra.mxu0 %v763
        %v765 = vand.u32 %v334, 4294901760
        %v766 = vsub.f32 %v334, %v765
        %767 = vmatpush.msra.mxu0 %v766
        %v768 = vand.u32 %v332, 4294901760
        %v769 = vsub.f32 %v332, %v768
        %770 = vmatpush.msra.mxu0 %v769
        %v771 = vand.u32 %v330, 4294901760
        %v772 = vsub.f32 %v330, %v771
        %773 = vmatpush.msra.mxu0 %v772
        %v774 = vand.u32 %v328, 4294901760
        %v775 = vsub.f32 %v328, %v774
        %776 = vmatpush.msra.mxu0 %v775
        %v777 = vand.u32 %v326, 4294901760
        %v778 = vsub.f32 %v326, %v777
        %779 = vmatpush.msra.mxu0 %v778
        %v780 = vand.u32 %v324, 4294901760
        %v781 = vsub.f32 %v324, %v780
        %782 = vmatpush.msra.mxu0 %v781
        %v783 = vand.u32 %v322, 4294901760
        %v784 = vsub.f32 %v322, %v783
        %785 = vmatpush.msra.mxu0 %v784
        %v786 = vand.u32 %v320, 4294901760
        %v787 = vsub.f32 %v320, %v786
        %788 = vmatpush.msra.mxu0 %v787
        %v789 = vand.u32 %v318, 4294901760
        %v790 = vsub.f32 %v318, %v789
        %791 = vmatpush.msra.mxu0 %v790
        %v792 = vand.u32 %v316, 4294901760
        %v793 = vsub.f32 %v316, %v792
        %794 = vmatpush.msra.mxu0 %v793
        %v795 = vand.u32 %v314, 4294901760
        %v796 = vsub.f32 %v314, %v795
        %797 = vmatpush.msra.mxu0 %v796
        %v798 = vand.u32 %v312, 4294901760
        %v799 = vsub.f32 %v312, %v798
        %800 = vmatpush.msra.mxu0 %v799
        %v801 = vand.u32 %v310, 4294901760
        %v802 = vsub.f32 %v310, %v801
        %803 = vmatpush.msra.mxu0 %v802
        %v804 = vand.u32 %v308, 4294901760
        %v805 = vsub.f32 %v308, %v804
        %806 = vmatpush.msra.mxu0 %v805
        %v807 = vand.u32 %v607, 4294901760
        %v808 = vsub.f32 %v607, %v807
        %809 = vmatmul.f32.gmra.mxu0 %v808
        %v810 = vpop.f32.mrf.mxu0
        %v811 = vadd.f32 %v757, %v810
        %812 = vdwg.mxu0
        %v813 = vand.u32 %v338, 4294901760
        %814 = vmatpush.msra.mxu0 %v813
        %v815 = vand.u32 %v336, 4294901760
        %816 = vmatpush.msra.mxu0 %v815
        %v817 = vand.u32 %v334, 4294901760
        %818 = vmatpush.msra.mxu0 %v817
        %v819 = vand.u32 %v332, 4294901760
        %820 = vmatpush.msra.mxu0 %v819
        %v821 = vand.u32 %v330, 4294901760
        %822 = vmatpush.msra.mxu0 %v821
        %v823 = vand.u32 %v328, 4294901760
        %824 = vmatpush.msra.mxu0 %v823
        %v825 = vand.u32 %v326, 4294901760
        %826 = vmatpush.msra.mxu0 %v825
        %v827 = vand.u32 %v324, 4294901760
        %828 = vmatpush.msra.mxu0 %v827
        %v829 = vand.u32 %v322, 4294901760
        %830 = vmatpush.msra.mxu0 %v829
        %v831 = vand.u32 %v320, 4294901760
        %832 = vmatpush.msra.mxu0 %v831
        %v833 = vand.u32 %v318, 4294901760
        %834 = vmatpush.msra.mxu0 %v833
        %v835 = vand.u32 %v316, 4294901760
        %836 = vmatpush.msra.mxu0 %v835
        %v837 = vand.u32 %v314, 4294901760
        %838 = vmatpush.msra.mxu0 %v837
        %v839 = vand.u32 %v312, 4294901760
        %840 = vmatpush.msra.mxu0 %v839
        %v841 = vand.u32 %v310, 4294901760
        %842 = vmatpush.msra.mxu0 %v841
        %v843 = vand.u32 %v308, 4294901760
        %844 = vmatpush.msra.mxu0 %v843
        %v845 = vand.u32 %v607, 4294901760
        %v846 = vsub.f32 %v607, %v845
        %v847 = vand.u32 %v846, 4294901760
        %848 = vmatmul.f32.gmra.mxu0 %v847
        %v849 = vpop.f32.mrf.mxu0
        %v850 = vadd.f32 %v811, %v849
        %851 = vdwg.mxu0
        %v852 = vand.u32 %v338, 4294901760
        %v853 = vsub.f32 %v338, %v852
        %v854 = vand.u32 %v853, 4294901760
        %855 = vmatpush.msra.mxu0 %v854
        %v856 = vand.u32 %v336, 4294901760
        %v857 = vsub.f32 %v336, %v856
        %v858 = vand.u32 %v857, 4294901760
        %859 = vmatpush.msra.mxu0 %v858
        %v860 = vand.u32 %v334, 4294901760
        %v861 = vsub.f32 %v334, %v860
        %v862 = vand.u32 %v861, 4294901760
        %863 = vmatpush.msra.mxu0 %v862
        %v864 = vand.u32 %v332, 4294901760
        %v865 = vsub.f32 %v332, %v864
        %v866 = vand.u32 %v865, 4294901760
        %867 = vmatpush.msra.mxu0 %v866
        %v868 = vand.u32 %v330, 4294901760
        %v869 = vsub.f32 %v330, %v868
        %v870 = vand.u32 %v869, 4294901760
        %871 = vmatpush.msra.mxu0 %v870
        %v872 = vand.u32 %v328, 4294901760
        %v873 = vsub.f32 %v328, %v872
        %v874 = vand.u32 %v873, 4294901760
        %875 = vmatpush.msra.mxu0 %v874
        %v876 = vand.u32 %v326, 4294901760
        %v877 = vsub.f32 %v326, %v876
        %v878 = vand.u32 %v877, 4294901760
        %879 = vmatpush.msra.mxu0 %v878
        %v880 = vand.u32 %v324, 4294901760
        %v881 = vsub.f32 %v324, %v880
        %v882 = vand.u32 %v881, 4294901760
        %883 = vmatpush.msra.mxu0 %v882
        %v884 = vand.u32 %v322, 4294901760
        %v885 = vsub.f32 %v322, %v884
        %v886 = vand.u32 %v885, 4294901760
        %887 = vmatpush.msra.mxu0 %v886
        %v888 = vand.u32 %v320, 4294901760
        %v889 = vsub.f32 %v320, %v888
        %v890 = vand.u32 %v889, 4294901760
        %891 = vmatpush.msra.mxu0 %v890
        %v892 = vand.u32 %v318, 4294901760
        %v893 = vsub.f32 %v318, %v892
        %v894 = vand.u32 %v893, 4294901760
        %895 = vmatpush.msra.mxu0 %v894
        %v896 = vand.u32 %v316, 4294901760
        %v897 = vsub.f32 %v316, %v896
        %v898 = vand.u32 %v897, 4294901760
        %899 = vmatpush.msra.mxu0 %v898
        %v900 = vand.u32 %v314, 4294901760
        %v901 = vsub.f32 %v314, %v900
        %v902 = vand.u32 %v901, 4294901760
        %903 = vmatpush.msra.mxu0 %v902
        %v904 = vand.u32 %v312, 4294901760
        %v905 = vsub.f32 %v312, %v904
        %v906 = vand.u32 %v905, 4294901760
        %907 = vmatpush.msra.mxu0 %v906
        %v908 = vand.u32 %v310, 4294901760
        %v909 = vsub.f32 %v310, %v908
        %v910 = vand.u32 %v909, 4294901760
        %911 = vmatpush.msra.mxu0 %v910
        %v912 = vand.u32 %v308, 4294901760
        %v913 = vsub.f32 %v308, %v912
        %v914 = vand.u32 %v913, 4294901760
        %915 = vmatpush.msra.mxu0 %v914
        %v916 = vand.u32 %v607, 4294901760
        %917 = vmatmul.f32.gmra.mxu0 %v916
        %v918 = vpop.f32.mrf.mxu0
        %v919 = vadd.f32 %v850, %v918
        %920 = vdwg.mxu0
        %v921 = vand.u32 %v338, 4294901760
        %922 = vmatpush.msra.mxu0 %v921
        %v923 = vand.u32 %v336, 4294901760
        %924 = vmatpush.msra.mxu0 %v923
        %v925 = vand.u32 %v334, 4294901760
        %926 = vmatpush.msra.mxu0 %v925
        %v927 = vand.u32 %v332, 4294901760
        %928 = vmatpush.msra.mxu0 %v927
        %v929 = vand.u32 %v330, 4294901760
        %930 = vmatpush.msra.mxu0 %v929
        %v931 = vand.u32 %v328, 4294901760
        %932 = vmatpush.msra.mxu0 %v931
        %v933 = vand.u32 %v326, 4294901760
        %934 = vmatpush.msra.mxu0 %v933
        %v935 = vand.u32 %v324, 4294901760
        %936 = vmatpush.msra.mxu0 %v935
        %v937 = vand.u32 %v322, 4294901760
        %938 = vmatpush.msra.mxu0 %v937
        %v939 = vand.u32 %v320, 4294901760
        %940 = vmatpush.msra.mxu0 %v939
        %v941 = vand.u32 %v318, 4294901760
        %942 = vmatpush.msra.mxu0 %v941
        %v943 = vand.u32 %v316, 4294901760
        %944 = vmatpush.msra.mxu0 %v943
        %v945 = vand.u32 %v314, 4294901760
        %946 = vmatpush.msra.mxu0 %v945
        %v947 = vand.u32 %v312, 4294901760
        %948 = vmatpush.msra.mxu0 %v947
        %v949 = vand.u32 %v310, 4294901760
        %950 = vmatpush.msra.mxu0 %v949
        %v951 = vand.u32 %v308, 4294901760
        %952 = vmatpush.msra.mxu0 %v951
        %v953 = vand.u32 %v607, 4294901760
        %954 = vmatmul.f32.gmra.mxu0 %v953
        %v955 = vpop.f32.mrf.mxu0
        %v956 = vadd.f32 %v919, %v955
        %957 = vdwg.mxu0
        %v958 = vand.u32 %v370, 4294901760
        %959 = vmatpush.msra.mxu0 %v958
        %v960 = vand.u32 %v368, 4294901760
        %961 = vmatpush.msra.mxu0 %v960
        %v962 = vand.u32 %v366, 4294901760
        %963 = vmatpush.msra.mxu0 %v962
        %v964 = vand.u32 %v364, 4294901760
        %965 = vmatpush.msra.mxu0 %v964
        %v966 = vand.u32 %v362, 4294901760
        %967 = vmatpush.msra.mxu0 %v966
        %v968 = vand.u32 %v360, 4294901760
        %969 = vmatpush.msra.mxu0 %v968
        %v970 = vand.u32 %v358, 4294901760
        %971 = vmatpush.msra.mxu0 %v970
        %v972 = vand.u32 %v356, 4294901760
        %973 = vmatpush.msra.mxu0 %v972
        %v974 = vand.u32 %v354, 4294901760
        %975 = vmatpush.msra.mxu0 %v974
        %v976 = vand.u32 %v352, 4294901760
        %977 = vmatpush.msra.mxu0 %v976
        %v978 = vand.u32 %v350, 4294901760
        %979 = vmatpush.msra.mxu0 %v978
        %v980 = vand.u32 %v348, 4294901760
        %981 = vmatpush.msra.mxu0 %v980
        %v982 = vand.u32 %v346, 4294901760
        %983 = vmatpush.msra.mxu0 %v982
        %v984 = vand.u32 %v344, 4294901760
        %985 = vmatpush.msra.mxu0 %v984
        %v986 = vand.u32 %v342, 4294901760
        %987 = vmatpush.msra.mxu0 %v986
        %v988 = vand.u32 %v340, 4294901760
        %989 = vmatpush.msra.mxu0 %v988
        %v990 = vand.u32 %v616, 4294901760
        %v991 = vsub.f32 %v616, %v990
        %v992 = vand.u32 %v991, 4294901760
        %v993 = vsub.f32 %v991, %v992
        %v994 = vand.u32 %v993, 4294901760
        %995 = vmatmul.f32.gmra.mxu0 %v994
        %v996 = vpop.f32.mrf.mxu0
        %v997 = vadd.f32 %v956, %v996
        %998 = vdwg.mxu0
        %v999 = vand.u32 %v370, 4294901760
        %v1000 = vsub.f32 %v370, %v999
        %v1001 = vand.u32 %v1000, 4294901760
        %v1002 = vsub.f32 %v1000, %v1001
        %v1003 = vand.u32 %v1002, 4294901760
        %1004 = vmatpush.msra.mxu0 %v1003
        %v1005 = vand.u32 %v368, 4294901760
        %v1006 = vsub.f32 %v368, %v1005
        %v1007 = vand.u32 %v1006, 4294901760
        %v1008 = vsub.f32 %v1006, %v1007
        %v1009 = vand.u32 %v1008, 4294901760
        %1010 = vmatpush.msra.mxu0 %v1009
        %v1011 = vand.u32 %v366, 4294901760
        %v1012 = vsub.f32 %v366, %v1011
        %v1013 = vand.u32 %v1012, 4294901760
        %v1014 = vsub.f32 %v1012, %v1013
        %v1015 = vand.u32 %v1014, 4294901760
        %1016 = vmatpush.msra.mxu0 %v1015
        %v1017 = vand.u32 %v364, 4294901760
        %v1018 = vsub.f32 %v364, %v1017
        %v1019 = vand.u32 %v1018, 4294901760
        %v1020 = vsub.f32 %v1018, %v1019
        %v1021 = vand.u32 %v1020, 4294901760
        %1022 = vmatpush.msra.mxu0 %v1021
        %v1023 = vand.u32 %v362, 4294901760
        %v1024 = vsub.f32 %v362, %v1023
        %v1025 = vand.u32 %v1024, 4294901760
        %v1026 = vsub.f32 %v1024, %v1025
        %v1027 = vand.u32 %v1026, 4294901760
        %1028 = vmatpush.msra.mxu0 %v1027
        %v1029 = vand.u32 %v360, 4294901760
        %v1030 = vsub.f32 %v360, %v1029
        %v1031 = vand.u32 %v1030, 4294901760
        %v1032 = vsub.f32 %v1030, %v1031
        %v1033 = vand.u32 %v1032, 4294901760
        %1034 = vmatpush.msra.mxu0 %v1033
        %v1035 = vand.u32 %v358, 4294901760
        %v1036 = vsub.f32 %v358, %v1035
        %v1037 = vand.u32 %v1036, 4294901760
        %v1038 = vsub.f32 %v1036, %v1037
        %v1039 = vand.u32 %v1038, 4294901760
        %1040 = vmatpush.msra.mxu0 %v1039
        %v1041 = vand.u32 %v356, 4294901760
        %v1042 = vsub.f32 %v356, %v1041
        %v1043 = vand.u32 %v1042, 4294901760
        %v1044 = vsub.f32 %v1042, %v1043
        %v1045 = vand.u32 %v1044, 4294901760
        %1046 = vmatpush.msra.mxu0 %v1045
        %v1047 = vand.u32 %v354, 4294901760
        %v1048 = vsub.f32 %v354, %v1047
        %v1049 = vand.u32 %v1048, 4294901760
        %v1050 = vsub.f32 %v1048, %v1049
        %v1051 = vand.u32 %v1050, 4294901760
        %1052 = vmatpush.msra.mxu0 %v1051
        %v1053 = vand.u32 %v352, 4294901760
        %v1054 = vsub.f32 %v352, %v1053
        %v1055 = vand.u32 %v1054, 4294901760
        %v1056 = vsub.f32 %v1054, %v1055
        %v1057 = vand.u32 %v1056, 4294901760
        %1058 = vmatpush.msra.mxu0 %v1057
        %v1059 = vand.u32 %v350, 4294901760
        %v1060 = vsub.f32 %v350, %v1059
        %v1061 = vand.u32 %v1060, 4294901760
        %v1062 = vsub.f32 %v1060, %v1061
        %v1063 = vand.u32 %v1062, 4294901760
        %1064 = vmatpush.msra.mxu0 %v1063
        %v1065 = vand.u32 %v348, 4294901760
        %v1066 = vsub.f32 %v348, %v1065
        %v1067 = vand.u32 %v1066, 4294901760
        %v1068 = vsub.f32 %v1066, %v1067
        %v1069 = vand.u32 %v1068, 4294901760
        %1070 = vmatpush.msra.mxu0 %v1069
        %v1071 = vand.u32 %v346, 4294901760
        %v1072 = vsub.f32 %v346, %v1071
        %v1073 = vand.u32 %v1072, 4294901760
        %v1074 = vsub.f32 %v1072, %v1073
        %v1075 = vand.u32 %v1074, 4294901760
        %1076 = vmatpush.msra.mxu0 %v1075
        %v1077 = vand.u32 %v344, 4294901760
        %v1078 = vsub.f32 %v344, %v1077
        %v1079 = vand.u32 %v1078, 4294901760
        %v1080 = vsub.f32 %v1078, %v1079
        %v1081 = vand.u32 %v1080, 4294901760
        %1082 = vmatpush.msra.mxu0 %v1081
        %v1083 = vand.u32 %v342, 4294901760
        %v1084 = vsub.f32 %v342, %v1083
        %v1085 = vand.u32 %v1084, 4294901760
        %v1086 = vsub.f32 %v1084, %v1085
        %v1087 = vand.u32 %v1086, 4294901760
        %1088 = vmatpush.msra.mxu0 %v1087
        %v1089 = vand.u32 %v340, 4294901760
        %v1090 = vsub.f32 %v340, %v1089
        %v1091 = vand.u32 %v1090, 4294901760
        %v1092 = vsub.f32 %v1090, %v1091
        %v1093 = vand.u32 %v1092, 4294901760
        %1094 = vmatpush.msra.mxu0 %v1093
        %v1095 = vand.u32 %v616, 4294901760
        %1096 = vmatmul.f32.gmra.mxu0 %v1095
        %v1097 = vpop.f32.mrf.mxu0
        %v1098 = vadd.f32 %v997, %v1097
        %1099 = vdwg.mxu0
        %v1100 = vand.u32 %v370, 4294901760
        %v1101 = vsub.f32 %v370, %v1100
        %1102 = vmatpush.msra.mxu0 %v1101
        %v1103 = vand.u32 %v368, 4294901760
        %v1104 = vsub.f32 %v368, %v1103
        %1105 = vmatpush.msra.mxu0 %v1104
        %v1106 = vand.u32 %v366, 4294901760
        %v1107 = vsub.f32 %v366, %v1106
        %1108 = vmatpush.msra.mxu0 %v1107
        %v1109 = vand.u32 %v364, 4294901760
        %v1110 = vsub.f32 %v364, %v1109
        %1111 = vmatpush.msra.mxu0 %v1110
        %v1112 = vand.u32 %v362, 4294901760
        %v1113 = vsub.f32 %v362, %v1112
        %1114 = vmatpush.msra.mxu0 %v1113
        %v1115 = vand.u32 %v360, 4294901760
        %v1116 = vsub.f32 %v360, %v1115
        %1117 = vmatpush.msra.mxu0 %v1116
        %v1118 = vand.u32 %v358, 4294901760
        %v1119 = vsub.f32 %v358, %v1118
        %1120 = vmatpush.msra.mxu0 %v1119
        %v1121 = vand.u32 %v356, 4294901760
        %v1122 = vsub.f32 %v356, %v1121
        %1123 = vmatpush.msra.mxu0 %v1122
        %v1124 = vand.u32 %v354, 4294901760
        %v1125 = vsub.f32 %v354, %v1124
        %1126 = vmatpush.msra.mxu0 %v1125
        %v1127 = vand.u32 %v352, 4294901760
        %v1128 = vsub.f32 %v352, %v1127
        %1129 = vmatpush.msra.mxu0 %v1128
        %v1130 = vand.u32 %v350, 4294901760
        %v1131 = vsub.f32 %v350, %v1130
        %1132 = vmatpush.msra.mxu0 %v1131
        %v1133 = vand.u32 %v348, 4294901760
        %v1134 = vsub.f32 %v348, %v1133
        %1135 = vmatpush.msra.mxu0 %v1134
        %v1136 = vand.u32 %v346, 4294901760
        %v1137 = vsub.f32 %v346, %v1136
        %1138 = vmatpush.msra.mxu0 %v1137
        %v1139 = vand.u32 %v344, 4294901760
        %v1140 = vsub.f32 %v344, %v1139
        %1141 = vmatpush.msra.mxu0 %v1140
        %v1142 = vand.u32 %v342, 4294901760
        %v1143 = vsub.f32 %v342, %v1142
        %1144 = vmatpush.msra.mxu0 %v1143
        %v1145 = vand.u32 %v340, 4294901760
        %v1146 = vsub.f32 %v340, %v1145
        %1147 = vmatpush.msra.mxu0 %v1146
        %v1148 = vand.u32 %v616, 4294901760
        %v1149 = vsub.f32 %v616, %v1148
        %1150 = vmatmul.f32.gmra.mxu0 %v1149
        %v1151 = vpop.f32.mrf.mxu0
        %v1152 = vadd.f32 %v1098, %v1151
        %1153 = vdwg.mxu0
        %v1154 = vand.u32 %v370, 4294901760
        %1155 = vmatpush.msra.mxu0 %v1154
        %v1156 = vand.u32 %v368, 4294901760
        %1157 = vmatpush.msra.mxu0 %v1156
        %v1158 = vand.u32 %v366, 4294901760
        %1159 = vmatpush.msra.mxu0 %v1158
        %v1160 = vand.u32 %v364, 4294901760
        %1161 = vmatpush.msra.mxu0 %v1160
        %v1162 = vand.u32 %v362, 4294901760
        %1163 = vmatpush.msra.mxu0 %v1162
        %v1164 = vand.u32 %v360, 4294901760
        %1165 = vmatpush.msra.mxu0 %v1164
        %v1166 = vand.u32 %v358, 4294901760
        %1167 = vmatpush.msra.mxu0 %v1166
        %v1168 = vand.u32 %v356, 4294901760
        %1169 = vmatpush.msra.mxu0 %v1168
        %v1170 = vand.u32 %v354, 4294901760
        %1171 = vmatpush.msra.mxu0 %v1170
        %v1172 = vand.u32 %v352, 4294901760
        %1173 = vmatpush.msra.mxu0 %v1172
        %v1174 = vand.u32 %v350, 4294901760
        %1175 = vmatpush.msra.mxu0 %v1174
        %v1176 = vand.u32 %v348, 4294901760
        %1177 = vmatpush.msra.mxu0 %v1176
        %v1178 = vand.u32 %v346, 4294901760
        %1179 = vmatpush.msra.mxu0 %v1178
        %v1180 = vand.u32 %v344, 4294901760
        %1181 = vmatpush.msra.mxu0 %v1180
        %v1182 = vand.u32 %v342, 4294901760
        %1183 = vmatpush.msra.mxu0 %v1182
        %v1184 = vand.u32 %v340, 4294901760
        %1185 = vmatpush.msra.mxu0 %v1184
        %v1186 = vand.u32 %v616, 4294901760
        %v1187 = vsub.f32 %v616, %v1186
        %v1188 = vand.u32 %v1187, 4294901760
        %1189 = vmatmul.f32.gmra.mxu0 %v1188
        %v1190 = vpop.f32.mrf.mxu0
        %v1191 = vadd.f32 %v1152, %v1190
        %1192 = vdwg.mxu0
        %v1193 = vand.u32 %v370, 4294901760
        %v1194 = vsub.f32 %v370, %v1193
        %v1195 = vand.u32 %v1194, 4294901760
        %1196 = vmatpush.msra.mxu0 %v1195
        %v1197 = vand.u32 %v368, 4294901760
        %v1198 = vsub.f32 %v368, %v1197
        %v1199 = vand.u32 %v1198, 4294901760
        %1200 = vmatpush.msra.mxu0 %v1199
        %v1201 = vand.u32 %v366, 4294901760
        %v1202 = vsub.f32 %v366, %v1201
        %v1203 = vand.u32 %v1202, 4294901760
        %1204 = vmatpush.msra.mxu0 %v1203
        %v1205 = vand.u32 %v364, 4294901760
        %v1206 = vsub.f32 %v364, %v1205
        %v1207 = vand.u32 %v1206, 4294901760
        %1208 = vmatpush.msra.mxu0 %v1207
        %v1209 = vand.u32 %v362, 4294901760
        %v1210 = vsub.f32 %v362, %v1209
        %v1211 = vand.u32 %v1210, 4294901760
        %1212 = vmatpush.msra.mxu0 %v1211
        %v1213 = vand.u32 %v360, 4294901760
        %v1214 = vsub.f32 %v360, %v1213
        %v1215 = vand.u32 %v1214, 4294901760
        %1216 = vmatpush.msra.mxu0 %v1215
        %v1217 = vand.u32 %v358, 4294901760
        %v1218 = vsub.f32 %v358, %v1217
        %v1219 = vand.u32 %v1218, 4294901760
        %1220 = vmatpush.msra.mxu0 %v1219
        %v1221 = vand.u32 %v356, 4294901760
        %v1222 = vsub.f32 %v356, %v1221
        %v1223 = vand.u32 %v1222, 4294901760
        %1224 = vmatpush.msra.mxu0 %v1223
        %v1225 = vand.u32 %v354, 4294901760
        %v1226 = vsub.f32 %v354, %v1225
        %v1227 = vand.u32 %v1226, 4294901760
        %1228 = vmatpush.msra.mxu0 %v1227
        %v1229 = vand.u32 %v352, 4294901760
        %v1230 = vsub.f32 %v352, %v1229
        %v1231 = vand.u32 %v1230, 4294901760
        %1232 = vmatpush.msra.mxu0 %v1231
        %v1233 = vand.u32 %v350, 4294901760
        %v1234 = vsub.f32 %v350, %v1233
        %v1235 = vand.u32 %v1234, 4294901760
        %1236 = vmatpush.msra.mxu0 %v1235
        %v1237 = vand.u32 %v348, 4294901760
        %v1238 = vsub.f32 %v348, %v1237
        %v1239 = vand.u32 %v1238, 4294901760
        %1240 = vmatpush.msra.mxu0 %v1239
        %v1241 = vand.u32 %v346, 4294901760
        %v1242 = vsub.f32 %v346, %v1241
        %v1243 = vand.u32 %v1242, 4294901760
        %1244 = vmatpush.msra.mxu0 %v1243
        %v1245 = vand.u32 %v344, 4294901760
        %v1246 = vsub.f32 %v344, %v1245
        %v1247 = vand.u32 %v1246, 4294901760
        %1248 = vmatpush.msra.mxu0 %v1247
        %v1249 = vand.u32 %v342, 4294901760
        %v1250 = vsub.f32 %v342, %v1249
        %v1251 = vand.u32 %v1250, 4294901760
        %1252 = vmatpush.msra.mxu0 %v1251
        %v1253 = vand.u32 %v340, 4294901760
        %v1254 = vsub.f32 %v340, %v1253
        %v1255 = vand.u32 %v1254, 4294901760
        %1256 = vmatpush.msra.mxu0 %v1255
        %v1257 = vand.u32 %v616, 4294901760
        %1258 = vmatmul.f32.gmra.mxu0 %v1257
        %v1259 = vpop.f32.mrf.mxu0
        %v1260 = vadd.f32 %v1191, %v1259
        %1261 = vdwg.mxu0
        %v1262 = vand.u32 %v370, 4294901760
        %1263 = vmatpush.msra.mxu0 %v1262
        %v1264 = vand.u32 %v368, 4294901760
        %1265 = vmatpush.msra.mxu0 %v1264
        %v1266 = vand.u32 %v366, 4294901760
        %1267 = vmatpush.msra.mxu0 %v1266
        %v1268 = vand.u32 %v364, 4294901760
        %1269 = vmatpush.msra.mxu0 %v1268
        %v1270 = vand.u32 %v362, 4294901760
        %1271 = vmatpush.msra.mxu0 %v1270
        %v1272 = vand.u32 %v360, 4294901760
        %1273 = vmatpush.msra.mxu0 %v1272
        %v1274 = vand.u32 %v358, 4294901760
        %1275 = vmatpush.msra.mxu0 %v1274
        %v1276 = vand.u32 %v356, 4294901760
        %1277 = vmatpush.msra.mxu0 %v1276
        %v1278 = vand.u32 %v354, 4294901760
        %1279 = vmatpush.msra.mxu0 %v1278
        %v1280 = vand.u32 %v352, 4294901760
        %1281 = vmatpush.msra.mxu0 %v1280
        %v1282 = vand.u32 %v350, 4294901760
        %1283 = vmatpush.msra.mxu0 %v1282
        %v1284 = vand.u32 %v348, 4294901760
        %1285 = vmatpush.msra.mxu0 %v1284
        %v1286 = vand.u32 %v346, 4294901760
        %1287 = vmatpush.msra.mxu0 %v1286
        %v1288 = vand.u32 %v344, 4294901760
        %1289 = vmatpush.msra.mxu0 %v1288
        %v1290 = vand.u32 %v342, 4294901760
        %1291 = vmatpush.msra.mxu0 %v1290
        %v1292 = vand.u32 %v340, 4294901760
        %1293 = vmatpush.msra.mxu0 %v1292
        %v1294 = vand.u32 %v616, 4294901760
        %1295 = vmatmul.f32.gmra.mxu0 %v1294
        %v1296 = vpop.f32.mrf.mxu0
        %v1297 = vadd.f32 %v1260, %v1296
        %1298 = vdwg.mxu0
        %v1299 = vand.u32 %v339, 4294901760
        %1300 = vmatpush.msra.mxu0 %v1299
        %v1301 = vand.u32 %v337, 4294901760
        %1302 = vmatpush.msra.mxu0 %v1301
        %v1303 = vand.u32 %v335, 4294901760
        %1304 = vmatpush.msra.mxu0 %v1303
        %v1305 = vand.u32 %v333, 4294901760
        %1306 = vmatpush.msra.mxu0 %v1305
        %v1307 = vand.u32 %v331, 4294901760
        %1308 = vmatpush.msra.mxu0 %v1307
        %v1309 = vand.u32 %v329, 4294901760
        %1310 = vmatpush.msra.mxu0 %v1309
        %v1311 = vand.u32 %v327, 4294901760
        %1312 = vmatpush.msra.mxu0 %v1311
        %v1313 = vand.u32 %v325, 4294901760
        %1314 = vmatpush.msra.mxu0 %v1313
        %v1315 = vand.u32 %v323, 4294901760
        %1316 = vmatpush.msra.mxu0 %v1315
        %v1317 = vand.u32 %v321, 4294901760
        %1318 = vmatpush.msra.mxu0 %v1317
        %v1319 = vand.u32 %v319, 4294901760
        %1320 = vmatpush.msra.mxu0 %v1319
        %v1321 = vand.u32 %v317, 4294901760
        %1322 = vmatpush.msra.mxu0 %v1321
        %v1323 = vand.u32 %v315, 4294901760
        %1324 = vmatpush.msra.mxu0 %v1323
        %v1325 = vand.u32 %v313, 4294901760
        %1326 = vmatpush.msra.mxu0 %v1325
        %v1327 = vand.u32 %v311, 4294901760
        %1328 = vmatpush.msra.mxu0 %v1327
        %v1329 = vand.u32 %v309, 4294901760
        %1330 = vmatpush.msra.mxu0 %v1329
        %v1331 = vand.u32 %v607, 4294901760
        %v1332 = vsub.f32 %v607, %v1331
        %v1333 = vand.u32 %v1332, 4294901760
        %v1334 = vsub.f32 %v1332, %v1333
        %v1335 = vand.u32 %v1334, 4294901760
        %1336 = vmatmul.f32.gmra.mxu0 %v1335
        %v1337 = vpop.f32.mrf.mxu0
        %v1338 = vadd.f32 0.0, %v1337
        %1339 = vdwg.mxu0
        %v1340 = vand.u32 %v339, 4294901760
        %v1341 = vsub.f32 %v339, %v1340
        %v1342 = vand.u32 %v1341, 4294901760
        %v1343 = vsub.f32 %v1341, %v1342
        %v1344 = vand.u32 %v1343, 4294901760
        %1345 = vmatpush.msra.mxu0 %v1344
        %v1346 = vand.u32 %v337, 4294901760
        %v1347 = vsub.f32 %v337, %v1346
        %v1348 = vand.u32 %v1347, 4294901760
        %v1349 = vsub.f32 %v1347, %v1348
        %v1350 = vand.u32 %v1349, 4294901760
        %1351 = vmatpush.msra.mxu0 %v1350
        %v1352 = vand.u32 %v335, 4294901760
        %v1353 = vsub.f32 %v335, %v1352
        %v1354 = vand.u32 %v1353, 4294901760
        %v1355 = vsub.f32 %v1353, %v1354
        %v1356 = vand.u32 %v1355, 4294901760
        %1357 = vmatpush.msra.mxu0 %v1356
        %v1358 = vand.u32 %v333, 4294901760
        %v1359 = vsub.f32 %v333, %v1358
        %v1360 = vand.u32 %v1359, 4294901760
        %v1361 = vsub.f32 %v1359, %v1360
        %v1362 = vand.u32 %v1361, 4294901760
        %1363 = vmatpush.msra.mxu0 %v1362
        %v1364 = vand.u32 %v331, 4294901760
        %v1365 = vsub.f32 %v331, %v1364
        %v1366 = vand.u32 %v1365, 4294901760
        %v1367 = vsub.f32 %v1365, %v1366
        %v1368 = vand.u32 %v1367, 4294901760
        %1369 = vmatpush.msra.mxu0 %v1368
        %v1370 = vand.u32 %v329, 4294901760
        %v1371 = vsub.f32 %v329, %v1370
        %v1372 = vand.u32 %v1371, 4294901760
        %v1373 = vsub.f32 %v1371, %v1372
        %v1374 = vand.u32 %v1373, 4294901760
        %1375 = vmatpush.msra.mxu0 %v1374
        %v1376 = vand.u32 %v327, 4294901760
        %v1377 = vsub.f32 %v327, %v1376
        %v1378 = vand.u32 %v1377, 4294901760
        %v1379 = vsub.f32 %v1377, %v1378
        %v1380 = vand.u32 %v1379, 4294901760
        %1381 = vmatpush.msra.mxu0 %v1380
        %v1382 = vand.u32 %v325, 4294901760
        %v1383 = vsub.f32 %v325, %v1382
        %v1384 = vand.u32 %v1383, 4294901760
        %v1385 = vsub.f32 %v1383, %v1384
        %v1386 = vand.u32 %v1385, 4294901760
        %1387 = vmatpush.msra.mxu0 %v1386
        %v1388 = vand.u32 %v323, 4294901760
        %v1389 = vsub.f32 %v323, %v1388
        %v1390 = vand.u32 %v1389, 4294901760
        %v1391 = vsub.f32 %v1389, %v1390
        %v1392 = vand.u32 %v1391, 4294901760
        %1393 = vmatpush.msra.mxu0 %v1392
        %v1394 = vand.u32 %v321, 4294901760
        %v1395 = vsub.f32 %v321, %v1394
        %v1396 = vand.u32 %v1395, 4294901760
        %v1397 = vsub.f32 %v1395, %v1396
        %v1398 = vand.u32 %v1397, 4294901760
        %1399 = vmatpush.msra.mxu0 %v1398
        %v1400 = vand.u32 %v319, 4294901760
        %v1401 = vsub.f32 %v319, %v1400
        %v1402 = vand.u32 %v1401, 4294901760
        %v1403 = vsub.f32 %v1401, %v1402
        %v1404 = vand.u32 %v1403, 4294901760
        %1405 = vmatpush.msra.mxu0 %v1404
        %v1406 = vand.u32 %v317, 4294901760
        %v1407 = vsub.f32 %v317, %v1406
        %v1408 = vand.u32 %v1407, 4294901760
        %v1409 = vsub.f32 %v1407, %v1408
        %v1410 = vand.u32 %v1409, 4294901760
        %1411 = vmatpush.msra.mxu0 %v1410
        %v1412 = vand.u32 %v315, 4294901760
        %v1413 = vsub.f32 %v315, %v1412
        %v1414 = vand.u32 %v1413, 4294901760
        %v1415 = vsub.f32 %v1413, %v1414
        %v1416 = vand.u32 %v1415, 4294901760
        %1417 = vmatpush.msra.mxu0 %v1416
        %v1418 = vand.u32 %v313, 4294901760
        %v1419 = vsub.f32 %v313, %v1418
        %v1420 = vand.u32 %v1419, 4294901760
        %v1421 = vsub.f32 %v1419, %v1420
        %v1422 = vand.u32 %v1421, 4294901760
        %1423 = vmatpush.msra.mxu0 %v1422
        %v1424 = vand.u32 %v311, 4294901760
        %v1425 = vsub.f32 %v311, %v1424
        %v1426 = vand.u32 %v1425, 4294901760
        %v1427 = vsub.f32 %v1425, %v1426
        %v1428 = vand.u32 %v1427, 4294901760
        %1429 = vmatpush.msra.mxu0 %v1428
        %v1430 = vand.u32 %v309, 4294901760
        %v1431 = vsub.f32 %v309, %v1430
        %v1432 = vand.u32 %v1431, 4294901760
        %v1433 = vsub.f32 %v1431, %v1432
        %v1434 = vand.u32 %v1433, 4294901760
        %1435 = vmatpush.msra.mxu0 %v1434
        %v1436 = vand.u32 %v607, 4294901760
        %1437 = vmatmul.f32.gmra.mxu0 %v1436
        %v1438 = vpop.f32.mrf.mxu0
        %v1439 = vadd.f32 %v1338, %v1438
        %1440 = vdwg.mxu0
        %v1441 = vand.u32 %v339, 4294901760
        %v1442 = vsub.f32 %v339, %v1441
        %1443 = vmatpush.msra.mxu0 %v1442
        %v1444 = vand.u32 %v337, 4294901760
        %v1445 = vsub.f32 %v337, %v1444
        %1446 = vmatpush.msra.mxu0 %v1445
        %v1447 = vand.u32 %v335, 4294901760
        %v1448 = vsub.f32 %v335, %v1447
        %1449 = vmatpush.msra.mxu0 %v1448
        %v1450 = vand.u32 %v333, 4294901760
        %v1451 = vsub.f32 %v333, %v1450
        %1452 = vmatpush.msra.mxu0 %v1451
        %v1453 = vand.u32 %v331, 4294901760
        %v1454 = vsub.f32 %v331, %v1453
        %1455 = vmatpush.msra.mxu0 %v1454
        %v1456 = vand.u32 %v329, 4294901760
        %v1457 = vsub.f32 %v329, %v1456
        %1458 = vmatpush.msra.mxu0 %v1457
        %v1459 = vand.u32 %v327, 4294901760
        %v1460 = vsub.f32 %v327, %v1459
        %1461 = vmatpush.msra.mxu0 %v1460
        %v1462 = vand.u32 %v325, 4294901760
        %v1463 = vsub.f32 %v325, %v1462
        %1464 = vmatpush.msra.mxu0 %v1463
        %v1465 = vand.u32 %v323, 4294901760
        %v1466 = vsub.f32 %v323, %v1465
        %1467 = vmatpush.msra.mxu0 %v1466
        %v1468 = vand.u32 %v321, 4294901760
        %v1469 = vsub.f32 %v321, %v1468
        %1470 = vmatpush.msra.mxu0 %v1469
        %v1471 = vand.u32 %v319, 4294901760
        %v1472 = vsub.f32 %v319, %v1471
        %1473 = vmatpush.msra.mxu0 %v1472
        %v1474 = vand.u32 %v317, 4294901760
        %v1475 = vsub.f32 %v317, %v1474
        %1476 = vmatpush.msra.mxu0 %v1475
        %v1477 = vand.u32 %v315, 4294901760
        %v1478 = vsub.f32 %v315, %v1477
        %1479 = vmatpush.msra.mxu0 %v1478
        %v1480 = vand.u32 %v313, 4294901760
        %v1481 = vsub.f32 %v313, %v1480
        %1482 = vmatpush.msra.mxu0 %v1481
        %v1483 = vand.u32 %v311, 4294901760
        %v1484 = vsub.f32 %v311, %v1483
        %1485 = vmatpush.msra.mxu0 %v1484
        %v1486 = vand.u32 %v309, 4294901760
        %v1487 = vsub.f32 %v309, %v1486
        %1488 = vmatpush.msra.mxu0 %v1487
        %v1489 = vand.u32 %v607, 4294901760
        %v1490 = vsub.f32 %v607, %v1489
        %1491 = vmatmul.f32.gmra.mxu0 %v1490
        %v1492 = vpop.f32.mrf.mxu0
        %v1493 = vadd.f32 %v1439, %v1492
        %1494 = vdwg.mxu0
        %v1495 = vand.u32 %v339, 4294901760
        %1496 = vmatpush.msra.mxu0 %v1495
        %v1497 = vand.u32 %v337, 4294901760
        %1498 = vmatpush.msra.mxu0 %v1497
        %v1499 = vand.u32 %v335, 4294901760
        %1500 = vmatpush.msra.mxu0 %v1499
        %v1501 = vand.u32 %v333, 4294901760
        %1502 = vmatpush.msra.mxu0 %v1501
        %v1503 = vand.u32 %v331, 4294901760
        %1504 = vmatpush.msra.mxu0 %v1503
        %v1505 = vand.u32 %v329, 4294901760
        %1506 = vmatpush.msra.mxu0 %v1505
        %v1507 = vand.u32 %v327, 4294901760
        %1508 = vmatpush.msra.mxu0 %v1507
        %v1509 = vand.u32 %v325, 4294901760
        %1510 = vmatpush.msra.mxu0 %v1509
        %v1511 = vand.u32 %v323, 4294901760
        %1512 = vmatpush.msra.mxu0 %v1511
        %v1513 = vand.u32 %v321, 4294901760
        %1514 = vmatpush.msra.mxu0 %v1513
        %v1515 = vand.u32 %v319, 4294901760
        %1516 = vmatpush.msra.mxu0 %v1515
        %v1517 = vand.u32 %v317, 4294901760
        %1518 = vmatpush.msra.mxu0 %v1517
        %v1519 = vand.u32 %v315, 4294901760
        %1520 = vmatpush.msra.mxu0 %v1519
        %v1521 = vand.u32 %v313, 4294901760
        %1522 = vmatpush.msra.mxu0 %v1521
        %v1523 = vand.u32 %v311, 4294901760
        %1524 = vmatpush.msra.mxu0 %v1523
        %v1525 = vand.u32 %v309, 4294901760
        %1526 = vmatpush.msra.mxu0 %v1525
        %v1527 = vand.u32 %v607, 4294901760
        %v1528 = vsub.f32 %v607, %v1527
        %v1529 = vand.u32 %v1528, 4294901760
        %1530 = vmatmul.f32.gmra.mxu0 %v1529
        %v1531 = vpop.f32.mrf.mxu0
        %v1532 = vadd.f32 %v1493, %v1531
        %1533 = vdwg.mxu0
        %v1534 = vand.u32 %v339, 4294901760
        %v1535 = vsub.f32 %v339, %v1534
        %v1536 = vand.u32 %v1535, 4294901760
        %1537 = vmatpush.msra.mxu0 %v1536
        %v1538 = vand.u32 %v337, 4294901760
        %v1539 = vsub.f32 %v337, %v1538
        %v1540 = vand.u32 %v1539, 4294901760
        %1541 = vmatpush.msra.mxu0 %v1540
        %v1542 = vand.u32 %v335, 4294901760
        %v1543 = vsub.f32 %v335, %v1542
        %v1544 = vand.u32 %v1543, 4294901760
        %1545 = vmatpush.msra.mxu0 %v1544
        %v1546 = vand.u32 %v333, 4294901760
        %v1547 = vsub.f32 %v333, %v1546
        %v1548 = vand.u32 %v1547, 4294901760
        %1549 = vmatpush.msra.mxu0 %v1548
        %v1550 = vand.u32 %v331, 4294901760
        %v1551 = vsub.f32 %v331, %v1550
        %v1552 = vand.u32 %v1551, 4294901760
        %1553 = vmatpush.msra.mxu0 %v1552
        %v1554 = vand.u32 %v329, 4294901760
        %v1555 = vsub.f32 %v329, %v1554
        %v1556 = vand.u32 %v1555, 4294901760
        %1557 = vmatpush.msra.mxu0 %v1556
        %v1558 = vand.u32 %v327, 4294901760
        %v1559 = vsub.f32 %v327, %v1558
        %v1560 = vand.u32 %v1559, 4294901760
        %1561 = vmatpush.msra.mxu0 %v1560
        %v1562 = vand.u32 %v325, 4294901760
        %v1563 = vsub.f32 %v325, %v1562
        %v1564 = vand.u32 %v1563, 4294901760
        %1565 = vmatpush.msra.mxu0 %v1564
        %v1566 = vand.u32 %v323, 4294901760
        %v1567 = vsub.f32 %v323, %v1566
        %v1568 = vand.u32 %v1567, 4294901760
        %1569 = vmatpush.msra.mxu0 %v1568
        %v1570 = vand.u32 %v321, 4294901760
        %v1571 = vsub.f32 %v321, %v1570
        %v1572 = vand.u32 %v1571, 4294901760
        %1573 = vmatpush.msra.mxu0 %v1572
        %v1574 = vand.u32 %v319, 4294901760
        %v1575 = vsub.f32 %v319, %v1574
        %v1576 = vand.u32 %v1575, 4294901760
        %1577 = vmatpush.msra.mxu0 %v1576
        %v1578 = vand.u32 %v317, 4294901760
        %v1579 = vsub.f32 %v317, %v1578
        %v1580 = vand.u32 %v1579, 4294901760
        %1581 = vmatpush.msra.mxu0 %v1580
        %v1582 = vand.u32 %v315, 4294901760
        %v1583 = vsub.f32 %v315, %v1582
        %v1584 = vand.u32 %v1583, 4294901760
        %1585 = vmatpush.msra.mxu0 %v1584
        %v1586 = vand.u32 %v313, 4294901760
        %v1587 = vsub.f32 %v313, %v1586
        %v1588 = vand.u32 %v1587, 4294901760
        %1589 = vmatpush.msra.mxu0 %v1588
        %v1590 = vand.u32 %v311, 4294901760
        %v1591 = vsub.f32 %v311, %v1590
        %v1592 = vand.u32 %v1591, 4294901760
        %1593 = vmatpush.msra.mxu0 %v1592
        %v1594 = vand.u32 %v309, 4294901760
        %v1595 = vsub.f32 %v309, %v1594
        %v1596 = vand.u32 %v1595, 4294901760
        %1597 = vmatpush.msra.mxu0 %v1596
        %v1598 = vand.u32 %v607, 4294901760
        %1599 = vmatmul.f32.gmra.mxu0 %v1598
        %v1600 = vpop.f32.mrf.mxu0
        %v1601 = vadd.f32 %v1532, %v1600
        %1602 = vdwg.mxu0
        %v1603 = vand.u32 %v339, 4294901760
        %1604 = vmatpush.msra.mxu0 %v1603
        %v1605 = vand.u32 %v337, 4294901760
        %1606 = vmatpush.msra.mxu0 %v1605
        %v1607 = vand.u32 %v335, 4294901760
        %1608 = vmatpush.msra.mxu0 %v1607
        %v1609 = vand.u32 %v333, 4294901760
        %1610 = vmatpush.msra.mxu0 %v1609
        %v1611 = vand.u32 %v331, 4294901760
        %1612 = vmatpush.msra.mxu0 %v1611
        %v1613 = vand.u32 %v329, 4294901760
        %1614 = vmatpush.msra.mxu0 %v1613
        %v1615 = vand.u32 %v327, 4294901760
        %1616 = vmatpush.msra.mxu0 %v1615
        %v1617 = vand.u32 %v325, 4294901760
        %1618 = vmatpush.msra.mxu0 %v1617
        %v1619 = vand.u32 %v323, 4294901760
        %1620 = vmatpush.msra.mxu0 %v1619
        %v1621 = vand.u32 %v321, 4294901760
        %1622 = vmatpush.msra.mxu0 %v1621
        %v1623 = vand.u32 %v319, 4294901760
        %1624 = vmatpush.msra.mxu0 %v1623
        %v1625 = vand.u32 %v317, 4294901760
        %1626 = vmatpush.msra.mxu0 %v1625
        %v1627 = vand.u32 %v315, 4294901760
        %1628 = vmatpush.msra.mxu0 %v1627
        %v1629 = vand.u32 %v313, 4294901760
        %1630 = vmatpush.msra.mxu0 %v1629
        %v1631 = vand.u32 %v311, 4294901760
        %1632 = vmatpush.msra.mxu0 %v1631
        %v1633 = vand.u32 %v309, 4294901760
        %1634 = vmatpush.msra.mxu0 %v1633
        %v1635 = vand.u32 %v607, 4294901760
        %1636 = vmatmul.f32.gmra.mxu0 %v1635
        %v1637 = vpop.f32.mrf.mxu0
        %v1638 = vadd.f32 %v1601, %v1637
        %1639 = vdwg.mxu0
        %v1640 = vand.u32 %v371, 4294901760
        %1641 = vmatpush.msra.mxu0 %v1640
        %v1642 = vand.u32 %v369, 4294901760
        %1643 = vmatpush.msra.mxu0 %v1642
        %v1644 = vand.u32 %v367, 4294901760
        %1645 = vmatpush.msra.mxu0 %v1644
        %v1646 = vand.u32 %v365, 4294901760
        %1647 = vmatpush.msra.mxu0 %v1646
        %v1648 = vand.u32 %v363, 4294901760
        %1649 = vmatpush.msra.mxu0 %v1648
        %v1650 = vand.u32 %v361, 4294901760
        %1651 = vmatpush.msra.mxu0 %v1650
        %v1652 = vand.u32 %v359, 4294901760
        %1653 = vmatpush.msra.mxu0 %v1652
        %v1654 = vand.u32 %v357, 4294901760
        %1655 = vmatpush.msra.mxu0 %v1654
        %v1656 = vand.u32 %v355, 4294901760
        %1657 = vmatpush.msra.mxu0 %v1656
        %v1658 = vand.u32 %v353, 4294901760
        %1659 = vmatpush.msra.mxu0 %v1658
        %v1660 = vand.u32 %v351, 4294901760
        %1661 = vmatpush.msra.mxu0 %v1660
        %v1662 = vand.u32 %v349, 4294901760
        %1663 = vmatpush.msra.mxu0 %v1662
        %v1664 = vand.u32 %v347, 4294901760
        %1665 = vmatpush.msra.mxu0 %v1664
        %v1666 = vand.u32 %v345, 4294901760
        %1667 = vmatpush.msra.mxu0 %v1666
        %v1668 = vand.u32 %v343, 4294901760
        %1669 = vmatpush.msra.mxu0 %v1668
        %v1670 = vand.u32 %v341, 4294901760
        %1671 = vmatpush.msra.mxu0 %v1670
        %v1672 = vand.u32 %v616, 4294901760
        %v1673 = vsub.f32 %v616, %v1672
        %v1674 = vand.u32 %v1673, 4294901760
        %v1675 = vsub.f32 %v1673, %v1674
        %v1676 = vand.u32 %v1675, 4294901760
        %1677 = vmatmul.f32.gmra.mxu0 %v1676
        %v1678 = vpop.f32.mrf.mxu0
        %v1679 = vadd.f32 %v1638, %v1678
        %1680 = vdwg.mxu0
        %v1681 = vand.u32 %v371, 4294901760
        %v1682 = vsub.f32 %v371, %v1681
        %v1683 = vand.u32 %v1682, 4294901760
        %v1684 = vsub.f32 %v1682, %v1683
        %v1685 = vand.u32 %v1684, 4294901760
        %1686 = vmatpush.msra.mxu0 %v1685
        %v1687 = vand.u32 %v369, 4294901760
        %v1688 = vsub.f32 %v369, %v1687
        %v1689 = vand.u32 %v1688, 4294901760
        %v1690 = vsub.f32 %v1688, %v1689
        %v1691 = vand.u32 %v1690, 4294901760
        %1692 = vmatpush.msra.mxu0 %v1691
        %v1693 = vand.u32 %v367, 4294901760
        %v1694 = vsub.f32 %v367, %v1693
        %v1695 = vand.u32 %v1694, 4294901760
        %v1696 = vsub.f32 %v1694, %v1695
        %v1697 = vand.u32 %v1696, 4294901760
        %1698 = vmatpush.msra.mxu0 %v1697
        %v1699 = vand.u32 %v365, 4294901760
        %v1700 = vsub.f32 %v365, %v1699
        %v1701 = vand.u32 %v1700, 4294901760
        %v1702 = vsub.f32 %v1700, %v1701
        %v1703 = vand.u32 %v1702, 4294901760
        %1704 = vmatpush.msra.mxu0 %v1703
        %v1705 = vand.u32 %v363, 4294901760
        %v1706 = vsub.f32 %v363, %v1705
        %v1707 = vand.u32 %v1706, 4294901760
        %v1708 = vsub.f32 %v1706, %v1707
        %v1709 = vand.u32 %v1708, 4294901760
        %1710 = vmatpush.msra.mxu0 %v1709
        %v1711 = vand.u32 %v361, 4294901760
        %v1712 = vsub.f32 %v361, %v1711
        %v1713 = vand.u32 %v1712, 4294901760
        %v1714 = vsub.f32 %v1712, %v1713
        %v1715 = vand.u32 %v1714, 4294901760
        %1716 = vmatpush.msra.mxu0 %v1715
        %v1717 = vand.u32 %v359, 4294901760
        %v1718 = vsub.f32 %v359, %v1717
        %v1719 = vand.u32 %v1718, 4294901760
        %v1720 = vsub.f32 %v1718, %v1719
        %v1721 = vand.u32 %v1720, 4294901760
        %1722 = vmatpush.msra.mxu0 %v1721
        %v1723 = vand.u32 %v357, 4294901760
        %v1724 = vsub.f32 %v357, %v1723
        %v1725 = vand.u32 %v1724, 4294901760
        %v1726 = vsub.f32 %v1724, %v1725
        %v1727 = vand.u32 %v1726, 4294901760
        %1728 = vmatpush.msra.mxu0 %v1727
        %v1729 = vand.u32 %v355, 4294901760
        %v1730 = vsub.f32 %v355, %v1729
        %v1731 = vand.u32 %v1730, 4294901760
        %v1732 = vsub.f32 %v1730, %v1731
        %v1733 = vand.u32 %v1732, 4294901760
        %1734 = vmatpush.msra.mxu0 %v1733
        %v1735 = vand.u32 %v353, 4294901760
        %v1736 = vsub.f32 %v353, %v1735
        %v1737 = vand.u32 %v1736, 4294901760
        %v1738 = vsub.f32 %v1736, %v1737
        %v1739 = vand.u32 %v1738, 4294901760
        %1740 = vmatpush.msra.mxu0 %v1739
        %v1741 = vand.u32 %v351, 4294901760
        %v1742 = vsub.f32 %v351, %v1741
        %v1743 = vand.u32 %v1742, 4294901760
        %v1744 = vsub.f32 %v1742, %v1743
        %v1745 = vand.u32 %v1744, 4294901760
        %1746 = vmatpush.msra.mxu0 %v1745
        %v1747 = vand.u32 %v349, 4294901760
        %v1748 = vsub.f32 %v349, %v1747
        %v1749 = vand.u32 %v1748, 4294901760
        %v1750 = vsub.f32 %v1748, %v1749
        %v1751 = vand.u32 %v1750, 4294901760
        %1752 = vmatpush.msra.mxu0 %v1751
        %v1753 = vand.u32 %v347, 4294901760
        %v1754 = vsub.f32 %v347, %v1753
        %v1755 = vand.u32 %v1754, 4294901760
        %v1756 = vsub.f32 %v1754, %v1755
        %v1757 = vand.u32 %v1756, 4294901760
        %1758 = vmatpush.msra.mxu0 %v1757
        %v1759 = vand.u32 %v345, 4294901760
        %v1760 = vsub.f32 %v345, %v1759
        %v1761 = vand.u32 %v1760, 4294901760
        %v1762 = vsub.f32 %v1760, %v1761
        %v1763 = vand.u32 %v1762, 4294901760
        %1764 = vmatpush.msra.mxu0 %v1763
        %v1765 = vand.u32 %v343, 4294901760
        %v1766 = vsub.f32 %v343, %v1765
        %v1767 = vand.u32 %v1766, 4294901760
        %v1768 = vsub.f32 %v1766, %v1767
        %v1769 = vand.u32 %v1768, 4294901760
        %1770 = vmatpush.msra.mxu0 %v1769
        %v1771 = vand.u32 %v341, 4294901760
        %v1772 = vsub.f32 %v341, %v1771
        %v1773 = vand.u32 %v1772, 4294901760
        %v1774 = vsub.f32 %v1772, %v1773
        %v1775 = vand.u32 %v1774, 4294901760
        %1776 = vmatpush.msra.mxu0 %v1775
        %v1777 = vand.u32 %v616, 4294901760
        %1778 = vmatmul.f32.gmra.mxu0 %v1777
        %v1779 = vpop.f32.mrf.mxu0
        %v1780 = vadd.f32 %v1679, %v1779
        %1781 = vdwg.mxu0
        %v1782 = vand.u32 %v371, 4294901760
        %v1783 = vsub.f32 %v371, %v1782
        %1784 = vmatpush.msra.mxu0 %v1783
        %v1785 = vand.u32 %v369, 4294901760
        %v1786 = vsub.f32 %v369, %v1785
        %1787 = vmatpush.msra.mxu0 %v1786
        %v1788 = vand.u32 %v367, 4294901760
        %v1789 = vsub.f32 %v367, %v1788
        %1790 = vmatpush.msra.mxu0 %v1789
        %v1791 = vand.u32 %v365, 4294901760
        %v1792 = vsub.f32 %v365, %v1791
        %1793 = vmatpush.msra.mxu0 %v1792
        %v1794 = vand.u32 %v363, 4294901760
        %v1795 = vsub.f32 %v363, %v1794
        %1796 = vmatpush.msra.mxu0 %v1795
        %v1797 = vand.u32 %v361, 4294901760
        %v1798 = vsub.f32 %v361, %v1797
        %1799 = vmatpush.msra.mxu0 %v1798
        %v1800 = vand.u32 %v359, 4294901760
        %v1801 = vsub.f32 %v359, %v1800
        %1802 = vmatpush.msra.mxu0 %v1801
        %v1803 = vand.u32 %v357, 4294901760
        %v1804 = vsub.f32 %v357, %v1803
        %1805 = vmatpush.msra.mxu0 %v1804
        %v1806 = vand.u32 %v355, 4294901760
        %v1807 = vsub.f32 %v355, %v1806
        %1808 = vmatpush.msra.mxu0 %v1807
        %v1809 = vand.u32 %v353, 4294901760
        %v1810 = vsub.f32 %v353, %v1809
        %1811 = vmatpush.msra.mxu0 %v1810
        %v1812 = vand.u32 %v351, 4294901760
        %v1813 = vsub.f32 %v351, %v1812
        %1814 = vmatpush.msra.mxu0 %v1813
        %v1815 = vand.u32 %v349, 4294901760
        %v1816 = vsub.f32 %v349, %v1815
        %1817 = vmatpush.msra.mxu0 %v1816
        %v1818 = vand.u32 %v347, 4294901760
        %v1819 = vsub.f32 %v347, %v1818
        %1820 = vmatpush.msra.mxu0 %v1819
        %v1821 = vand.u32 %v345, 4294901760
        %v1822 = vsub.f32 %v345, %v1821
        %1823 = vmatpush.msra.mxu0 %v1822
        %v1824 = vand.u32 %v343, 4294901760
        %v1825 = vsub.f32 %v343, %v1824
        %1826 = vmatpush.msra.mxu0 %v1825
        %v1827 = vand.u32 %v341, 4294901760
        %v1828 = vsub.f32 %v341, %v1827
        %1829 = vmatpush.msra.mxu0 %v1828
        %v1830 = vand.u32 %v616, 4294901760
        %v1831 = vsub.f32 %v616, %v1830
        %1832 = vmatmul.f32.gmra.mxu0 %v1831
        %v1833 = vpop.f32.mrf.mxu0
        %v1834 = vadd.f32 %v1780, %v1833
        %1835 = vdwg.mxu0
        %v1836 = vand.u32 %v371, 4294901760
        %1837 = vmatpush.msra.mxu0 %v1836
        %v1838 = vand.u32 %v369, 4294901760
        %1839 = vmatpush.msra.mxu0 %v1838
        %v1840 = vand.u32 %v367, 4294901760
        %1841 = vmatpush.msra.mxu0 %v1840
        %v1842 = vand.u32 %v365, 4294901760
        %1843 = vmatpush.msra.mxu0 %v1842
        %v1844 = vand.u32 %v363, 4294901760
        %1845 = vmatpush.msra.mxu0 %v1844
        %v1846 = vand.u32 %v361, 4294901760
        %1847 = vmatpush.msra.mxu0 %v1846
        %v1848 = vand.u32 %v359, 4294901760
        %1849 = vmatpush.msra.mxu0 %v1848
        %v1850 = vand.u32 %v357, 4294901760
        %1851 = vmatpush.msra.mxu0 %v1850
        %v1852 = vand.u32 %v355, 4294901760
        %1853 = vmatpush.msra.mxu0 %v1852
        %v1854 = vand.u32 %v353, 4294901760
        %1855 = vmatpush.msra.mxu0 %v1854
        %v1856 = vand.u32 %v351, 4294901760
        %1857 = vmatpush.msra.mxu0 %v1856
        %v1858 = vand.u32 %v349, 4294901760
        %1859 = vmatpush.msra.mxu0 %v1858
        %v1860 = vand.u32 %v347, 4294901760
        %1861 = vmatpush.msra.mxu0 %v1860
        %v1862 = vand.u32 %v345, 4294901760
        %1863 = vmatpush.msra.mxu0 %v1862
        %v1864 = vand.u32 %v343, 4294901760
        %1865 = vmatpush.msra.mxu0 %v1864
        %v1866 = vand.u32 %v341, 4294901760
        %1867 = vmatpush.msra.mxu0 %v1866
        %v1868 = vand.u32 %v616, 4294901760
        %v1869 = vsub.f32 %v616, %v1868
        %v1870 = vand.u32 %v1869, 4294901760
        %1871 = vmatmul.f32.gmra.mxu0 %v1870
        %v1872 = vpop.f32.mrf.mxu0
        %v1873 = vadd.f32 %v1834, %v1872
        %1874 = vdwg.mxu0
        %v1875 = vand.u32 %v371, 4294901760
        %v1876 = vsub.f32 %v371, %v1875
        %v1877 = vand.u32 %v1876, 4294901760
        %1878 = vmatpush.msra.mxu0 %v1877
        %v1879 = vand.u32 %v369, 4294901760
        %v1880 = vsub.f32 %v369, %v1879
        %v1881 = vand.u32 %v1880, 4294901760
        %1882 = vmatpush.msra.mxu0 %v1881
        %v1883 = vand.u32 %v367, 4294901760
        %v1884 = vsub.f32 %v367, %v1883
        %v1885 = vand.u32 %v1884, 4294901760
        %1886 = vmatpush.msra.mxu0 %v1885
        %v1887 = vand.u32 %v365, 4294901760
        %v1888 = vsub.f32 %v365, %v1887
        %v1889 = vand.u32 %v1888, 4294901760
        %1890 = vmatpush.msra.mxu0 %v1889
        %v1891 = vand.u32 %v363, 4294901760
        %v1892 = vsub.f32 %v363, %v1891
        %v1893 = vand.u32 %v1892, 4294901760
        %1894 = vmatpush.msra.mxu0 %v1893
        %v1895 = vand.u32 %v361, 4294901760
        %v1896 = vsub.f32 %v361, %v1895
        %v1897 = vand.u32 %v1896, 4294901760
        %1898 = vmatpush.msra.mxu0 %v1897
        %v1899 = vand.u32 %v359, 4294901760
        %v1900 = vsub.f32 %v359, %v1899
        %v1901 = vand.u32 %v1900, 4294901760
        %1902 = vmatpush.msra.mxu0 %v1901
        %v1903 = vand.u32 %v357, 4294901760
        %v1904 = vsub.f32 %v357, %v1903
        %v1905 = vand.u32 %v1904, 4294901760
        %1906 = vmatpush.msra.mxu0 %v1905
        %v1907 = vand.u32 %v355, 4294901760
        %v1908 = vsub.f32 %v355, %v1907
        %v1909 = vand.u32 %v1908, 4294901760
        %1910 = vmatpush.msra.mxu0 %v1909
        %v1911 = vand.u32 %v353, 4294901760
        %v1912 = vsub.f32 %v353, %v1911
        %v1913 = vand.u32 %v1912, 4294901760
        %1914 = vmatpush.msra.mxu0 %v1913
        %v1915 = vand.u32 %v351, 4294901760
        %v1916 = vsub.f32 %v351, %v1915
        %v1917 = vand.u32 %v1916, 4294901760
        %1918 = vmatpush.msra.mxu0 %v1917
        %v1919 = vand.u32 %v349, 4294901760
        %v1920 = vsub.f32 %v349, %v1919
        %v1921 = vand.u32 %v1920, 4294901760
        %1922 = vmatpush.msra.mxu0 %v1921
        %v1923 = vand.u32 %v347, 4294901760
        %v1924 = vsub.f32 %v347, %v1923
        %v1925 = vand.u32 %v1924, 4294901760
        %1926 = vmatpush.msra.mxu0 %v1925
        %v1927 = vand.u32 %v345, 4294901760
        %v1928 = vsub.f32 %v345, %v1927
        %v1929 = vand.u32 %v1928, 4294901760
        %1930 = vmatpush.msra.mxu0 %v1929
        %v1931 = vand.u32 %v343, 4294901760
        %v1932 = vsub.f32 %v343, %v1931
        %v1933 = vand.u32 %v1932, 4294901760
        %1934 = vmatpush.msra.mxu0 %v1933
        %v1935 = vand.u32 %v341, 4294901760
        %v1936 = vsub.f32 %v341, %v1935
        %v1937 = vand.u32 %v1936, 4294901760
        %1938 = vmatpush.msra.mxu0 %v1937
        %v1939 = vand.u32 %v616, 4294901760
        %1940 = vmatmul.f32.gmra.mxu0 %v1939
        %v1941 = vpop.f32.mrf.mxu0
        %v1942 = vadd.f32 %v1873, %v1941
        %1943 = vdwg.mxu0
        %v1944 = vand.u32 %v371, 4294901760
        %1945 = vmatpush.msra.mxu0 %v1944
        %v1946 = vand.u32 %v369, 4294901760
        %1947 = vmatpush.msra.mxu0 %v1946
        %v1948 = vand.u32 %v367, 4294901760
        %1949 = vmatpush.msra.mxu0 %v1948
        %v1950 = vand.u32 %v365, 4294901760
        %1951 = vmatpush.msra.mxu0 %v1950
        %v1952 = vand.u32 %v363, 4294901760
        %1953 = vmatpush.msra.mxu0 %v1952
        %v1954 = vand.u32 %v361, 4294901760
        %1955 = vmatpush.msra.mxu0 %v1954
        %v1956 = vand.u32 %v359, 4294901760
        %1957 = vmatpush.msra.mxu0 %v1956
        %v1958 = vand.u32 %v357, 4294901760
        %1959 = vmatpush.msra.mxu0 %v1958
        %v1960 = vand.u32 %v355, 4294901760
        %1961 = vmatpush.msra.mxu0 %v1960
        %v1962 = vand.u32 %v353, 4294901760
        %1963 = vmatpush.msra.mxu0 %v1962
        %v1964 = vand.u32 %v351, 4294901760
        %1965 = vmatpush.msra.mxu0 %v1964
        %v1966 = vand.u32 %v349, 4294901760
        %1967 = vmatpush.msra.mxu0 %v1966
        %v1968 = vand.u32 %v347, 4294901760
        %1969 = vmatpush.msra.mxu0 %v1968
        %v1970 = vand.u32 %v345, 4294901760
        %1971 = vmatpush.msra.mxu0 %v1970
        %v1972 = vand.u32 %v343, 4294901760
        %1973 = vmatpush.msra.mxu0 %v1972
        %v1974 = vand.u32 %v341, 4294901760
        %1975 = vmatpush.msra.mxu0 %v1974
        %v1976 = vand.u32 %v616, 4294901760
        %1977 = vmatmul.f32.gmra.mxu0 %v1976
        %v1978 = vpop.f32.mrf.mxu0
        %v1979 = vadd.f32 %v1942, %v1978
        %1980 = vdwg.mxu0
        %v1981 = vand.u32 %v273, 4294901760
        %1982 = vmatpush.msra.mxu0 %v1981
        %v1983 = vand.u32 %v271, 4294901760
        %1984 = vmatpush.msra.mxu0 %v1983
        %v1985 = vand.u32 %v269, 4294901760
        %1986 = vmatpush.msra.mxu0 %v1985
        %v1987 = vand.u32 %v267, 4294901760
        %1988 = vmatpush.msra.mxu0 %v1987
        %v1989 = vand.u32 %v265, 4294901760
        %1990 = vmatpush.msra.mxu0 %v1989
        %v1991 = vand.u32 %v263, 4294901760
        %1992 = vmatpush.msra.mxu0 %v1991
        %v1993 = vand.u32 %v261, 4294901760
        %1994 = vmatpush.msra.mxu0 %v1993
        %v1995 = vand.u32 %v259, 4294901760
        %1996 = vmatpush.msra.mxu0 %v1995
        %v1997 = vand.u32 %v257, 4294901760
        %1998 = vmatpush.msra.mxu0 %v1997
        %v1999 = vand.u32 %v255, 4294901760
        %2000 = vmatpush.msra.mxu0 %v1999
        %v2001 = vand.u32 %v253, 4294901760
        %2002 = vmatpush.msra.mxu0 %v2001
        %v2003 = vand.u32 %v251, 4294901760
        %2004 = vmatpush.msra.mxu0 %v2003
        %v2005 = vand.u32 %v249, 4294901760
        %2006 = vmatpush.msra.mxu0 %v2005
        %v2007 = vand.u32 %v247, 4294901760
        %2008 = vmatpush.msra.mxu0 %v2007
        %v2009 = vand.u32 %v245, 4294901760
        %2010 = vmatpush.msra.mxu0 %v2009
        %v2011 = vand.u32 %v243, 4294901760
        %2012 = vmatpush.msra.mxu0 %v2011
        %v2013 = vand.u32 %v597, 4294901760
        %v2014 = vsub.f32 %v597, %v2013
        %v2015 = vand.u32 %v2014, 4294901760
        %v2016 = vsub.f32 %v2014, %v2015
        %v2017 = vand.u32 %v2016, 4294901760
        %2018 = vmatmul.f32.gmra.mxu0 %v2017
        %v2019 = vpop.f32.mrf.mxu0
        %v2020 = vadd.f32 %v1297, %v2019
        %2021 = vdwg.mxu0
        %v2022 = vand.u32 %v273, 4294901760
        %v2023 = vsub.f32 %v273, %v2022
        %v2024 = vand.u32 %v2023, 4294901760
        %v2025 = vsub.f32 %v2023, %v2024
        %v2026 = vand.u32 %v2025, 4294901760
        %2027 = vmatpush.msra.mxu0 %v2026
        %v2028 = vand.u32 %v271, 4294901760
        %v2029 = vsub.f32 %v271, %v2028
        %v2030 = vand.u32 %v2029, 4294901760
        %v2031 = vsub.f32 %v2029, %v2030
        %v2032 = vand.u32 %v2031, 4294901760
        %2033 = vmatpush.msra.mxu0 %v2032
        %v2034 = vand.u32 %v269, 4294901760
        %v2035 = vsub.f32 %v269, %v2034
        %v2036 = vand.u32 %v2035, 4294901760
        %v2037 = vsub.f32 %v2035, %v2036
        %v2038 = vand.u32 %v2037, 4294901760
        %2039 = vmatpush.msra.mxu0 %v2038
        %v2040 = vand.u32 %v267, 4294901760
        %v2041 = vsub.f32 %v267, %v2040
        %v2042 = vand.u32 %v2041, 4294901760
        %v2043 = vsub.f32 %v2041, %v2042
        %v2044 = vand.u32 %v2043, 4294901760
        %2045 = vmatpush.msra.mxu0 %v2044
        %v2046 = vand.u32 %v265, 4294901760
        %v2047 = vsub.f32 %v265, %v2046
        %v2048 = vand.u32 %v2047, 4294901760
        %v2049 = vsub.f32 %v2047, %v2048
        %v2050 = vand.u32 %v2049, 4294901760
        %2051 = vmatpush.msra.mxu0 %v2050
        %v2052 = vand.u32 %v263, 4294901760
        %v2053 = vsub.f32 %v263, %v2052
        %v2054 = vand.u32 %v2053, 4294901760
        %v2055 = vsub.f32 %v2053, %v2054
        %v2056 = vand.u32 %v2055, 4294901760
        %2057 = vmatpush.msra.mxu0 %v2056
        %v2058 = vand.u32 %v261, 4294901760
        %v2059 = vsub.f32 %v261, %v2058
        %v2060 = vand.u32 %v2059, 4294901760
        %v2061 = vsub.f32 %v2059, %v2060
        %v2062 = vand.u32 %v2061, 4294901760
        %2063 = vmatpush.msra.mxu0 %v2062
        %v2064 = vand.u32 %v259, 4294901760
        %v2065 = vsub.f32 %v259, %v2064
        %v2066 = vand.u32 %v2065, 4294901760
        %v2067 = vsub.f32 %v2065, %v2066
        %v2068 = vand.u32 %v2067, 4294901760
        %2069 = vmatpush.msra.mxu0 %v2068
        %v2070 = vand.u32 %v257, 4294901760
        %v2071 = vsub.f32 %v257, %v2070
        %v2072 = vand.u32 %v2071, 4294901760
        %v2073 = vsub.f32 %v2071, %v2072
        %v2074 = vand.u32 %v2073, 4294901760
        %2075 = vmatpush.msra.mxu0 %v2074
        %v2076 = vand.u32 %v255, 4294901760
        %v2077 = vsub.f32 %v255, %v2076
        %v2078 = vand.u32 %v2077, 4294901760
        %v2079 = vsub.f32 %v2077, %v2078
        %v2080 = vand.u32 %v2079, 4294901760
        %2081 = vmatpush.msra.mxu0 %v2080
        %v2082 = vand.u32 %v253, 4294901760
        %v2083 = vsub.f32 %v253, %v2082
        %v2084 = vand.u32 %v2083, 4294901760
        %v2085 = vsub.f32 %v2083, %v2084
        %v2086 = vand.u32 %v2085, 4294901760
        %2087 = vmatpush.msra.mxu0 %v2086
        %v2088 = vand.u32 %v251, 4294901760
        %v2089 = vsub.f32 %v251, %v2088
        %v2090 = vand.u32 %v2089, 4294901760
        %v2091 = vsub.f32 %v2089, %v2090
        %v2092 = vand.u32 %v2091, 4294901760
        %2093 = vmatpush.msra.mxu0 %v2092
        %v2094 = vand.u32 %v249, 4294901760
        %v2095 = vsub.f32 %v249, %v2094
        %v2096 = vand.u32 %v2095, 4294901760
        %v2097 = vsub.f32 %v2095, %v2096
        %v2098 = vand.u32 %v2097, 4294901760
        %2099 = vmatpush.msra.mxu0 %v2098
        %v2100 = vand.u32 %v247, 4294901760
        %v2101 = vsub.f32 %v247, %v2100
        %v2102 = vand.u32 %v2101, 4294901760
        %v2103 = vsub.f32 %v2101, %v2102
        %v2104 = vand.u32 %v2103, 4294901760
        %2105 = vmatpush.msra.mxu0 %v2104
        %v2106 = vand.u32 %v245, 4294901760
        %v2107 = vsub.f32 %v245, %v2106
        %v2108 = vand.u32 %v2107, 4294901760
        %v2109 = vsub.f32 %v2107, %v2108
        %v2110 = vand.u32 %v2109, 4294901760
        %2111 = vmatpush.msra.mxu0 %v2110
        %v2112 = vand.u32 %v243, 4294901760
        %v2113 = vsub.f32 %v243, %v2112
        %v2114 = vand.u32 %v2113, 4294901760
        %v2115 = vsub.f32 %v2113, %v2114
        %v2116 = vand.u32 %v2115, 4294901760
        %2117 = vmatpush.msra.mxu0 %v2116
        %v2118 = vand.u32 %v597, 4294901760
        %2119 = vmatmul.f32.gmra.mxu0 %v2118
        %v2120 = vpop.f32.mrf.mxu0
        %v2121 = vadd.f32 %v2020, %v2120
        %2122 = vdwg.mxu0
        %v2123 = vand.u32 %v273, 4294901760
        %v2124 = vsub.f32 %v273, %v2123
        %2125 = vmatpush.msra.mxu0 %v2124
        %v2126 = vand.u32 %v271, 4294901760
        %v2127 = vsub.f32 %v271, %v2126
        %2128 = vmatpush.msra.mxu0 %v2127
        %v2129 = vand.u32 %v269, 4294901760
        %v2130 = vsub.f32 %v269, %v2129
        %2131 = vmatpush.msra.mxu0 %v2130
        %v2132 = vand.u32 %v267, 4294901760
        %v2133 = vsub.f32 %v267, %v2132
        %2134 = vmatpush.msra.mxu0 %v2133
        %v2135 = vand.u32 %v265, 4294901760
        %v2136 = vsub.f32 %v265, %v2135
        %2137 = vmatpush.msra.mxu0 %v2136
        %v2138 = vand.u32 %v263, 4294901760
        %v2139 = vsub.f32 %v263, %v2138
        %2140 = vmatpush.msra.mxu0 %v2139
        %v2141 = vand.u32 %v261, 4294901760
        %v2142 = vsub.f32 %v261, %v2141
        %2143 = vmatpush.msra.mxu0 %v2142
        %v2144 = vand.u32 %v259, 4294901760
        %v2145 = vsub.f32 %v259, %v2144
        %2146 = vmatpush.msra.mxu0 %v2145
        %v2147 = vand.u32 %v257, 4294901760
        %v2148 = vsub.f32 %v257, %v2147
        %2149 = vmatpush.msra.mxu0 %v2148
        %v2150 = vand.u32 %v255, 4294901760
        %v2151 = vsub.f32 %v255, %v2150
        %2152 = vmatpush.msra.mxu0 %v2151
        %v2153 = vand.u32 %v253, 4294901760
        %v2154 = vsub.f32 %v253, %v2153
        %2155 = vmatpush.msra.mxu0 %v2154
        %v2156 = vand.u32 %v251, 4294901760
        %v2157 = vsub.f32 %v251, %v2156
        %2158 = vmatpush.msra.mxu0 %v2157
        %v2159 = vand.u32 %v249, 4294901760
        %v2160 = vsub.f32 %v249, %v2159
        %2161 = vmatpush.msra.mxu0 %v2160
        %v2162 = vand.u32 %v247, 4294901760
        %v2163 = vsub.f32 %v247, %v2162
        %2164 = vmatpush.msra.mxu0 %v2163
        %v2165 = vand.u32 %v245, 4294901760
        %v2166 = vsub.f32 %v245, %v2165
        %2167 = vmatpush.msra.mxu0 %v2166
        %v2168 = vand.u32 %v243, 4294901760
        %v2169 = vsub.f32 %v243, %v2168
        %2170 = vmatpush.msra.mxu0 %v2169
        %v2171 = vand.u32 %v597, 4294901760
        %v2172 = vsub.f32 %v597, %v2171
        %2173 = vmatmul.f32.gmra.mxu0 %v2172
        %v2174 = vpop.f32.mrf.mxu0
        %v2175 = vadd.f32 %v2121, %v2174
        %2176 = vdwg.mxu0
        %v2177 = vand.u32 %v273, 4294901760
        %2178 = vmatpush.msra.mxu0 %v2177
        %v2179 = vand.u32 %v271, 4294901760
        %2180 = vmatpush.msra.mxu0 %v2179
        %v2181 = vand.u32 %v269, 4294901760
        %2182 = vmatpush.msra.mxu0 %v2181
        %v2183 = vand.u32 %v267, 4294901760
        %2184 = vmatpush.msra.mxu0 %v2183
        %v2185 = vand.u32 %v265, 4294901760
        %2186 = vmatpush.msra.mxu0 %v2185
        %v2187 = vand.u32 %v263, 4294901760
        %2188 = vmatpush.msra.mxu0 %v2187
        %v2189 = vand.u32 %v261, 4294901760
        %2190 = vmatpush.msra.mxu0 %v2189
        %v2191 = vand.u32 %v259, 4294901760
        %2192 = vmatpush.msra.mxu0 %v2191
        %v2193 = vand.u32 %v257, 4294901760
        %2194 = vmatpush.msra.mxu0 %v2193
        %v2195 = vand.u32 %v255, 4294901760
        %2196 = vmatpush.msra.mxu0 %v2195
        %v2197 = vand.u32 %v253, 4294901760
        %2198 = vmatpush.msra.mxu0 %v2197
        %v2199 = vand.u32 %v251, 4294901760
        %2200 = vmatpush.msra.mxu0 %v2199
        %v2201 = vand.u32 %v249, 4294901760
        %2202 = vmatpush.msra.mxu0 %v2201
        %v2203 = vand.u32 %v247, 4294901760
        %2204 = vmatpush.msra.mxu0 %v2203
        %v2205 = vand.u32 %v245, 4294901760
        %2206 = vmatpush.msra.mxu0 %v2205
        %v2207 = vand.u32 %v243, 4294901760
        %2208 = vmatpush.msra.mxu0 %v2207
        %v2209 = vand.u32 %v597, 4294901760
        %v2210 = vsub.f32 %v597, %v2209
        %v2211 = vand.u32 %v2210, 4294901760
        %2212 = vmatmul.f32.gmra.mxu0 %v2211
        %v2213 = vpop.f32.mrf.mxu0
        %v2214 = vadd.f32 %v2175, %v2213
        %2215 = vdwg.mxu0
        %v2216 = vand.u32 %v273, 4294901760
        %v2217 = vsub.f32 %v273, %v2216
        %v2218 = vand.u32 %v2217, 4294901760
        %2219 = vmatpush.msra.mxu0 %v2218
        %v2220 = vand.u32 %v271, 4294901760
        %v2221 = vsub.f32 %v271, %v2220
        %v2222 = vand.u32 %v2221, 4294901760
        %2223 = vmatpush.msra.mxu0 %v2222
        %v2224 = vand.u32 %v269, 4294901760
        %v2225 = vsub.f32 %v269, %v2224
        %v2226 = vand.u32 %v2225, 4294901760
        %2227 = vmatpush.msra.mxu0 %v2226
        %v2228 = vand.u32 %v267, 4294901760
        %v2229 = vsub.f32 %v267, %v2228
        %v2230 = vand.u32 %v2229, 4294901760
        %2231 = vmatpush.msra.mxu0 %v2230
        %v2232 = vand.u32 %v265, 4294901760
        %v2233 = vsub.f32 %v265, %v2232
        %v2234 = vand.u32 %v2233, 4294901760
        %2235 = vmatpush.msra.mxu0 %v2234
        %v2236 = vand.u32 %v263, 4294901760
        %v2237 = vsub.f32 %v263, %v2236
        %v2238 = vand.u32 %v2237, 4294901760
        %2239 = vmatpush.msra.mxu0 %v2238
        %v2240 = vand.u32 %v261, 4294901760
        %v2241 = vsub.f32 %v261, %v2240
        %v2242 = vand.u32 %v2241, 4294901760
        %2243 = vmatpush.msra.mxu0 %v2242
        %v2244 = vand.u32 %v259, 4294901760
        %v2245 = vsub.f32 %v259, %v2244
        %v2246 = vand.u32 %v2245, 4294901760
        %2247 = vmatpush.msra.mxu0 %v2246
        %v2248 = vand.u32 %v257, 4294901760
        %v2249 = vsub.f32 %v257, %v2248
        %v2250 = vand.u32 %v2249, 4294901760
        %2251 = vmatpush.msra.mxu0 %v2250
        %v2252 = vand.u32 %v255, 4294901760
        %v2253 = vsub.f32 %v255, %v2252
        %v2254 = vand.u32 %v2253, 4294901760
        %2255 = vmatpush.msra.mxu0 %v2254
        %v2256 = vand.u32 %v253, 4294901760
        %v2257 = vsub.f32 %v253, %v2256
        %v2258 = vand.u32 %v2257, 4294901760
        %2259 = vmatpush.msra.mxu0 %v2258
        %v2260 = vand.u32 %v251, 4294901760
        %v2261 = vsub.f32 %v251, %v2260
        %v2262 = vand.u32 %v2261, 4294901760
        %2263 = vmatpush.msra.mxu0 %v2262
        %v2264 = vand.u32 %v249, 4294901760
        %v2265 = vsub.f32 %v249, %v2264
        %v2266 = vand.u32 %v2265, 4294901760
        %2267 = vmatpush.msra.mxu0 %v2266
        %v2268 = vand.u32 %v247, 4294901760
        %v2269 = vsub.f32 %v247, %v2268
        %v2270 = vand.u32 %v2269, 4294901760
        %2271 = vmatpush.msra.mxu0 %v2270
        %v2272 = vand.u32 %v245, 4294901760
        %v2273 = vsub.f32 %v245, %v2272
        %v2274 = vand.u32 %v2273, 4294901760
        %2275 = vmatpush.msra.mxu0 %v2274
        %v2276 = vand.u32 %v243, 4294901760
        %v2277 = vsub.f32 %v243, %v2276
        %v2278 = vand.u32 %v2277, 4294901760
        %2279 = vmatpush.msra.mxu0 %v2278
        %v2280 = vand.u32 %v597, 4294901760
        %2281 = vmatmul.f32.gmra.mxu0 %v2280
        %v2282 = vpop.f32.mrf.mxu0
        %v2283 = vadd.f32 %v2214, %v2282
        %2284 = vdwg.mxu0
        %v2285 = vand.u32 %v273, 4294901760
        %2286 = vmatpush.msra.mxu0 %v2285
        %v2287 = vand.u32 %v271, 4294901760
        %2288 = vmatpush.msra.mxu0 %v2287
        %v2289 = vand.u32 %v269, 4294901760
        %2290 = vmatpush.msra.mxu0 %v2289
        %v2291 = vand.u32 %v267, 4294901760
        %2292 = vmatpush.msra.mxu0 %v2291
        %v2293 = vand.u32 %v265, 4294901760
        %2294 = vmatpush.msra.mxu0 %v2293
        %v2295 = vand.u32 %v263, 4294901760
        %2296 = vmatpush.msra.mxu0 %v2295
        %v2297 = vand.u32 %v261, 4294901760
        %2298 = vmatpush.msra.mxu0 %v2297
        %v2299 = vand.u32 %v259, 4294901760
        %2300 = vmatpush.msra.mxu0 %v2299
        %v2301 = vand.u32 %v257, 4294901760
        %2302 = vmatpush.msra.mxu0 %v2301
        %v2303 = vand.u32 %v255, 4294901760
        %2304 = vmatpush.msra.mxu0 %v2303
        %v2305 = vand.u32 %v253, 4294901760
        %2306 = vmatpush.msra.mxu0 %v2305
        %v2307 = vand.u32 %v251, 4294901760
        %2308 = vmatpush.msra.mxu0 %v2307
        %v2309 = vand.u32 %v249, 4294901760
        %2310 = vmatpush.msra.mxu0 %v2309
        %v2311 = vand.u32 %v247, 4294901760
        %2312 = vmatpush.msra.mxu0 %v2311
        %v2313 = vand.u32 %v245, 4294901760
        %2314 = vmatpush.msra.mxu0 %v2313
        %v2315 = vand.u32 %v243, 4294901760
        %2316 = vmatpush.msra.mxu0 %v2315
        %v2317 = vand.u32 %v597, 4294901760
        %2318 = vmatmul.f32.gmra.mxu0 %v2317
        %v2319 = vpop.f32.mrf.mxu0
        %v2320 = vadd.f32 %v2283, %v2319
        %2321 = vdwg.mxu0
        %v2322 = vand.u32 %v305, 4294901760
        %2323 = vmatpush.msra.mxu0 %v2322
        %v2324 = vand.u32 %v303, 4294901760
        %2325 = vmatpush.msra.mxu0 %v2324
        %v2326 = vand.u32 %v301, 4294901760
        %2327 = vmatpush.msra.mxu0 %v2326
        %v2328 = vand.u32 %v299, 4294901760
        %2329 = vmatpush.msra.mxu0 %v2328
        %v2330 = vand.u32 %v297, 4294901760
        %2331 = vmatpush.msra.mxu0 %v2330
        %v2332 = vand.u32 %v295, 4294901760
        %2333 = vmatpush.msra.mxu0 %v2332
        %v2334 = vand.u32 %v293, 4294901760
        %2335 = vmatpush.msra.mxu0 %v2334
        %v2336 = vand.u32 %v291, 4294901760
        %2337 = vmatpush.msra.mxu0 %v2336
        %v2338 = vand.u32 %v289, 4294901760
        %2339 = vmatpush.msra.mxu0 %v2338
        %v2340 = vand.u32 %v287, 4294901760
        %2341 = vmatpush.msra.mxu0 %v2340
        %v2342 = vand.u32 %v285, 4294901760
        %2343 = vmatpush.msra.mxu0 %v2342
        %v2344 = vand.u32 %v283, 4294901760
        %2345 = vmatpush.msra.mxu0 %v2344
        %v2346 = vand.u32 %v281, 4294901760
        %2347 = vmatpush.msra.mxu0 %v2346
        %v2348 = vand.u32 %v279, 4294901760
        %2349 = vmatpush.msra.mxu0 %v2348
        %v2350 = vand.u32 %v277, 4294901760
        %2351 = vmatpush.msra.mxu0 %v2350
        %v2352 = vand.u32 %v275, 4294901760
        %2353 = vmatpush.msra.mxu0 %v2352
        %v2354 = vand.u32 %v598, 4294901760
        %v2355 = vsub.f32 %v598, %v2354
        %v2356 = vand.u32 %v2355, 4294901760
        %v2357 = vsub.f32 %v2355, %v2356
        %v2358 = vand.u32 %v2357, 4294901760
        %2359 = vmatmul.f32.gmra.mxu0 %v2358
        %v2360 = vpop.f32.mrf.mxu0
        %v2361 = vadd.f32 %v2320, %v2360
        %2362 = vdwg.mxu0
        %v2363 = vand.u32 %v305, 4294901760
        %v2364 = vsub.f32 %v305, %v2363
        %v2365 = vand.u32 %v2364, 4294901760
        %v2366 = vsub.f32 %v2364, %v2365
        %v2367 = vand.u32 %v2366, 4294901760
        %2368 = vmatpush.msra.mxu0 %v2367
        %v2369 = vand.u32 %v303, 4294901760
        %v2370 = vsub.f32 %v303, %v2369
        %v2371 = vand.u32 %v2370, 4294901760
        %v2372 = vsub.f32 %v2370, %v2371
        %v2373 = vand.u32 %v2372, 4294901760
        %2374 = vmatpush.msra.mxu0 %v2373
        %v2375 = vand.u32 %v301, 4294901760
        %v2376 = vsub.f32 %v301, %v2375
        %v2377 = vand.u32 %v2376, 4294901760
        %v2378 = vsub.f32 %v2376, %v2377
        %v2379 = vand.u32 %v2378, 4294901760
        %2380 = vmatpush.msra.mxu0 %v2379
        %v2381 = vand.u32 %v299, 4294901760
        %v2382 = vsub.f32 %v299, %v2381
        %v2383 = vand.u32 %v2382, 4294901760
        %v2384 = vsub.f32 %v2382, %v2383
        %v2385 = vand.u32 %v2384, 4294901760
        %2386 = vmatpush.msra.mxu0 %v2385
        %v2387 = vand.u32 %v297, 4294901760
        %v2388 = vsub.f32 %v297, %v2387
        %v2389 = vand.u32 %v2388, 4294901760
        %v2390 = vsub.f32 %v2388, %v2389
        %v2391 = vand.u32 %v2390, 4294901760
        %2392 = vmatpush.msra.mxu0 %v2391
        %v2393 = vand.u32 %v295, 4294901760
        %v2394 = vsub.f32 %v295, %v2393
        %v2395 = vand.u32 %v2394, 4294901760
        %v2396 = vsub.f32 %v2394, %v2395
        %v2397 = vand.u32 %v2396, 4294901760
        %2398 = vmatpush.msra.mxu0 %v2397
        %v2399 = vand.u32 %v293, 4294901760
        %v2400 = vsub.f32 %v293, %v2399
        %v2401 = vand.u32 %v2400, 4294901760
        %v2402 = vsub.f32 %v2400, %v2401
        %v2403 = vand.u32 %v2402, 4294901760
        %2404 = vmatpush.msra.mxu0 %v2403
        %v2405 = vand.u32 %v291, 4294901760
        %v2406 = vsub.f32 %v291, %v2405
        %v2407 = vand.u32 %v2406, 4294901760
        %v2408 = vsub.f32 %v2406, %v2407
        %v2409 = vand.u32 %v2408, 4294901760
        %2410 = vmatpush.msra.mxu0 %v2409
        %v2411 = vand.u32 %v289, 4294901760
        %v2412 = vsub.f32 %v289, %v2411
        %v2413 = vand.u32 %v2412, 4294901760
        %v2414 = vsub.f32 %v2412, %v2413
        %v2415 = vand.u32 %v2414, 4294901760
        %2416 = vmatpush.msra.mxu0 %v2415
        %v2417 = vand.u32 %v287, 4294901760
        %v2418 = vsub.f32 %v287, %v2417
        %v2419 = vand.u32 %v2418, 4294901760
        %v2420 = vsub.f32 %v2418, %v2419
        %v2421 = vand.u32 %v2420, 4294901760
        %2422 = vmatpush.msra.mxu0 %v2421
        %v2423 = vand.u32 %v285, 4294901760
        %v2424 = vsub.f32 %v285, %v2423
        %v2425 = vand.u32 %v2424, 4294901760
        %v2426 = vsub.f32 %v2424, %v2425
        %v2427 = vand.u32 %v2426, 4294901760
        %2428 = vmatpush.msra.mxu0 %v2427
        %v2429 = vand.u32 %v283, 4294901760
        %v2430 = vsub.f32 %v283, %v2429
        %v2431 = vand.u32 %v2430, 4294901760
        %v2432 = vsub.f32 %v2430, %v2431
        %v2433 = vand.u32 %v2432, 4294901760
        %2434 = vmatpush.msra.mxu0 %v2433
        %v2435 = vand.u32 %v281, 4294901760
        %v2436 = vsub.f32 %v281, %v2435
        %v2437 = vand.u32 %v2436, 4294901760
        %v2438 = vsub.f32 %v2436, %v2437
        %v2439 = vand.u32 %v2438, 4294901760
        %2440 = vmatpush.msra.mxu0 %v2439
        %v2441 = vand.u32 %v279, 4294901760
        %v2442 = vsub.f32 %v279, %v2441
        %v2443 = vand.u32 %v2442, 4294901760
        %v2444 = vsub.f32 %v2442, %v2443
        %v2445 = vand.u32 %v2444, 4294901760
        %2446 = vmatpush.msra.mxu0 %v2445
        %v2447 = vand.u32 %v277, 4294901760
        %v2448 = vsub.f32 %v277, %v2447
        %v2449 = vand.u32 %v2448, 4294901760
        %v2450 = vsub.f32 %v2448, %v2449
        %v2451 = vand.u32 %v2450, 4294901760
        %2452 = vmatpush.msra.mxu0 %v2451
        %v2453 = vand.u32 %v275, 4294901760
        %v2454 = vsub.f32 %v275, %v2453
        %v2455 = vand.u32 %v2454, 4294901760
        %v2456 = vsub.f32 %v2454, %v2455
        %v2457 = vand.u32 %v2456, 4294901760
        %2458 = vmatpush.msra.mxu0 %v2457
        %v2459 = vand.u32 %v598, 4294901760
        %2460 = vmatmul.f32.gmra.mxu0 %v2459
        %v2461 = vpop.f32.mrf.mxu0
        %v2462 = vadd.f32 %v2361, %v2461
        %2463 = vdwg.mxu0
        %v2464 = vand.u32 %v305, 4294901760
        %v2465 = vsub.f32 %v305, %v2464
        %2466 = vmatpush.msra.mxu0 %v2465
        %v2467 = vand.u32 %v303, 4294901760
        %v2468 = vsub.f32 %v303, %v2467
        %2469 = vmatpush.msra.mxu0 %v2468
        %v2470 = vand.u32 %v301, 4294901760
        %v2471 = vsub.f32 %v301, %v2470
        %2472 = vmatpush.msra.mxu0 %v2471
        %v2473 = vand.u32 %v299, 4294901760
        %v2474 = vsub.f32 %v299, %v2473
        %2475 = vmatpush.msra.mxu0 %v2474
        %v2476 = vand.u32 %v297, 4294901760
        %v2477 = vsub.f32 %v297, %v2476
        %2478 = vmatpush.msra.mxu0 %v2477
        %v2479 = vand.u32 %v295, 4294901760
        %v2480 = vsub.f32 %v295, %v2479
        %2481 = vmatpush.msra.mxu0 %v2480
        %v2482 = vand.u32 %v293, 4294901760
        %v2483 = vsub.f32 %v293, %v2482
        %2484 = vmatpush.msra.mxu0 %v2483
        %v2485 = vand.u32 %v291, 4294901760
        %v2486 = vsub.f32 %v291, %v2485
        %2487 = vmatpush.msra.mxu0 %v2486
        %v2488 = vand.u32 %v289, 4294901760
        %v2489 = vsub.f32 %v289, %v2488
        %2490 = vmatpush.msra.mxu0 %v2489
        %v2491 = vand.u32 %v287, 4294901760
        %v2492 = vsub.f32 %v287, %v2491
        %2493 = vmatpush.msra.mxu0 %v2492
        %v2494 = vand.u32 %v285, 4294901760
        %v2495 = vsub.f32 %v285, %v2494
        %2496 = vmatpush.msra.mxu0 %v2495
        %v2497 = vand.u32 %v283, 4294901760
        %v2498 = vsub.f32 %v283, %v2497
        %2499 = vmatpush.msra.mxu0 %v2498
        %v2500 = vand.u32 %v281, 4294901760
        %v2501 = vsub.f32 %v281, %v2500
        %2502 = vmatpush.msra.mxu0 %v2501
        %v2503 = vand.u32 %v279, 4294901760
        %v2504 = vsub.f32 %v279, %v2503
        %2505 = vmatpush.msra.mxu0 %v2504
        %v2506 = vand.u32 %v277, 4294901760
        %v2507 = vsub.f32 %v277, %v2506
        %2508 = vmatpush.msra.mxu0 %v2507
        %v2509 = vand.u32 %v275, 4294901760
        %v2510 = vsub.f32 %v275, %v2509
        %2511 = vmatpush.msra.mxu0 %v2510
        %v2512 = vand.u32 %v598, 4294901760
        %v2513 = vsub.f32 %v598, %v2512
        %2514 = vmatmul.f32.gmra.mxu0 %v2513
        %v2515 = vpop.f32.mrf.mxu0
        %v2516 = vadd.f32 %v2462, %v2515
        %2517 = vdwg.mxu0
        %v2518 = vand.u32 %v305, 4294901760
        %2519 = vmatpush.msra.mxu0 %v2518
        %v2520 = vand.u32 %v303, 4294901760
        %2521 = vmatpush.msra.mxu0 %v2520
        %v2522 = vand.u32 %v301, 4294901760
        %2523 = vmatpush.msra.mxu0 %v2522
        %v2524 = vand.u32 %v299, 4294901760
        %2525 = vmatpush.msra.mxu0 %v2524
        %v2526 = vand.u32 %v297, 4294901760
        %2527 = vmatpush.msra.mxu0 %v2526
        %v2528 = vand.u32 %v295, 4294901760
        %2529 = vmatpush.msra.mxu0 %v2528
        %v2530 = vand.u32 %v293, 4294901760
        %2531 = vmatpush.msra.mxu0 %v2530
        %v2532 = vand.u32 %v291, 4294901760
        %2533 = vmatpush.msra.mxu0 %v2532
        %v2534 = vand.u32 %v289, 4294901760
        %2535 = vmatpush.msra.mxu0 %v2534
        %v2536 = vand.u32 %v287, 4294901760
        %2537 = vmatpush.msra.mxu0 %v2536
        %v2538 = vand.u32 %v285, 4294901760
        %2539 = vmatpush.msra.mxu0 %v2538
        %v2540 = vand.u32 %v283, 4294901760
        %2541 = vmatpush.msra.mxu0 %v2540
        %v2542 = vand.u32 %v281, 4294901760
        %2543 = vmatpush.msra.mxu0 %v2542
        %v2544 = vand.u32 %v279, 4294901760
        %2545 = vmatpush.msra.mxu0 %v2544
        %v2546 = vand.u32 %v277, 4294901760
        %2547 = vmatpush.msra.mxu0 %v2546
        %v2548 = vand.u32 %v275, 4294901760
        %2549 = vmatpush.msra.mxu0 %v2548
        %v2550 = vand.u32 %v598, 4294901760
        %v2551 = vsub.f32 %v598, %v2550
        %v2552 = vand.u32 %v2551, 4294901760
        %2553 = vmatmul.f32.gmra.mxu0 %v2552
        %v2554 = vpop.f32.mrf.mxu0
        %v2555 = vadd.f32 %v2516, %v2554
        %2556 = vdwg.mxu0
        %v2557 = vand.u32 %v305, 4294901760
        %v2558 = vsub.f32 %v305, %v2557
        %v2559 = vand.u32 %v2558, 4294901760
        %2560 = vmatpush.msra.mxu0 %v2559
        %v2561 = vand.u32 %v303, 4294901760
        %v2562 = vsub.f32 %v303, %v2561
        %v2563 = vand.u32 %v2562, 4294901760
        %2564 = vmatpush.msra.mxu0 %v2563
        %v2565 = vand.u32 %v301, 4294901760
        %v2566 = vsub.f32 %v301, %v2565
        %v2567 = vand.u32 %v2566, 4294901760
        %2568 = vmatpush.msra.mxu0 %v2567
        %v2569 = vand.u32 %v299, 4294901760
        %v2570 = vsub.f32 %v299, %v2569
        %v2571 = vand.u32 %v2570, 4294901760
        %2572 = vmatpush.msra.mxu0 %v2571
        %v2573 = vand.u32 %v297, 4294901760
        %v2574 = vsub.f32 %v297, %v2573
        %v2575 = vand.u32 %v2574, 4294901760
        %2576 = vmatpush.msra.mxu0 %v2575
        %v2577 = vand.u32 %v295, 4294901760
        %v2578 = vsub.f32 %v295, %v2577
        %v2579 = vand.u32 %v2578, 4294901760
        %2580 = vmatpush.msra.mxu0 %v2579
        %v2581 = vand.u32 %v293, 4294901760
        %v2582 = vsub.f32 %v293, %v2581
        %v2583 = vand.u32 %v2582, 4294901760
        %2584 = vmatpush.msra.mxu0 %v2583
        %v2585 = vand.u32 %v291, 4294901760
        %v2586 = vsub.f32 %v291, %v2585
        %v2587 = vand.u32 %v2586, 4294901760
        %2588 = vmatpush.msra.mxu0 %v2587
        %v2589 = vand.u32 %v289, 4294901760
        %v2590 = vsub.f32 %v289, %v2589
        %v2591 = vand.u32 %v2590, 4294901760
        %2592 = vmatpush.msra.mxu0 %v2591
        %v2593 = vand.u32 %v287, 4294901760
        %v2594 = vsub.f32 %v287, %v2593
        %v2595 = vand.u32 %v2594, 4294901760
        %2596 = vmatpush.msra.mxu0 %v2595
        %v2597 = vand.u32 %v285, 4294901760
        %v2598 = vsub.f32 %v285, %v2597
        %v2599 = vand.u32 %v2598, 4294901760
        %2600 = vmatpush.msra.mxu0 %v2599
        %v2601 = vand.u32 %v283, 4294901760
        %v2602 = vsub.f32 %v283, %v2601
        %v2603 = vand.u32 %v2602, 4294901760
        %2604 = vmatpush.msra.mxu0 %v2603
        %v2605 = vand.u32 %v281, 4294901760
        %v2606 = vsub.f32 %v281, %v2605
        %v2607 = vand.u32 %v2606, 4294901760
        %2608 = vmatpush.msra.mxu0 %v2607
        %v2609 = vand.u32 %v279, 4294901760
        %v2610 = vsub.f32 %v279, %v2609
        %v2611 = vand.u32 %v2610, 4294901760
        %2612 = vmatpush.msra.mxu0 %v2611
        %v2613 = vand.u32 %v277, 4294901760
        %v2614 = vsub.f32 %v277, %v2613
        %v2615 = vand.u32 %v2614, 4294901760
        %2616 = vmatpush.msra.mxu0 %v2615
        %v2617 = vand.u32 %v275, 4294901760
        %v2618 = vsub.f32 %v275, %v2617
        %v2619 = vand.u32 %v2618, 4294901760
        %2620 = vmatpush.msra.mxu0 %v2619
        %v2621 = vand.u32 %v598, 4294901760
        %2622 = vmatmul.f32.gmra.mxu0 %v2621
        %v2623 = vpop.f32.mrf.mxu0
        %v2624 = vadd.f32 %v2555, %v2623
        %2625 = vdwg.mxu0
        %v2626 = vand.u32 %v305, 4294901760
        %2627 = vmatpush.msra.mxu0 %v2626
        %v2628 = vand.u32 %v303, 4294901760
        %2629 = vmatpush.msra.mxu0 %v2628
        %v2630 = vand.u32 %v301, 4294901760
        %2631 = vmatpush.msra.mxu0 %v2630
        %v2632 = vand.u32 %v299, 4294901760
        %2633 = vmatpush.msra.mxu0 %v2632
        %v2634 = vand.u32 %v297, 4294901760
        %2635 = vmatpush.msra.mxu0 %v2634
        %v2636 = vand.u32 %v295, 4294901760
        %2637 = vmatpush.msra.mxu0 %v2636
        %v2638 = vand.u32 %v293, 4294901760
        %2639 = vmatpush.msra.mxu0 %v2638
        %v2640 = vand.u32 %v291, 4294901760
        %2641 = vmatpush.msra.mxu0 %v2640
        %v2642 = vand.u32 %v289, 4294901760
        %2643 = vmatpush.msra.mxu0 %v2642
        %v2644 = vand.u32 %v287, 4294901760
        %2645 = vmatpush.msra.mxu0 %v2644
        %v2646 = vand.u32 %v285, 4294901760
        %2647 = vmatpush.msra.mxu0 %v2646
        %v2648 = vand.u32 %v283, 4294901760
        %2649 = vmatpush.msra.mxu0 %v2648
        %v2650 = vand.u32 %v281, 4294901760
        %2651 = vmatpush.msra.mxu0 %v2650
        %v2652 = vand.u32 %v279, 4294901760
        %2653 = vmatpush.msra.mxu0 %v2652
        %v2654 = vand.u32 %v277, 4294901760
        %2655 = vmatpush.msra.mxu0 %v2654
        %v2656 = vand.u32 %v275, 4294901760
        %2657 = vmatpush.msra.mxu0 %v2656
        %v2658 = vand.u32 %v598, 4294901760
        %2659 = vmatmul.f32.gmra.mxu0 %v2658
        %v2660 = vpop.f32.mrf.mxu0
        %v2661 = vadd.f32 %v2624, %v2660
        %2662 = vdwg.mxu0
        %v2663 = vand.u32 %v274, 4294901760
        %2664 = vmatpush.msra.mxu0 %v2663
        %v2665 = vand.u32 %v272, 4294901760
        %2666 = vmatpush.msra.mxu0 %v2665
        %v2667 = vand.u32 %v270, 4294901760
        %2668 = vmatpush.msra.mxu0 %v2667
        %v2669 = vand.u32 %v268, 4294901760
        %2670 = vmatpush.msra.mxu0 %v2669
        %v2671 = vand.u32 %v266, 4294901760
        %2672 = vmatpush.msra.mxu0 %v2671
        %v2673 = vand.u32 %v264, 4294901760
        %2674 = vmatpush.msra.mxu0 %v2673
        %v2675 = vand.u32 %v262, 4294901760
        %2676 = vmatpush.msra.mxu0 %v2675
        %v2677 = vand.u32 %v260, 4294901760
        %2678 = vmatpush.msra.mxu0 %v2677
        %v2679 = vand.u32 %v258, 4294901760
        %2680 = vmatpush.msra.mxu0 %v2679
        %v2681 = vand.u32 %v256, 4294901760
        %2682 = vmatpush.msra.mxu0 %v2681
        %v2683 = vand.u32 %v254, 4294901760
        %2684 = vmatpush.msra.mxu0 %v2683
        %v2685 = vand.u32 %v252, 4294901760
        %2686 = vmatpush.msra.mxu0 %v2685
        %v2687 = vand.u32 %v250, 4294901760
        %2688 = vmatpush.msra.mxu0 %v2687
        %v2689 = vand.u32 %v248, 4294901760
        %2690 = vmatpush.msra.mxu0 %v2689
        %v2691 = vand.u32 %v246, 4294901760
        %2692 = vmatpush.msra.mxu0 %v2691
        %v2693 = vand.u32 %v244, 4294901760
        %2694 = vmatpush.msra.mxu0 %v2693
        %v2695 = vand.u32 %v597, 4294901760
        %v2696 = vsub.f32 %v597, %v2695
        %v2697 = vand.u32 %v2696, 4294901760
        %v2698 = vsub.f32 %v2696, %v2697
        %v2699 = vand.u32 %v2698, 4294901760
        %2700 = vmatmul.f32.gmra.mxu0 %v2699
        %v2701 = vpop.f32.mrf.mxu0
        %v2702 = vadd.f32 %v1979, %v2701
        %2703 = vdwg.mxu0
        %v2704 = vand.u32 %v274, 4294901760
        %v2705 = vsub.f32 %v274, %v2704
        %v2706 = vand.u32 %v2705, 4294901760
        %v2707 = vsub.f32 %v2705, %v2706
        %v2708 = vand.u32 %v2707, 4294901760
        %2709 = vmatpush.msra.mxu0 %v2708
        %v2710 = vand.u32 %v272, 4294901760
        %v2711 = vsub.f32 %v272, %v2710
        %v2712 = vand.u32 %v2711, 4294901760
        %v2713 = vsub.f32 %v2711, %v2712
        %v2714 = vand.u32 %v2713, 4294901760
        %2715 = vmatpush.msra.mxu0 %v2714
        %v2716 = vand.u32 %v270, 4294901760
        %v2717 = vsub.f32 %v270, %v2716
        %v2718 = vand.u32 %v2717, 4294901760
        %v2719 = vsub.f32 %v2717, %v2718
        %v2720 = vand.u32 %v2719, 4294901760
        %2721 = vmatpush.msra.mxu0 %v2720
        %v2722 = vand.u32 %v268, 4294901760
        %v2723 = vsub.f32 %v268, %v2722
        %v2724 = vand.u32 %v2723, 4294901760
        %v2725 = vsub.f32 %v2723, %v2724
        %v2726 = vand.u32 %v2725, 4294901760
        %2727 = vmatpush.msra.mxu0 %v2726
        %v2728 = vand.u32 %v266, 4294901760
        %v2729 = vsub.f32 %v266, %v2728
        %v2730 = vand.u32 %v2729, 4294901760
        %v2731 = vsub.f32 %v2729, %v2730
        %v2732 = vand.u32 %v2731, 4294901760
        %2733 = vmatpush.msra.mxu0 %v2732
        %v2734 = vand.u32 %v264, 4294901760
        %v2735 = vsub.f32 %v264, %v2734
        %v2736 = vand.u32 %v2735, 4294901760
        %v2737 = vsub.f32 %v2735, %v2736
        %v2738 = vand.u32 %v2737, 4294901760
        %2739 = vmatpush.msra.mxu0 %v2738
        %v2740 = vand.u32 %v262, 4294901760
        %v2741 = vsub.f32 %v262, %v2740
        %v2742 = vand.u32 %v2741, 4294901760
        %v2743 = vsub.f32 %v2741, %v2742
        %v2744 = vand.u32 %v2743, 4294901760
        %2745 = vmatpush.msra.mxu0 %v2744
        %v2746 = vand.u32 %v260, 4294901760
        %v2747 = vsub.f32 %v260, %v2746
        %v2748 = vand.u32 %v2747, 4294901760
        %v2749 = vsub.f32 %v2747, %v2748
        %v2750 = vand.u32 %v2749, 4294901760
        %2751 = vmatpush.msra.mxu0 %v2750
        %v2752 = vand.u32 %v258, 4294901760
        %v2753 = vsub.f32 %v258, %v2752
        %v2754 = vand.u32 %v2753, 4294901760
        %v2755 = vsub.f32 %v2753, %v2754
        %v2756 = vand.u32 %v2755, 4294901760
        %2757 = vmatpush.msra.mxu0 %v2756
        %v2758 = vand.u32 %v256, 4294901760
        %v2759 = vsub.f32 %v256, %v2758
        %v2760 = vand.u32 %v2759, 4294901760
        %v2761 = vsub.f32 %v2759, %v2760
        %v2762 = vand.u32 %v2761, 4294901760
        %2763 = vmatpush.msra.mxu0 %v2762
        %v2764 = vand.u32 %v254, 4294901760
        %v2765 = vsub.f32 %v254, %v2764
        %v2766 = vand.u32 %v2765, 4294901760
        %v2767 = vsub.f32 %v2765, %v2766
        %v2768 = vand.u32 %v2767, 4294901760
        %2769 = vmatpush.msra.mxu0 %v2768
        %v2770 = vand.u32 %v252, 4294901760
        %v2771 = vsub.f32 %v252, %v2770
        %v2772 = vand.u32 %v2771, 4294901760
        %v2773 = vsub.f32 %v2771, %v2772
        %v2774 = vand.u32 %v2773, 4294901760
        %2775 = vmatpush.msra.mxu0 %v2774
        %v2776 = vand.u32 %v250, 4294901760
        %v2777 = vsub.f32 %v250, %v2776
        %v2778 = vand.u32 %v2777, 4294901760
        %v2779 = vsub.f32 %v2777, %v2778
        %v2780 = vand.u32 %v2779, 4294901760
        %2781 = vmatpush.msra.mxu0 %v2780
        %v2782 = vand.u32 %v248, 4294901760
        %v2783 = vsub.f32 %v248, %v2782
        %v2784 = vand.u32 %v2783, 4294901760
        %v2785 = vsub.f32 %v2783, %v2784
        %v2786 = vand.u32 %v2785, 4294901760
        %2787 = vmatpush.msra.mxu0 %v2786
        %v2788 = vand.u32 %v246, 4294901760
        %v2789 = vsub.f32 %v246, %v2788
        %v2790 = vand.u32 %v2789, 4294901760
        %v2791 = vsub.f32 %v2789, %v2790
        %v2792 = vand.u32 %v2791, 4294901760
        %2793 = vmatpush.msra.mxu0 %v2792
        %v2794 = vand.u32 %v244, 4294901760
        %v2795 = vsub.f32 %v244, %v2794
        %v2796 = vand.u32 %v2795, 4294901760
        %v2797 = vsub.f32 %v2795, %v2796
        %v2798 = vand.u32 %v2797, 4294901760
        %2799 = vmatpush.msra.mxu0 %v2798
        %v2800 = vand.u32 %v597, 4294901760
        %2801 = vmatmul.f32.gmra.mxu0 %v2800
        %v2802 = vpop.f32.mrf.mxu0
        %v2803 = vadd.f32 %v2702, %v2802
        %2804 = vdwg.mxu0
        %v2805 = vand.u32 %v274, 4294901760
        %v2806 = vsub.f32 %v274, %v2805
        %2807 = vmatpush.msra.mxu0 %v2806
        %v2808 = vand.u32 %v272, 4294901760
        %v2809 = vsub.f32 %v272, %v2808
        %2810 = vmatpush.msra.mxu0 %v2809
        %v2811 = vand.u32 %v270, 4294901760
        %v2812 = vsub.f32 %v270, %v2811
        %2813 = vmatpush.msra.mxu0 %v2812
        %v2814 = vand.u32 %v268, 4294901760
        %v2815 = vsub.f32 %v268, %v2814
        %2816 = vmatpush.msra.mxu0 %v2815
        %v2817 = vand.u32 %v266, 4294901760
        %v2818 = vsub.f32 %v266, %v2817
        %2819 = vmatpush.msra.mxu0 %v2818
        %v2820 = vand.u32 %v264, 4294901760
        %v2821 = vsub.f32 %v264, %v2820
        %2822 = vmatpush.msra.mxu0 %v2821
        %v2823 = vand.u32 %v262, 4294901760
        %v2824 = vsub.f32 %v262, %v2823
        %2825 = vmatpush.msra.mxu0 %v2824
        %v2826 = vand.u32 %v260, 4294901760
        %v2827 = vsub.f32 %v260, %v2826
        %2828 = vmatpush.msra.mxu0 %v2827
        %v2829 = vand.u32 %v258, 4294901760
        %v2830 = vsub.f32 %v258, %v2829
        %2831 = vmatpush.msra.mxu0 %v2830
        %v2832 = vand.u32 %v256, 4294901760
        %v2833 = vsub.f32 %v256, %v2832
        %2834 = vmatpush.msra.mxu0 %v2833
        %v2835 = vand.u32 %v254, 4294901760
        %v2836 = vsub.f32 %v254, %v2835
        %2837 = vmatpush.msra.mxu0 %v2836
        %v2838 = vand.u32 %v252, 4294901760
        %v2839 = vsub.f32 %v252, %v2838
        %2840 = vmatpush.msra.mxu0 %v2839
        %v2841 = vand.u32 %v250, 4294901760
        %v2842 = vsub.f32 %v250, %v2841
        %2843 = vmatpush.msra.mxu0 %v2842
        %v2844 = vand.u32 %v248, 4294901760
        %v2845 = vsub.f32 %v248, %v2844
        %2846 = vmatpush.msra.mxu0 %v2845
        %v2847 = vand.u32 %v246, 4294901760
        %v2848 = vsub.f32 %v246, %v2847
        %2849 = vmatpush.msra.mxu0 %v2848
        %v2850 = vand.u32 %v244, 4294901760
        %v2851 = vsub.f32 %v244, %v2850
        %2852 = vmatpush.msra.mxu0 %v2851
        %v2853 = vand.u32 %v597, 4294901760
        %v2854 = vsub.f32 %v597, %v2853
        %2855 = vmatmul.f32.gmra.mxu0 %v2854
        %v2856 = vpop.f32.mrf.mxu0
        %v2857 = vadd.f32 %v2803, %v2856
        %2858 = vdwg.mxu0
        %v2859 = vand.u32 %v274, 4294901760
        %2860 = vmatpush.msra.mxu0 %v2859
        %v2861 = vand.u32 %v272, 4294901760
        %2862 = vmatpush.msra.mxu0 %v2861
        %v2863 = vand.u32 %v270, 4294901760
        %2864 = vmatpush.msra.mxu0 %v2863
        %v2865 = vand.u32 %v268, 4294901760
        %2866 = vmatpush.msra.mxu0 %v2865
        %v2867 = vand.u32 %v266, 4294901760
        %2868 = vmatpush.msra.mxu0 %v2867
        %v2869 = vand.u32 %v264, 4294901760
        %2870 = vmatpush.msra.mxu0 %v2869
        %v2871 = vand.u32 %v262, 4294901760
        %2872 = vmatpush.msra.mxu0 %v2871
        %v2873 = vand.u32 %v260, 4294901760
        %2874 = vmatpush.msra.mxu0 %v2873
        %v2875 = vand.u32 %v258, 4294901760
        %2876 = vmatpush.msra.mxu0 %v2875
        %v2877 = vand.u32 %v256, 4294901760
        %2878 = vmatpush.msra.mxu0 %v2877
        %v2879 = vand.u32 %v254, 4294901760
        %2880 = vmatpush.msra.mxu0 %v2879
        %v2881 = vand.u32 %v252, 4294901760
        %2882 = vmatpush.msra.mxu0 %v2881
        %v2883 = vand.u32 %v250, 4294901760
        %2884 = vmatpush.msra.mxu0 %v2883
        %v2885 = vand.u32 %v248, 4294901760
        %2886 = vmatpush.msra.mxu0 %v2885
        %v2887 = vand.u32 %v246, 4294901760
        %2888 = vmatpush.msra.mxu0 %v2887
        %v2889 = vand.u32 %v244, 4294901760
        %2890 = vmatpush.msra.mxu0 %v2889
        %v2891 = vand.u32 %v597, 4294901760
        %v2892 = vsub.f32 %v597, %v2891
        %v2893 = vand.u32 %v2892, 4294901760
        %2894 = vmatmul.f32.gmra.mxu0 %v2893
        %v2895 = vpop.f32.mrf.mxu0
        %v2896 = vadd.f32 %v2857, %v2895
        %2897 = vdwg.mxu0
        %v2898 = vand.u32 %v274, 4294901760
        %v2899 = vsub.f32 %v274, %v2898
        %v2900 = vand.u32 %v2899, 4294901760
        %2901 = vmatpush.msra.mxu0 %v2900
        %v2902 = vand.u32 %v272, 4294901760
        %v2903 = vsub.f32 %v272, %v2902
        %v2904 = vand.u32 %v2903, 4294901760
        %2905 = vmatpush.msra.mxu0 %v2904
        %v2906 = vand.u32 %v270, 4294901760
        %v2907 = vsub.f32 %v270, %v2906
        %v2908 = vand.u32 %v2907, 4294901760
        %2909 = vmatpush.msra.mxu0 %v2908
        %v2910 = vand.u32 %v268, 4294901760
        %v2911 = vsub.f32 %v268, %v2910
        %v2912 = vand.u32 %v2911, 4294901760
        %2913 = vmatpush.msra.mxu0 %v2912
        %v2914 = vand.u32 %v266, 4294901760
        %v2915 = vsub.f32 %v266, %v2914
        %v2916 = vand.u32 %v2915, 4294901760
        %2917 = vmatpush.msra.mxu0 %v2916
        %v2918 = vand.u32 %v264, 4294901760
        %v2919 = vsub.f32 %v264, %v2918
        %v2920 = vand.u32 %v2919, 4294901760
        %2921 = vmatpush.msra.mxu0 %v2920
        %v2922 = vand.u32 %v262, 4294901760
        %v2923 = vsub.f32 %v262, %v2922
        %v2924 = vand.u32 %v2923, 4294901760
        %2925 = vmatpush.msra.mxu0 %v2924
        %v2926 = vand.u32 %v260, 4294901760
        %v2927 = vsub.f32 %v260, %v2926
        %v2928 = vand.u32 %v2927, 4294901760
        %2929 = vmatpush.msra.mxu0 %v2928
        %v2930 = vand.u32 %v258, 4294901760
        %v2931 = vsub.f32 %v258, %v2930
        %v2932 = vand.u32 %v2931, 4294901760
        %2933 = vmatpush.msra.mxu0 %v2932
        %v2934 = vand.u32 %v256, 4294901760
        %v2935 = vsub.f32 %v256, %v2934
        %v2936 = vand.u32 %v2935, 4294901760
        %2937 = vmatpush.msra.mxu0 %v2936
        %v2938 = vand.u32 %v254, 4294901760
        %v2939 = vsub.f32 %v254, %v2938
        %v2940 = vand.u32 %v2939, 4294901760
        %2941 = vmatpush.msra.mxu0 %v2940
        %v2942 = vand.u32 %v252, 4294901760
        %v2943 = vsub.f32 %v252, %v2942
        %v2944 = vand.u32 %v2943, 4294901760
        %2945 = vmatpush.msra.mxu0 %v2944
        %v2946 = vand.u32 %v250, 4294901760
        %v2947 = vsub.f32 %v250, %v2946
        %v2948 = vand.u32 %v2947, 4294901760
        %2949 = vmatpush.msra.mxu0 %v2948
        %v2950 = vand.u32 %v248, 4294901760
        %v2951 = vsub.f32 %v248, %v2950
        %v2952 = vand.u32 %v2951, 4294901760
        %2953 = vmatpush.msra.mxu0 %v2952
        %v2954 = vand.u32 %v246, 4294901760
        %v2955 = vsub.f32 %v246, %v2954
        %v2956 = vand.u32 %v2955, 4294901760
        %2957 = vmatpush.msra.mxu0 %v2956
        %v2958 = vand.u32 %v244, 4294901760
        %v2959 = vsub.f32 %v244, %v2958
        %v2960 = vand.u32 %v2959, 4294901760
        %2961 = vmatpush.msra.mxu0 %v2960
        %v2962 = vand.u32 %v597, 4294901760
        %2963 = vmatmul.f32.gmra.mxu0 %v2962
        %v2964 = vpop.f32.mrf.mxu0
        %v2965 = vadd.f32 %v2896, %v2964
        %2966 = vdwg.mxu0
        %v2967 = vand.u32 %v274, 4294901760
        %2968 = vmatpush.msra.mxu0 %v2967
        %v2969 = vand.u32 %v272, 4294901760
        %2970 = vmatpush.msra.mxu0 %v2969
        %v2971 = vand.u32 %v270, 4294901760
        %2972 = vmatpush.msra.mxu0 %v2971
        %v2973 = vand.u32 %v268, 4294901760
        %2974 = vmatpush.msra.mxu0 %v2973
        %v2975 = vand.u32 %v266, 4294901760
        %2976 = vmatpush.msra.mxu0 %v2975
        %v2977 = vand.u32 %v264, 4294901760
        %2978 = vmatpush.msra.mxu0 %v2977
        %v2979 = vand.u32 %v262, 4294901760
        %2980 = vmatpush.msra.mxu0 %v2979
        %v2981 = vand.u32 %v260, 4294901760
        %2982 = vmatpush.msra.mxu0 %v2981
        %v2983 = vand.u32 %v258, 4294901760
        %2984 = vmatpush.msra.mxu0 %v2983
        %v2985 = vand.u32 %v256, 4294901760
        %2986 = vmatpush.msra.mxu0 %v2985
        %v2987 = vand.u32 %v254, 4294901760
        %2988 = vmatpush.msra.mxu0 %v2987
        %v2989 = vand.u32 %v252, 4294901760
        %2990 = vmatpush.msra.mxu0 %v2989
        %v2991 = vand.u32 %v250, 4294901760
        %2992 = vmatpush.msra.mxu0 %v2991
        %v2993 = vand.u32 %v248, 4294901760
        %2994 = vmatpush.msra.mxu0 %v2993
        %v2995 = vand.u32 %v246, 4294901760
        %2996 = vmatpush.msra.mxu0 %v2995
        %v2997 = vand.u32 %v244, 4294901760
        %2998 = vmatpush.msra.mxu0 %v2997
        %v2999 = vand.u32 %v597, 4294901760
        %3000 = vmatmul.f32.gmra.mxu0 %v2999
        %v3001 = vpop.f32.mrf.mxu0
        %v3002 = vadd.f32 %v2965, %v3001
        %3003 = vdwg.mxu0
        %v3004 = vand.u32 %v306, 4294901760
        %3005 = vmatpush.msra.mxu0 %v3004
        %v3006 = vand.u32 %v304, 4294901760
        %3007 = vmatpush.msra.mxu0 %v3006
        %v3008 = vand.u32 %v302, 4294901760
        %3009 = vmatpush.msra.mxu0 %v3008
        %v3010 = vand.u32 %v300, 4294901760
        %3011 = vmatpush.msra.mxu0 %v3010
        %v3012 = vand.u32 %v298, 4294901760
        %3013 = vmatpush.msra.mxu0 %v3012
        %v3014 = vand.u32 %v296, 4294901760
        %3015 = vmatpush.msra.mxu0 %v3014
        %v3016 = vand.u32 %v294, 4294901760
        %3017 = vmatpush.msra.mxu0 %v3016
        %v3018 = vand.u32 %v292, 4294901760
        %3019 = vmatpush.msra.mxu0 %v3018
        %v3020 = vand.u32 %v290, 4294901760
        %3021 = vmatpush.msra.mxu0 %v3020
        %v3022 = vand.u32 %v288, 4294901760
        %3023 = vmatpush.msra.mxu0 %v3022
        %v3024 = vand.u32 %v286, 4294901760
        %3025 = vmatpush.msra.mxu0 %v3024
        %v3026 = vand.u32 %v284, 4294901760
        %3027 = vmatpush.msra.mxu0 %v3026
        %v3028 = vand.u32 %v282, 4294901760
        %3029 = vmatpush.msra.mxu0 %v3028
        %v3030 = vand.u32 %v280, 4294901760
        %3031 = vmatpush.msra.mxu0 %v3030
        %v3032 = vand.u32 %v278, 4294901760
        %3033 = vmatpush.msra.mxu0 %v3032
        %v3034 = vand.u32 %v276, 4294901760
        %3035 = vmatpush.msra.mxu0 %v3034
        %v3036 = vand.u32 %v598, 4294901760
        %v3037 = vsub.f32 %v598, %v3036
        %v3038 = vand.u32 %v3037, 4294901760
        %v3039 = vsub.f32 %v3037, %v3038
        %v3040 = vand.u32 %v3039, 4294901760
        %3041 = vmatmul.f32.gmra.mxu0 %v3040
        %v3042 = vpop.f32.mrf.mxu0
        %v3043 = vadd.f32 %v3002, %v3042
        %3044 = vdwg.mxu0
        %v3045 = vand.u32 %v306, 4294901760
        %v3046 = vsub.f32 %v306, %v3045
        %v3047 = vand.u32 %v3046, 4294901760
        %v3048 = vsub.f32 %v3046, %v3047
        %v3049 = vand.u32 %v3048, 4294901760
        %3050 = vmatpush.msra.mxu0 %v3049
        %v3051 = vand.u32 %v304, 4294901760
        %v3052 = vsub.f32 %v304, %v3051
        %v3053 = vand.u32 %v3052, 4294901760
        %v3054 = vsub.f32 %v3052, %v3053
        %v3055 = vand.u32 %v3054, 4294901760
        %3056 = vmatpush.msra.mxu0 %v3055
        %v3057 = vand.u32 %v302, 4294901760
        %v3058 = vsub.f32 %v302, %v3057
        %v3059 = vand.u32 %v3058, 4294901760
        %v3060 = vsub.f32 %v3058, %v3059
        %v3061 = vand.u32 %v3060, 4294901760
        %3062 = vmatpush.msra.mxu0 %v3061
        %v3063 = vand.u32 %v300, 4294901760
        %v3064 = vsub.f32 %v300, %v3063
        %v3065 = vand.u32 %v3064, 4294901760
        %v3066 = vsub.f32 %v3064, %v3065
        %v3067 = vand.u32 %v3066, 4294901760
        %3068 = vmatpush.msra.mxu0 %v3067
        %v3069 = vand.u32 %v298, 4294901760
        %v3070 = vsub.f32 %v298, %v3069
        %v3071 = vand.u32 %v3070, 4294901760
        %v3072 = vsub.f32 %v3070, %v3071
        %v3073 = vand.u32 %v3072, 4294901760
        %3074 = vmatpush.msra.mxu0 %v3073
        %v3075 = vand.u32 %v296, 4294901760
        %v3076 = vsub.f32 %v296, %v3075
        %v3077 = vand.u32 %v3076, 4294901760
        %v3078 = vsub.f32 %v3076, %v3077
        %v3079 = vand.u32 %v3078, 4294901760
        %3080 = vmatpush.msra.mxu0 %v3079
        %v3081 = vand.u32 %v294, 4294901760
        %v3082 = vsub.f32 %v294, %v3081
        %v3083 = vand.u32 %v3082, 4294901760
        %v3084 = vsub.f32 %v3082, %v3083
        %v3085 = vand.u32 %v3084, 4294901760
        %3086 = vmatpush.msra.mxu0 %v3085
        %v3087 = vand.u32 %v292, 4294901760
        %v3088 = vsub.f32 %v292, %v3087
        %v3089 = vand.u32 %v3088, 4294901760
        %v3090 = vsub.f32 %v3088, %v3089
        %v3091 = vand.u32 %v3090, 4294901760
        %3092 = vmatpush.msra.mxu0 %v3091
        %v3093 = vand.u32 %v290, 4294901760
        %v3094 = vsub.f32 %v290, %v3093
        %v3095 = vand.u32 %v3094, 4294901760
        %v3096 = vsub.f32 %v3094, %v3095
        %v3097 = vand.u32 %v3096, 4294901760
        %3098 = vmatpush.msra.mxu0 %v3097
        %v3099 = vand.u32 %v288, 4294901760
        %v3100 = vsub.f32 %v288, %v3099
        %v3101 = vand.u32 %v3100, 4294901760
        %v3102 = vsub.f32 %v3100, %v3101
        %v3103 = vand.u32 %v3102, 4294901760
        %3104 = vmatpush.msra.mxu0 %v3103
        %v3105 = vand.u32 %v286, 4294901760
        %v3106 = vsub.f32 %v286, %v3105
        %v3107 = vand.u32 %v3106, 4294901760
        %v3108 = vsub.f32 %v3106, %v3107
        %v3109 = vand.u32 %v3108, 4294901760
        %3110 = vmatpush.msra.mxu0 %v3109
        %v3111 = vand.u32 %v284, 4294901760
        %v3112 = vsub.f32 %v284, %v3111
        %v3113 = vand.u32 %v3112, 4294901760
        %v3114 = vsub.f32 %v3112, %v3113
        %v3115 = vand.u32 %v3114, 4294901760
        %3116 = vmatpush.msra.mxu0 %v3115
        %v3117 = vand.u32 %v282, 4294901760
        %v3118 = vsub.f32 %v282, %v3117
        %v3119 = vand.u32 %v3118, 4294901760
        %v3120 = vsub.f32 %v3118, %v3119
        %v3121 = vand.u32 %v3120, 4294901760
        %3122 = vmatpush.msra.mxu0 %v3121
        %v3123 = vand.u32 %v280, 4294901760
        %v3124 = vsub.f32 %v280, %v3123
        %v3125 = vand.u32 %v3124, 4294901760
        %v3126 = vsub.f32 %v3124, %v3125
        %v3127 = vand.u32 %v3126, 4294901760
        %3128 = vmatpush.msra.mxu0 %v3127
        %v3129 = vand.u32 %v278, 4294901760
        %v3130 = vsub.f32 %v278, %v3129
        %v3131 = vand.u32 %v3130, 4294901760
        %v3132 = vsub.f32 %v3130, %v3131
        %v3133 = vand.u32 %v3132, 4294901760
        %3134 = vmatpush.msra.mxu0 %v3133
        %v3135 = vand.u32 %v276, 4294901760
        %v3136 = vsub.f32 %v276, %v3135
        %v3137 = vand.u32 %v3136, 4294901760
        %v3138 = vsub.f32 %v3136, %v3137
        %v3139 = vand.u32 %v3138, 4294901760
        %3140 = vmatpush.msra.mxu0 %v3139
        %v3141 = vand.u32 %v598, 4294901760
        %3142 = vmatmul.f32.gmra.mxu0 %v3141
        %v3143 = vpop.f32.mrf.mxu0
        %v3144 = vadd.f32 %v3043, %v3143
        %3145 = vdwg.mxu0
        %v3146 = vand.u32 %v306, 4294901760
        %v3147 = vsub.f32 %v306, %v3146
        %3148 = vmatpush.msra.mxu0 %v3147
        %v3149 = vand.u32 %v304, 4294901760
        %v3150 = vsub.f32 %v304, %v3149
        %3151 = vmatpush.msra.mxu0 %v3150
        %v3152 = vand.u32 %v302, 4294901760
        %v3153 = vsub.f32 %v302, %v3152
        %3154 = vmatpush.msra.mxu0 %v3153
        %v3155 = vand.u32 %v300, 4294901760
        %v3156 = vsub.f32 %v300, %v3155
        %3157 = vmatpush.msra.mxu0 %v3156
        %v3158 = vand.u32 %v298, 4294901760
        %v3159 = vsub.f32 %v298, %v3158
        %3160 = vmatpush.msra.mxu0 %v3159
        %v3161 = vand.u32 %v296, 4294901760
        %v3162 = vsub.f32 %v296, %v3161
        %3163 = vmatpush.msra.mxu0 %v3162
        %v3164 = vand.u32 %v294, 4294901760
        %v3165 = vsub.f32 %v294, %v3164
        %3166 = vmatpush.msra.mxu0 %v3165
        %v3167 = vand.u32 %v292, 4294901760
        %v3168 = vsub.f32 %v292, %v3167
        %3169 = vmatpush.msra.mxu0 %v3168
        %v3170 = vand.u32 %v290, 4294901760
        %v3171 = vsub.f32 %v290, %v3170
        %3172 = vmatpush.msra.mxu0 %v3171
        %v3173 = vand.u32 %v288, 4294901760
        %v3174 = vsub.f32 %v288, %v3173
        %3175 = vmatpush.msra.mxu0 %v3174
        %v3176 = vand.u32 %v286, 4294901760
        %v3177 = vsub.f32 %v286, %v3176
        %3178 = vmatpush.msra.mxu0 %v3177
        %v3179 = vand.u32 %v284, 4294901760
        %v3180 = vsub.f32 %v284, %v3179
        %3181 = vmatpush.msra.mxu0 %v3180
        %v3182 = vand.u32 %v282, 4294901760
        %v3183 = vsub.f32 %v282, %v3182
        %3184 = vmatpush.msra.mxu0 %v3183
        %v3185 = vand.u32 %v280, 4294901760
        %v3186 = vsub.f32 %v280, %v3185
        %3187 = vmatpush.msra.mxu0 %v3186
        %v3188 = vand.u32 %v278, 4294901760
        %v3189 = vsub.f32 %v278, %v3188
        %3190 = vmatpush.msra.mxu0 %v3189
        %v3191 = vand.u32 %v276, 4294901760
        %v3192 = vsub.f32 %v276, %v3191
        %3193 = vmatpush.msra.mxu0 %v3192
        %v3194 = vand.u32 %v598, 4294901760
        %v3195 = vsub.f32 %v598, %v3194
        %3196 = vmatmul.f32.gmra.mxu0 %v3195
        %v3197 = vpop.f32.mrf.mxu0
        %v3198 = vadd.f32 %v3144, %v3197
        %3199 = vdwg.mxu0
        %v3200 = vand.u32 %v306, 4294901760
        %3201 = vmatpush.msra.mxu0 %v3200
        %v3202 = vand.u32 %v304, 4294901760
        %3203 = vmatpush.msra.mxu0 %v3202
        %v3204 = vand.u32 %v302, 4294901760
        %3205 = vmatpush.msra.mxu0 %v3204
        %v3206 = vand.u32 %v300, 4294901760
        %3207 = vmatpush.msra.mxu0 %v3206
        %v3208 = vand.u32 %v298, 4294901760
        %3209 = vmatpush.msra.mxu0 %v3208
        %v3210 = vand.u32 %v296, 4294901760
        %3211 = vmatpush.msra.mxu0 %v3210
        %v3212 = vand.u32 %v294, 4294901760
        %3213 = vmatpush.msra.mxu0 %v3212
        %v3214 = vand.u32 %v292, 4294901760
        %3215 = vmatpush.msra.mxu0 %v3214
        %v3216 = vand.u32 %v290, 4294901760
        %3217 = vmatpush.msra.mxu0 %v3216
        %v3218 = vand.u32 %v288, 4294901760
        %3219 = vmatpush.msra.mxu0 %v3218
        %v3220 = vand.u32 %v286, 4294901760
        %3221 = vmatpush.msra.mxu0 %v3220
        %v3222 = vand.u32 %v284, 4294901760
        %3223 = vmatpush.msra.mxu0 %v3222
        %v3224 = vand.u32 %v282, 4294901760
        %3225 = vmatpush.msra.mxu0 %v3224
        %v3226 = vand.u32 %v280, 4294901760
        %3227 = vmatpush.msra.mxu0 %v3226
        %v3228 = vand.u32 %v278, 4294901760
        %3229 = vmatpush.msra.mxu0 %v3228
        %v3230 = vand.u32 %v276, 4294901760
        %3231 = vmatpush.msra.mxu0 %v3230
        %v3232 = vand.u32 %v598, 4294901760
        %v3233 = vsub.f32 %v598, %v3232
        %v3234 = vand.u32 %v3233, 4294901760
        %3235 = vmatmul.f32.gmra.mxu0 %v3234
        %v3236 = vpop.f32.mrf.mxu0
        %v3237 = vadd.f32 %v3198, %v3236
        %3238 = vdwg.mxu0
        %v3239 = vand.u32 %v306, 4294901760
        %v3240 = vsub.f32 %v306, %v3239
        %v3241 = vand.u32 %v3240, 4294901760
        %3242 = vmatpush.msra.mxu0 %v3241
        %v3243 = vand.u32 %v304, 4294901760
        %v3244 = vsub.f32 %v304, %v3243
        %v3245 = vand.u32 %v3244, 4294901760
        %3246 = vmatpush.msra.mxu0 %v3245
        %v3247 = vand.u32 %v302, 4294901760
        %v3248 = vsub.f32 %v302, %v3247
        %v3249 = vand.u32 %v3248, 4294901760
        %3250 = vmatpush.msra.mxu0 %v3249
        %v3251 = vand.u32 %v300, 4294901760
        %v3252 = vsub.f32 %v300, %v3251
        %v3253 = vand.u32 %v3252, 4294901760
        %3254 = vmatpush.msra.mxu0 %v3253
        %v3255 = vand.u32 %v298, 4294901760
        %v3256 = vsub.f32 %v298, %v3255
        %v3257 = vand.u32 %v3256, 4294901760
        %3258 = vmatpush.msra.mxu0 %v3257
        %v3259 = vand.u32 %v296, 4294901760
        %v3260 = vsub.f32 %v296, %v3259
        %v3261 = vand.u32 %v3260, 4294901760
        %3262 = vmatpush.msra.mxu0 %v3261
        %v3263 = vand.u32 %v294, 4294901760
        %v3264 = vsub.f32 %v294, %v3263
        %v3265 = vand.u32 %v3264, 4294901760
        %3266 = vmatpush.msra.mxu0 %v3265
        %v3267 = vand.u32 %v292, 4294901760
        %v3268 = vsub.f32 %v292, %v3267
        %v3269 = vand.u32 %v3268, 4294901760
        %3270 = vmatpush.msra.mxu0 %v3269
        %v3271 = vand.u32 %v290, 4294901760
        %v3272 = vsub.f32 %v290, %v3271
        %v3273 = vand.u32 %v3272, 4294901760
        %3274 = vmatpush.msra.mxu0 %v3273
        %v3275 = vand.u32 %v288, 4294901760
        %v3276 = vsub.f32 %v288, %v3275
        %v3277 = vand.u32 %v3276, 4294901760
        %3278 = vmatpush.msra.mxu0 %v3277
        %v3279 = vand.u32 %v286, 4294901760
        %v3280 = vsub.f32 %v286, %v3279
        %v3281 = vand.u32 %v3280, 4294901760
        %3282 = vmatpush.msra.mxu0 %v3281
        %v3283 = vand.u32 %v284, 4294901760
        %v3284 = vsub.f32 %v284, %v3283
        %v3285 = vand.u32 %v3284, 4294901760
        %3286 = vmatpush.msra.mxu0 %v3285
        %v3287 = vand.u32 %v282, 4294901760
        %v3288 = vsub.f32 %v282, %v3287
        %v3289 = vand.u32 %v3288, 4294901760
        %3290 = vmatpush.msra.mxu0 %v3289
        %v3291 = vand.u32 %v280, 4294901760
        %v3292 = vsub.f32 %v280, %v3291
        %v3293 = vand.u32 %v3292, 4294901760
        %3294 = vmatpush.msra.mxu0 %v3293
        %v3295 = vand.u32 %v278, 4294901760
        %v3296 = vsub.f32 %v278, %v3295
        %v3297 = vand.u32 %v3296, 4294901760
        %3298 = vmatpush.msra.mxu0 %v3297
        %v3299 = vand.u32 %v276, 4294901760
        %v3300 = vsub.f32 %v276, %v3299
        %v3301 = vand.u32 %v3300, 4294901760
        %3302 = vmatpush.msra.mxu0 %v3301
        %v3303 = vand.u32 %v598, 4294901760
        %3304 = vmatmul.f32.gmra.mxu0 %v3303
        %v3305 = vpop.f32.mrf.mxu0
        %v3306 = vadd.f32 %v3237, %v3305
        %3307 = vdwg.mxu0
        %v3308 = vand.u32 %v306, 4294901760
        %3309 = vmatpush.msra.mxu0 %v3308
        %v3310 = vand.u32 %v304, 4294901760
        %3311 = vmatpush.msra.mxu0 %v3310
        %v3312 = vand.u32 %v302, 4294901760
        %3313 = vmatpush.msra.mxu0 %v3312
        %v3314 = vand.u32 %v300, 4294901760
        %3315 = vmatpush.msra.mxu0 %v3314
        %v3316 = vand.u32 %v298, 4294901760
        %3317 = vmatpush.msra.mxu0 %v3316
        %v3318 = vand.u32 %v296, 4294901760
        %3319 = vmatpush.msra.mxu0 %v3318
        %v3320 = vand.u32 %v294, 4294901760
        %3321 = vmatpush.msra.mxu0 %v3320
        %v3322 = vand.u32 %v292, 4294901760
        %3323 = vmatpush.msra.mxu0 %v3322
        %v3324 = vand.u32 %v290, 4294901760
        %3325 = vmatpush.msra.mxu0 %v3324
        %v3326 = vand.u32 %v288, 4294901760
        %3327 = vmatpush.msra.mxu0 %v3326
        %v3328 = vand.u32 %v286, 4294901760
        %3329 = vmatpush.msra.mxu0 %v3328
        %v3330 = vand.u32 %v284, 4294901760
        %3331 = vmatpush.msra.mxu0 %v3330
        %v3332 = vand.u32 %v282, 4294901760
        %3333 = vmatpush.msra.mxu0 %v3332
        %v3334 = vand.u32 %v280, 4294901760
        %3335 = vmatpush.msra.mxu0 %v3334
        %v3336 = vand.u32 %v278, 4294901760
        %3337 = vmatpush.msra.mxu0 %v3336
        %v3338 = vand.u32 %v276, 4294901760
        %3339 = vmatpush.msra.mxu0 %v3338
        %v3340 = vand.u32 %v598, 4294901760
        %3341 = vmatmul.f32.gmra.mxu0 %v3340
        %v3342 = vpop.f32.mrf.mxu0
        %v3343 = vadd.f32 %v3306, %v3342
        %3344 = vdwg.mxu0
        %v3345 = vxor.u32 %v2661, 2147483648
        %v3346 = vxor.u32 %v3343, 2147483648
        %v3347 = vmul.f32 %v3345, 1.442695
        %v3348 = vpow.pop %v3347
        %v3349 = vmul.f32 %v3346, 1.442695
        %v3350 = vpow.pop %v3349
        %v3351 = vadd.f32 %v3348, 1.0
        %v3352 = vadd.f32 %v3350, 1.0
        %v3353 = vrcp.pop %v3351
        %v3354 = vmul.f32 %v3351, %v3353
        %v3355 = vsub.f32 1.0, %v3354
        %v3356 = vmul.f32 %v3353, %v3355
        %v3357 = vadd.f32 %v3353, %v3356
        %vm3358 = vweird.f32 %v3351
        %vm3359 = vweird.f32 %v3353
        %vm3360 = vmor %vm3358, %vm3359
        %v3361 = vsel %vm3360, %v3353, %v3357
        %v3362 = vand.u32 2147483647, %v3351
        %vm3363 = vcmp.eq.f32.partialorder %v3362, 8.507059e+37
        %v3364 = vand.u32 %v3351, 2147483648
        %v3365 = vor.u32 1.1754944e-38, %v3364
        %v3366 = vsel %vm3363, %v3365, %v3361
        %v3367 = vmul.f32 1.0, %v3366
        %v3368 = vrcp.pop %v3352
        %v3369 = vmul.f32 %v3352, %v3368
        %v3370 = vsub.f32 1.0, %v3369
        %v3371 = vmul.f32 %v3368, %v3370
        %v3372 = vadd.f32 %v3368, %v3371
        %vm3373 = vweird.f32 %v3352
        %vm3374 = vweird.f32 %v3368
        %vm3375 = vmor %vm3373, %vm3374
        %v3376 = vsel %vm3375, %v3368, %v3372
        %v3377 = vand.u32 2147483647, %v3352
        %vm3378 = vcmp.eq.f32.partialorder %v3377, 8.507059e+37
        %v3379 = vand.u32 %v3352, 2147483648
        %v3380 = vor.u32 1.1754944e-38, %v3379
        %v3381 = vsel %vm3378, %v3380, %v3376
        %v3382 = vmul.f32 1.0, %v3381
        %v3383 = vperm.slane %v3367, 0
        %v3384 = vperm.slane %v3382, 0
        %v3385 = vmul.f32 %v564, %v3383
        %v3386 = vmul.f32 %v565, %v3384
        %v3387 = vmul.f32 %v566, %v3383
        %v3388 = vmul.f32 %v567, %v3384
        %v3389 = vmul.f32 %v568, %v3383
        %v3390 = vmul.f32 %v569, %v3384
        %v3391 = vmul.f32 %v570, %v3383
        %v3392 = vmul.f32 %v571, %v3384
        %3393 = vst [vmem:[%s234] sm:$0xff] %v3385
        %3394 = vst [vmem:[%s234 + $0x8] sm:$0xff] %v3386
        %3395 = vst [vmem:[%s234 + $0x10] sm:$0xff] %v3387
        %3396 = vst [vmem:[%s234 + $0x18] sm:$0xff] %v3388
        %3397 = vst [vmem:[%s234 + $0x20] sm:$0xff] %v3389
        %3398 = vst [vmem:[%s234 + $0x28] sm:$0xff] %v3390
        %3399 = vst [vmem:[%s234 + $0x30] sm:$0xff] %v3391
        %3400 = vst [vmem:[%s234 + $0x38] sm:$0xff] %v3392
        %s3401 = sand.u32 %s119, 1
        %s3402 = scalar_lea.sflag [#allocation4], %s3401
        %s3403 = sand.u32 %s119, 1
        %s3404 = smul.addr %s3403, 64
        %s3405 = scalar_lea.vmem [#allocation7], %s3404
        // Predicated region
        $region45: #{tpu_custom_call.1} parent=35 // pred_check
          %p3406 = pneg %p129
        $region46: #{tpu_custom_call.1} parent=35 // pred_check_branch
          %3408 = sbr.rel (%p3406) target = $region48
        $region47: #{tpu_custom_call.1} parent=35 // pred_region
          %3410 = vsyncadd %s3402, 0
          %s3411 = smul.addr %s22, 8
          %s3412 = smul.addr %s3411, 8
          %s3413 = scalar_lea.hbm %s4, %s3412
          %s3414 = sshll.u32 %s3405, 4
          %s3415 = int_to_ptr.vmem [resolvable:$true] %s3414
          %s3416 = sshll.u32 %s3413, 4
          %s3417 = int_to_ptr.hbm [resolvable:$true] %s3416
          %3422 = dma.vmem_to_hbm [thread:$0]  %s3415, 1024, %s3417, %s3402, 256, 256, 16
        $region48: #{tpu_custom_call.1} parent=35 // pred_fallthru
          _
      $region36: #{tpu_custom_call.1} parent=5 // pred_fallthru
        _
      %p3423 = scmp.le.s32.totalorder 2, %s17
      // Predicated region
      $region49: #{tpu_custom_call.1} parent=5 // pred_check
        %p3424 = pneg %p3423
      $region50: #{tpu_custom_call.1} parent=5 // pred_check_branch
        %3426 = sbr.rel (%p3424) target = $region52
      $region51: #{tpu_custom_call.1} parent=5 // pred_region
        %s3427 = ssub.s32 %s17, 2
        // Predicated region
        $region53: #{tpu_custom_call.1} parent=51 // pred_check
          %p3428 = pneg %p135
        $region54: #{tpu_custom_call.1} parent=51 // pred_check_branch
          %3430 = sbr.rel (%p3428) target = $region56
        $region55: #{tpu_custom_call.1} parent=51 // pred_region
          %s3431 = sand.u32 %s120, 1
          %s3432 = scalar_lea.sflag [#allocation4], %s3431
          %s3433 = sand.u32 %s120, 1
          %s3434 = smul.addr %s3433, 64
          %s3435 = scalar_lea.vmem [#allocation7], %s3434
          %3437 = dma.done %s3432, 1024
        $region56: #{tpu_custom_call.1} parent=51 // pred_fallthru
          _
      $region52: #{tpu_custom_call.1} parent=5 // pred_fallthru
        _
    $region6: #{tpu_custom_call.1} parent=1 // loop_footer
      %s21 = sadd.s32 1, %s17
    $region7: #{tpu_custom_call.1} parent=1 // loop_footer_branch
      %16 = sbr.rel target = $region3
    $region8: #{tpu_custom_call.1} parent=1 // loop_exit
      _
    %3438 = vsyncpa [#allocation3], 1
    %s3439 = scalar_lea.sflag [#allocation3], 1
    %3440 = vsyncpa %s3439, 1
    %3441 = vsyncpa [#allocation6], 1
    %3442 = vsyncpa [#allocation4], 1
    %s3443 = scalar_lea.sflag [#allocation4], 1
    %3444 = vsyncpa %s3443, 1

</llo_original>
